<compile_context>
chip_gen: v7x
topology: tpu7x:2x2x1
jax: 0.10.0
libtpu: 0.0.40
codegen_flags: <defaults>
</compile_context>

<pallas_src>
import jax
import jax.numpy as jnp
from jax import lax
from jax.experimental import pallas as pl
from jax.experimental.pallas import tpu as pltpu

EPS = 1e-5
DIL = 2  # dilation of the 3x3 conv (padding == dilation in this module)


def _bn_cols(y, g, b):
    """Training-mode batch norm over rows of an (R, C) f32 block (centered two-pass)."""
    inv_r = 1.0 / y.shape[0]
    mean = jnp.sum(y, axis=0, keepdims=True) * inv_r
    yc = y - mean
    var = jnp.sum(yc * yc, axis=0, keepdims=True) * inv_r      # biased variance (PyTorch train BN)
    return yc * (lax.rsqrt(var + EPS) * g) + b


def _make_fused_kernel(N, H, W, Cmid, n_k_steps):
    R = N * H * W

    def kernel(x_ref, w1_ref, g1_ref, b1_ref, w2_ref, g2_ref, b2_ref,
               mask_ref, o_ref):
        k = pl.program_id(0)

        # ---- stage 1: 1x1 conv as a K-blocked channel matmul, accumulated in f32
        #      directly into the resident output block (bf16 operands, f32 acc). ----
        @pl.when(k == 0)
        def _():
            o_ref[...] = jnp.zeros_like(o_ref)

        o_ref[...] += jnp.dot(x_ref[...], w1_ref[...],
                              preferred_element_type=jnp.float32)

        # ---- epilogue on the last K step: BN1 + ReLU + dilated 3x3 conv + BN2 ----
        @pl.when(k == n_k_steps - 1)
        def _():
            y = jnp.maximum(_bn_cols(o_ref[...], g1_ref[...], b1_ref[...]), 0.0)
            y_bf = y.astype(jnp.bfloat16)               # center tap (always valid)
            masks = mask_ref[...]                       # (R, 9) f32 {0,1}

            # Dilated 3x3 conv = 9 accumulated K=Cmid matmuls.  Each tap view is the
            # flattened NHWC activation shifted by a constant row offset (XLU roll)
            # and zeroed on out-of-image rows (VPU multiply) -- no padded buffer,
            # no materialized im2col slab.
            z = jnp.zeros((R, Cmid), jnp.float32)
            for kh in range(3):
                for kw in range(3):
                    k9 = kh * 3 + kw
                    dh = DIL * (kh - 1)
                    dw = DIL * (kw - 1)
                    shift = dh * W + dw                 # row offset in NHWC-flat order
                    if shift == 0:
                        tap = y_bf
                    else:
                        t = pltpu.roll(y, (-shift) % R, axis=0)     # t[r] = y[r + shift]
                        tap = (t * masks[:, k9:k9 + 1]).astype(jnp.bfloat16)
                    z += jnp.dot(tap, w2_ref[k9 * Cmid:(k9 + 1) * Cmid, :],
                                 preferred_element_type=jnp.float32)

            o_ref[...] = _bn_cols(z, g2_ref[...], b2_ref[...])

    return kernel


def _build_tap_masks(N, H, W):
    """(R, 9) f32 {0,1}: column k9 = kh*3+kw is the validity of tap (kh, kw) per row."""
    hh = jnp.arange(H)
    ww = jnp.arange(W)
    cols = []
    for kh in range(3):
        for kw in range(3):
            dh, dw = DIL * (kh - 1), DIL * (kw - 1)
            mh = (hh + dh >= 0) & (hh + dh < H)
            mw = (ww + dw >= 0) & (ww + dw < W)
            m = (mh[:, None] & mw[None, :]).astype(jnp.float32)      # (H, W)
            cols.append(jnp.tile(m.reshape(1, H * W), (N, 1)).reshape(N * H * W))
    return jnp.stack(cols, axis=1)                                   # (R, 9)


def forward(x_nchw, params):
    w1, g1, b1 = params["w1"], params["g1"], params["b1"]
    w2, g2, b2 = params["w2"], params["g2"], params["b2"]
    N, Cin, H, W = x_nchw.shape
    Cmid = w1.shape[0]
    R = N * H * W

    # NCHW -> (rows, channels); bf16 operands for the MXU (accumulation stays f32).
    x2d = jnp.transpose(x_nchw, (0, 2, 3, 1)).reshape(R, Cin).astype(jnp.bfloat16)
    w1_mat = jnp.transpose(w1[:, :, 0, 0]).astype(jnp.bfloat16)                 # (Cin, Cmid)
    # (Cout, Cin, kh, kw) -> (kh, kw, Cin, Cout) -> (9*Cin, Cout); row block k9 = kh*3+kw
    # matches the tap ordering used inside the kernel.
    w2_mat = jnp.transpose(w2, (2, 3, 1, 0)).reshape(9 * Cmid, Cmid).astype(jnp.bfloat16)

    tap_mask = _build_tap_masks(N, H, W)                                        # (R, 9) f32

    tk = 256 if Cin % 256 == 0 else Cin        # K tile of the 1x1 conv (DMA pipelining)
    nk = Cin // tk

    out2d = pl.pallas_call(
        _make_fused_kernel(N, H, W, Cmid, nk),
        out_shape=jax.ShapeDtypeStruct((R, Cmid), jnp.float32),
        grid_spec=pltpu.PrefetchScalarGridSpec(
            num_scalar_prefetch=0,
            grid=(nk,),
            in_specs=[
                pl.BlockSpec((R, tk), lambda k: (0, k)),             # x (streams over Cin)
                pl.BlockSpec((tk, Cmid), lambda k: (k, 0)),          # w1 (streams over Cin)
                pl.BlockSpec((1, Cmid), lambda k: (0, 0)),           # gamma1
                pl.BlockSpec((1, Cmid), lambda k: (0, 0)),           # beta1
                pl.BlockSpec((9 * Cmid, Cmid), lambda k: (0, 0)),    # w2 (resident)
                pl.BlockSpec((1, Cmid), lambda k: (0, 0)),           # gamma2
                pl.BlockSpec((1, Cmid), lambda k: (0, 0)),           # beta2
                pl.BlockSpec((R, 9), lambda k: (0, 0)),              # tap validity masks
            ],
            out_specs=pl.BlockSpec((R, Cmid), lambda k: (0, 0)),     # resident accumulator
        ),
        compiler_params=pltpu.CompilerParams(dimension_semantics=("arbitrary",)),
    )(
        x2d, w1_mat,
        g1.reshape(1, Cmid).astype(jnp.float32), b1.reshape(1, Cmid).astype(jnp.float32),
        w2_mat,
        g2.reshape(1, Cmid).astype(jnp.float32), b2.reshape(1, Cmid).astype(jnp.float32),
        tap_mask,
    )

    return out2d.reshape(N, H, W, Cmid).transpose(0, 3, 1, 2)   # back to NCHW


# ---------------- pure-JAX references (for verification) ----------------
def _bn_train_nchw(x, g, b):
    mean = jnp.mean(x, axis=(0, 2, 3), keepdims=True)
    xc = x - mean
    var = jnp.mean(xc * xc, axis=(0, 2, 3), keepdims=True)
    return xc * lax.rsqrt(var + EPS) * g.reshape(1, -1, 1, 1) + b.reshape(1, -1, 1, 1)


def reference(x, params, matmul_dtype=jnp.float32, precision=lax.Precision.HIGHEST):
    dn = ("NCHW", "OIHW", "NCHW")

    def conv(lhs, rhs, pad, dil):
        return lax.conv_general_dilated(
            lhs.astype(matmul_dtype), rhs.astype(matmul_dtype), (1, 1), pad,
            rhs_dilation=dil, dimension_numbers=dn,
            precision=precision, preferred_element_type=jnp.float32)

    y = conv(x, params["w1"], ((0, 0), (0, 0)), (1, 1))
    y = jnp.maximum(_bn_train_nchw(y, params["g1"], params["b1"]), 0.0)
    z = conv(y, params["w2"], ((2, 2), (2, 2)), (2, 2))
    return _bn_train_nchw(z, params["g2"], params["b2"])


if __name__ == "__main__":
    key = jax.random.PRNGKey(0)
    kx, k1, k2, kg1, kb1, kg2, kb2 = jax.random.split(key, 7)

    # Channel counts fixed by the module (1024 -> 256 -> 256); small spatial size.
    N, Cin, H, W, Cmid = 1, 1024, 8, 8, 256
    x = jax.random.normal(kx, (N, Cin, H, W), jnp.float32)

    params = dict(
        w1=jax.random.normal(k1, (Cmid, Cin, 1, 1), jnp.float32) * (2.0 / Cin) ** 0.5,
        g1=1.0 + 0.1 * jax.random.normal(kg1, (Cmid,), jnp.float32),
        b1=0.1 * jax.random.normal(kb1, (Cmid,), jnp.float32),
        w2=jax.random.normal(k2, (Cmid, Cmid, 3, 3), jnp.float32) * (2.0 / (Cmid * 9)) ** 0.5,
        g2=1.0 + 0.1 * jax.random.normal(kg2, (Cmid,), jnp.float32),
        b2=0.1 * jax.random.normal(kb2, (Cmid,), jnp.float32),
    )

    out = jax.jit(forward)(x, params)
    jax.block_until_ready(out)
    assert out.shape == (N, Cmid, H, W), out.shape

    # Numerics: the kernel runs its matmuls with bf16 operands / f32 accumulation
    # (the fast single-pass MXU path).  Compare tightly against a bf16-matched
    # reference and loosely (sanity) against the full-f32 HIGHEST-precision one.
    ref_bf = reference(x, params, jnp.bfloat16, lax.Precision.DEFAULT)
    ref_hp = reference(x, params, jnp.float32, lax.Precision.HIGHEST)
    err_bf = float(jnp.max(jnp.abs(out - ref_bf)))
    err_hp = float(jnp.max(jnp.abs(out - ref_hp)))
    if err_bf > 5e-3:
        raise AssertionError(f"mismatch vs bf16-matched reference: max abs err = {err_bf}")
    if err_hp > 1e-1:
        raise AssertionError(f"mismatch vs f32 reference: max abs err = {err_hp}")
    print("KERNEL_OK")
</pallas_src>

<mosaic_0001>
module attributes {stable_mosaic.version = 11 : i64} {
  func.func @kernel(%arg0: i32, %arg1: memref<64x256xbf16, #tpu.memory_space<vmem>>, %arg2: memref<256x256xbf16, #tpu.memory_space<vmem>>, %arg3: memref<1x256xf32, #tpu.memory_space<vmem>>, %arg4: memref<1x256xf32, #tpu.memory_space<vmem>>, %arg5: memref<2304x256xbf16, #tpu.memory_space<vmem>>, %arg6: memref<1x256xf32, #tpu.memory_space<vmem>>, %arg7: memref<1x256xf32, #tpu.memory_space<vmem>>, %arg8: memref<64x9xf32, #tpu.memory_space<vmem>>, %arg9: memref<64x256xf32, #tpu.memory_space<vmem>>) attributes {dimension_semantics = [#tpu.dimension_semantics<arbitrary>], iteration_bounds = array<i64: 4>, scalar_prefetch = 0 : i64, scratch_operands = 0 : i64, tpu.core_type = #tpu.core_type<tc>, window_params = [{transform_indices = @transform_0, window_bounds = array<i64: 64, 256>}, {transform_indices = @transform_1, window_bounds = array<i64: 256, 256>}, {pipeline_mode = #tpu.pipeline_mode<synchronous>, transform_indices = @transform_2, window_bounds = array<i64: 1, 256>}, {pipeline_mode = #tpu.pipeline_mode<synchronous>, transform_indices = @transform_3, window_bounds = array<i64: 1, 256>}, {pipeline_mode = #tpu.pipeline_mode<synchronous>, transform_indices = @transform_4, window_bounds = array<i64: 2304, 256>}, {pipeline_mode = #tpu.pipeline_mode<synchronous>, transform_indices = @transform_5, window_bounds = array<i64: 1, 256>}, {pipeline_mode = #tpu.pipeline_mode<synchronous>, transform_indices = @transform_6, window_bounds = array<i64: 1, 256>}, {pipeline_mode = #tpu.pipeline_mode<synchronous>, transform_indices = @transform_7, window_bounds = array<i64: 64, 9>}, {pipeline_mode = #tpu.pipeline_mode<synchronous>, transform_indices = @transform_8, window_bounds = array<i64: 64, 256>}]} {
    %c0_i32 = arith.constant 0 : i32
    %0 = arith.cmpi eq, %arg0, %c0_i32 : i32
    %1 = arith.extui %0 : i1 to i32
    %c0_i32_0 = arith.constant 0 : i32
    %2 = arith.cmpi ne, %1, %c0_i32_0 : i32
    scf.if %2 {
      %cst_9 = arith.constant 0.000000e+00 : f32
      %12 = vector.broadcast %cst_9 : f32 to vector<64x256xf32>
      %c0_10 = arith.constant 0 : index
      %c0_11 = arith.constant 0 : index
      %13 = vector.load %arg9[%c0_10, %c0_11] : memref<64x256xf32, #tpu.memory_space<vmem>>, vector<64x256xf32>
      tpu.vector_store %arg9[%c0_10, %c0_11], %12 {strides = array<i32>} : memref<64x256xf32, #tpu.memory_space<vmem>>, vector<64x256xf32>,
    } else {
    }
    %c0 = arith.constant 0 : index
    %c0_1 = arith.constant 0 : index
    %3 = vector.load %arg9[%c0, %c0_1] : memref<64x256xf32, #tpu.memory_space<vmem>>, vector<64x256xf32>
    %c0_2 = arith.constant 0 : index
    %c0_3 = arith.constant 0 : index
    %4 = vector.load %arg1[%c0_2, %c0_3] : memref<64x256xbf16, #tpu.memory_space<vmem>>, vector<64x256xbf16>
    %c0_4 = arith.constant 0 : index
    %c0_5 = arith.constant 0 : index
    %5 = vector.load %arg2[%c0_4, %c0_5] : memref<256x256xbf16, #tpu.memory_space<vmem>>, vector<256x256xbf16>
    %cst = arith.constant dense<0.000000e+00> : vector<64x256xf32>
    %6 = tpu.matmul %4, %5, %cst {dimension_numbers = #tpu.dot_dimension_numbers<[1], [0], [0], [1], [0, 0, 1, 1], [], []>} : vector<64x256xbf16>, vector<256x256xbf16>, vector<64x256xf32> -> vector<64x256xf32>
    %7 = arith.addf %3, %6 : vector<64x256xf32>
    %c0_6 = arith.constant 0 : index
    %c0_7 = arith.constant 0 : index
    %8 = vector.load %arg9[%c0_6, %c0_7] : memref<64x256xf32, #tpu.memory_space<vmem>>, vector<64x256xf32>
    tpu.vector_store %arg9[%c0_6, %c0_7], %7 {strides = array<i32>} : memref<64x256xf32, #tpu.memory_space<vmem>>, vector<64x256xf32>,
    %c3_i32 = arith.constant 3 : i32
    %9 = arith.cmpi eq, %arg0, %c3_i32 : i32
    %10 = arith.extui %9 : i1 to i32
    %c0_i32_8 = arith.constant 0 : i32
    %11 = arith.cmpi ne, %10, %c0_i32_8 : i32
    scf.if %11 {
      %c0_9 = arith.constant 0 : index
      %c0_10 = arith.constant 0 : index
      %12 = vector.load %arg9[%c0_9, %c0_10] : memref<64x256xf32, #tpu.memory_space<vmem>>, vector<64x256xf32>
      %c0_11 = arith.constant 0 : index
      %c0_12 = arith.constant 0 : index
      %13 = vector.load %arg3[%c0_11, %c0_12] : memref<1x256xf32, #tpu.memory_space<vmem>>, vector<1x256xf32>
      %c0_13 = arith.constant 0 : index
      %c0_14 = arith.constant 0 : index
      %14 = vector.load %arg4[%c0_13, %c0_14] : memref<1x256xf32, #tpu.memory_space<vmem>>, vector<1x256xf32>
      %cst_15 = arith.constant dense<0.000000e+00> : vector<256xf32>
      %15 = vector.multi_reduction <add>, %12, %cst_15 [0] : vector<64x256xf32> to vector<256xf32>
      %16 = vector.shape_cast %15 : vector<256xf32> to vector<1x256xf32>
      %cst_16 = arith.constant 1.562500e-02 : f32
      %17 = vector.broadcast %cst_16 : f32 to vector<1x256xf32>
      %18 = arith.mulf %16, %17 : vector<1x256xf32>
      %19 = vector.broadcast %18 : vector<1x256xf32> to vector<64x256xf32>
      %20 = arith.subf %12, %19 : vector<64x256xf32>
      %21 = arith.mulf %20, %20 : vector<64x256xf32>
      %cst_17 = arith.constant dense<0.000000e+00> : vector<256xf32>
      %22 = vector.multi_reduction <add>, %21, %cst_17 [0] : vector<64x256xf32> to vector<256xf32>
      %23 = vector.shape_cast %22 : vector<256xf32> to vector<1x256xf32>
      %cst_18 = arith.constant 1.562500e-02 : f32
      %24 = vector.broadcast %cst_18 : f32 to vector<1x256xf32>
      %25 = arith.mulf %23, %24 : vector<1x256xf32>
      %cst_19 = arith.constant 9.99999974E-6 : f32
      %26 = vector.broadcast %cst_19 : f32 to vector<1x256xf32>
      %27 = arith.addf %25, %26 : vector<1x256xf32>
      %28 = math.rsqrt %27 : vector<1x256xf32>
      %29 = arith.mulf %28, %13 : vector<1x256xf32>
      %30 = vector.broadcast %29 : vector<1x256xf32> to vector<64x256xf32>
      %31 = arith.mulf %20, %30 : vector<64x256xf32>
      %32 = vector.broadcast %14 : vector<1x256xf32> to vector<64x256xf32>
      %33 = arith.addf %31, %32 : vector<64x256xf32>
      %cst_20 = arith.constant 0.000000e+00 : f32
      %34 = vector.broadcast %cst_20 : f32 to vector<64x256xf32>
      %35 = arith.maximumf %33, %34 : vector<64x256xf32>
      %36 = arith.truncf %35 : vector<64x256xf32> to vector<64x256xbf16>
      %c0_21 = arith.constant 0 : index
      %c0_22 = arith.constant 0 : index
      %37 = vector.load %arg8[%c0_21, %c0_22] : memref<64x9xf32, #tpu.memory_space<vmem>>, vector<64x9xf32>
      %cst_23 = arith.constant 0.000000e+00 : f32
      %38 = vector.broadcast %cst_23 : f32 to vector<64x256xf32>
      %c18_i32 = arith.constant 18 : i32
      %39 = tpu.dynamic_rotate %35 by %c18_i32 dim 0 : vector<64x256xf32>, i32 -> vector<64x256xf32>
      %40 = vector.extract_strided_slice %37 {offsets = [0, 0], sizes = [64, 1], strides = [1, 1]} : vector<64x9xf32> to vector<64x1xf32>
      %41 = vector.broadcast %40 : vector<64x1xf32> to vector<64x256xf32>
      %42 = arith.mulf %39, %41 : vector<64x256xf32>
      %43 = arith.truncf %42 : vector<64x256xf32> to vector<64x256xbf16>
      %c0_24 = arith.constant 0 : index
      %c0_25 = arith.constant 0 : index
      %44 = vector.load %arg5[%c0_24, %c0_25] : memref<2304x256xbf16, #tpu.memory_space<vmem>>, vector<256x256xbf16>
      %cst_26 = arith.constant dense<0.000000e+00> : vector<64x256xf32>
      %45 = tpu.matmul %43, %44, %cst_26 {dimension_numbers = #tpu.dot_dimension_numbers<[1], [0], [0], [1], [0, 0, 1, 1], [], []>} : vector<64x256xbf16>, vector<256x256xbf16>, vector<64x256xf32> -> vector<64x256xf32>
      %46 = arith.addf %38, %45 : vector<64x256xf32>
      %c16_i32 = arith.constant 16 : i32
      %47 = tpu.dynamic_rotate %35 by %c16_i32 dim 0 : vector<64x256xf32>, i32 -> vector<64x256xf32>
      %48 = vector.extract_strided_slice %37 {offsets = [0, 1], sizes = [64, 1], strides = [1, 1]} : vector<64x9xf32> to vector<64x1xf32>
      %49 = vector.broadcast %48 : vector<64x1xf32> to vector<64x256xf32>
      %50 = arith.mulf %47, %49 : vector<64x256xf32>
      %51 = arith.truncf %50 : vector<64x256xf32> to vector<64x256xbf16>
      %c256 = arith.constant 256 : index
      %c0_27 = arith.constant 0 : index
      %52 = vector.load %arg5[%c256, %c0_27] : memref<2304x256xbf16, #tpu.memory_space<vmem>>, vector<256x256xbf16>
      %cst_28 = arith.constant dense<0.000000e+00> : vector<64x256xf32>
      %53 = tpu.matmul %51, %52, %cst_28 {dimension_numbers = #tpu.dot_dimension_numbers<[1], [0], [0], [1], [0, 0, 1, 1], [], []>} : vector<64x256xbf16>, vector<256x256xbf16>, vector<64x256xf32> -> vector<64x256xf32>
      %54 = arith.addf %46, %53 : vector<64x256xf32>
      %c14_i32 = arith.constant 14 : i32
      %55 = tpu.dynamic_rotate %35 by %c14_i32 dim 0 : vector<64x256xf32>, i32 -> vector<64x256xf32>
      %56 = vector.extract_strided_slice %37 {offsets = [0, 2], sizes = [64, 1], strides = [1, 1]} : vector<64x9xf32> to vector<64x1xf32>
      %57 = vector.broadcast %56 : vector<64x1xf32> to vector<64x256xf32>
      %58 = arith.mulf %55, %57 : vector<64x256xf32>
      %59 = arith.truncf %58 : vector<64x256xf32> to vector<64x256xbf16>
      %c512 = arith.constant 512 : index
      %c0_29 = arith.constant 0 : index
      %60 = vector.load %arg5[%c512, %c0_29] : memref<2304x256xbf16, #tpu.memory_space<vmem>>, vector<256x256xbf16>
      %cst_30 = arith.constant dense<0.000000e+00> : vector<64x256xf32>
      %61 = tpu.matmul %59, %60, %cst_30 {dimension_numbers = #tpu.dot_dimension_numbers<[1], [0], [0], [1], [0, 0, 1, 1], [], []>} : vector<64x256xbf16>, vector<256x256xbf16>, vector<64x256xf32> -> vector<64x256xf32>
      %62 = arith.addf %54, %61 : vector<64x256xf32>
      %c2_i32 = arith.constant 2 : i32
      %63 = tpu.dynamic_rotate %35 by %c2_i32 dim 0 : vector<64x256xf32>, i32 -> vector<64x256xf32>
      %64 = vector.extract_strided_slice %37 {offsets = [0, 3], sizes = [64, 1], strides = [1, 1]} : vector<64x9xf32> to vector<64x1xf32>
      %65 = vector.broadcast %64 : vector<64x1xf32> to vector<64x256xf32>
      %66 = arith.mulf %63, %65 : vector<64x256xf32>
      %67 = arith.truncf %66 : vector<64x256xf32> to vector<64x256xbf16>
      %c768 = arith.constant 768 : index
      %c0_31 = arith.constant 0 : index
      %68 = vector.load %arg5[%c768, %c0_31] : memref<2304x256xbf16, #tpu.memory_space<vmem>>, vector<256x256xbf16>
      %cst_32 = arith.constant dense<0.000000e+00> : vector<64x256xf32>
      %69 = tpu.matmul %67, %68, %cst_32 {dimension_numbers = #tpu.dot_dimension_numbers<[1], [0], [0], [1], [0, 0, 1, 1], [], []>} : vector<64x256xbf16>, vector<256x256xbf16>, vector<64x256xf32> -> vector<64x256xf32>
      %70 = arith.addf %62, %69 : vector<64x256xf32>
      %c1024 = arith.constant 1024 : index
      %c0_33 = arith.constant 0 : index
      %71 = vector.load %arg5[%c1024, %c0_33] : memref<2304x256xbf16, #tpu.memory_space<vmem>>, vector<256x256xbf16>
      %cst_34 = arith.constant dense<0.000000e+00> : vector<64x256xf32>
      %72 = tpu.matmul %36, %71, %cst_34 {dimension_numbers = #tpu.dot_dimension_numbers<[1], [0], [0], [1], [0, 0, 1, 1], [], []>} : vector<64x256xbf16>, vector<256x256xbf16>, vector<64x256xf32> -> vector<64x256xf32>
      %73 = arith.addf %70, %72 : vector<64x256xf32>
      %c62_i32 = arith.constant 62 : i32
      %74 = tpu.dynamic_rotate %35 by %c62_i32 dim 0 : vector<64x256xf32>, i32 -> vector<64x256xf32>
      %75 = vector.extract_strided_slice %37 {offsets = [0, 5], sizes = [64, 1], strides = [1, 1]} : vector<64x9xf32> to vector<64x1xf32>
      %76 = vector.broadcast %75 : vector<64x1xf32> to vector<64x256xf32>
      %77 = arith.mulf %74, %76 : vector<64x256xf32>
      %78 = arith.truncf %77 : vector<64x256xf32> to vector<64x256xbf16>
      %c1280 = arith.constant 1280 : index
      %c0_35 = arith.constant 0 : index
      %79 = vector.load %arg5[%c1280, %c0_35] : memref<2304x256xbf16, #tpu.memory_space<vmem>>, vector<256x256xbf16>
      %cst_36 = arith.constant dense<0.000000e+00> : vector<64x256xf32>
      %80 = tpu.matmul %78, %79, %cst_36 {dimension_numbers = #tpu.dot_dimension_numbers<[1], [0], [0], [1], [0, 0, 1, 1], [], []>} : vector<64x256xbf16>, vector<256x256xbf16>, vector<64x256xf32> -> vector<64x256xf32>
      %81 = arith.addf %73, %80 : vector<64x256xf32>
      %c50_i32 = arith.constant 50 : i32
      %82 = tpu.dynamic_rotate %35 by %c50_i32 dim 0 : vector<64x256xf32>, i32 -> vector<64x256xf32>
      %83 = vector.extract_strided_slice %37 {offsets = [0, 6], sizes = [64, 1], strides = [1, 1]} : vector<64x9xf32> to vector<64x1xf32>
      %84 = vector.broadcast %83 : vector<64x1xf32> to vector<64x256xf32>
      %85 = arith.mulf %82, %84 : vector<64x256xf32>
      %86 = arith.truncf %85 : vector<64x256xf32> to vector<64x256xbf16>
      %c1536 = arith.constant 1536 : index
      %c0_37 = arith.constant 0 : index
      %87 = vector.load %arg5[%c1536, %c0_37] : memref<2304x256xbf16, #tpu.memory_space<vmem>>, vector<256x256xbf16>
      %cst_38 = arith.constant dense<0.000000e+00> : vector<64x256xf32>
      %88 = tpu.matmul %86, %87, %cst_38 {dimension_numbers = #tpu.dot_dimension_numbers<[1], [0], [0], [1], [0, 0, 1, 1], [], []>} : vector<64x256xbf16>, vector<256x256xbf16>, vector<64x256xf32> -> vector<64x256xf32>
      %89 = arith.addf %81, %88 : vector<64x256xf32>
      %c48_i32 = arith.constant 48 : i32
      %90 = tpu.dynamic_rotate %35 by %c48_i32 dim 0 : vector<64x256xf32>, i32 -> vector<64x256xf32>
      %91 = vector.extract_strided_slice %37 {offsets = [0, 7], sizes = [64, 1], strides = [1, 1]} : vector<64x9xf32> to vector<64x1xf32>
      %92 = vector.broadcast %91 : vector<64x1xf32> to vector<64x256xf32>
      %93 = arith.mulf %90, %92 : vector<64x256xf32>
      %94 = arith.truncf %93 : vector<64x256xf32> to vector<64x256xbf16>
      %c1792 = arith.constant 1792 : index
      %c0_39 = arith.constant 0 : index
      %95 = vector.load %arg5[%c1792, %c0_39] : memref<2304x256xbf16, #tpu.memory_space<vmem>>, vector<256x256xbf16>
      %cst_40 = arith.constant dense<0.000000e+00> : vector<64x256xf32>
      %96 = tpu.matmul %94, %95, %cst_40 {dimension_numbers = #tpu.dot_dimension_numbers<[1], [0], [0], [1], [0, 0, 1, 1], [], []>} : vector<64x256xbf16>, vector<256x256xbf16>, vector<64x256xf32> -> vector<64x256xf32>
      %97 = arith.addf %89, %96 : vector<64x256xf32>
      %c46_i32 = arith.constant 46 : i32
      %98 = tpu.dynamic_rotate %35 by %c46_i32 dim 0 : vector<64x256xf32>, i32 -> vector<64x256xf32>
      %99 = vector.extract_strided_slice %37 {offsets = [0, 8], sizes = [64, 1], strides = [1, 1]} : vector<64x9xf32> to vector<64x1xf32>
      %100 = vector.broadcast %99 : vector<64x1xf32> to vector<64x256xf32>
      %101 = arith.mulf %98, %100 : vector<64x256xf32>
      %102 = arith.truncf %101 : vector<64x256xf32> to vector<64x256xbf16>
      %c2048 = arith.constant 2048 : index
      %c0_41 = arith.constant 0 : index
      %103 = vector.load %arg5[%c2048, %c0_41] : memref<2304x256xbf16, #tpu.memory_space<vmem>>, vector<256x256xbf16>
      %cst_42 = arith.constant dense<0.000000e+00> : vector<64x256xf32>
      %104 = tpu.matmul %102, %103, %cst_42 {dimension_numbers = #tpu.dot_dimension_numbers<[1], [0], [0], [1], [0, 0, 1, 1], [], []>} : vector<64x256xbf16>, vector<256x256xbf16>, vector<64x256xf32> -> vector<64x256xf32>
      %105 = arith.addf %97, %104 : vector<64x256xf32>
      %c0_43 = arith.constant 0 : index
      %c0_44 = arith.constant 0 : index
      %106 = vector.load %arg6[%c0_43, %c0_44] : memref<1x256xf32, #tpu.memory_space<vmem>>, vector<1x256xf32>
      %c0_45 = arith.constant 0 : index
      %c0_46 = arith.constant 0 : index
      %107 = vector.load %arg7[%c0_45, %c0_46] : memref<1x256xf32, #tpu.memory_space<vmem>>, vector<1x256xf32>
      %cst_47 = arith.constant dense<0.000000e+00> : vector<256xf32>
      %108 = vector.multi_reduction <add>, %105, %cst_47 [0] : vector<64x256xf32> to vector<256xf32>
      %109 = vector.shape_cast %108 : vector<256xf32> to vector<1x256xf32>
      %cst_48 = arith.constant 1.562500e-02 : f32
      %110 = vector.broadcast %cst_48 : f32 to vector<1x256xf32>
      %111 = arith.mulf %109, %110 : vector<1x256xf32>
      %112 = vector.broadcast %111 : vector<1x256xf32> to vector<64x256xf32>
      %113 = arith.subf %105, %112 : vector<64x256xf32>
      %114 = arith.mulf %113, %113 : vector<64x256xf32>
      %cst_49 = arith.constant dense<0.000000e+00> : vector<256xf32>
      %115 = vector.multi_reduction <add>, %114, %cst_49 [0] : vector<64x256xf32> to vector<256xf32>
      %116 = vector.shape_cast %115 : vector<256xf32> to vector<1x256xf32>
      %cst_50 = arith.constant 1.562500e-02 : f32
      %117 = vector.broadcast %cst_50 : f32 to vector<1x256xf32>
      %118 = arith.mulf %116, %117 : vector<1x256xf32>
      %cst_51 = arith.constant 9.99999974E-6 : f32
      %119 = vector.broadcast %cst_51 : f32 to vector<1x256xf32>
      %120 = arith.addf %118, %119 : vector<1x256xf32>
      %121 = math.rsqrt %120 : vector<1x256xf32>
      %122 = arith.mulf %121, %106 : vector<1x256xf32>
      %123 = vector.broadcast %122 : vector<1x256xf32> to vector<64x256xf32>
      %124 = arith.mulf %113, %123 : vector<64x256xf32>
      %125 = vector.broadcast %107 : vector<1x256xf32> to vector<64x256xf32>
      %126 = arith.addf %124, %125 : vector<64x256xf32>
      %c0_52 = arith.constant 0 : index
      %c0_53 = arith.constant 0 : index
      %127 = vector.load %arg9[%c0_52, %c0_53] : memref<64x256xf32, #tpu.memory_space<vmem>>, vector<64x256xf32>
      tpu.vector_store %arg9[%c0_52, %c0_53], %126 {strides = array<i32>} : memref<64x256xf32, #tpu.memory_space<vmem>>, vector<64x256xf32>,
    } else {
    }
    return
  }
  func.func @transform_0(%arg0: i32) -> (i32, i32) {
    %c0_i32 = arith.constant 0 : i32
    %c0_i32_0 = arith.constant 0 : i32
    return %c0_i32, %arg0 : i32, i32
  }
  func.func @transform_1(%arg0: i32) -> (i32, i32) {
    %c0_i32 = arith.constant 0 : i32
    %c0_i32_0 = arith.constant 0 : i32
    return %arg0, %c0_i32 : i32, i32
  }
  func.func @transform_2(%arg0: i32) -> (i32, i32) {
    %c0_i32 = arith.constant 0 : i32
    %c0_i32_0 = arith.constant 0 : i32
    %c0_i32_1 = arith.constant 0 : i32
    return %c0_i32, %c0_i32_0 : i32, i32
  }
  func.func @transform_3(%arg0: i32) -> (i32, i32) {
    %c0_i32 = arith.constant 0 : i32
    %c0_i32_0 = arith.constant 0 : i32
    %c0_i32_1 = arith.constant 0 : i32
    return %c0_i32, %c0_i32_0 : i32, i32
  }
  func.func @transform_4(%arg0: i32) -> (i32, i32) {
    %c0_i32 = arith.constant 0 : i32
    %c0_i32_0 = arith.constant 0 : i32
    %c0_i32_1 = arith.constant 0 : i32
    return %c0_i32, %c0_i32_0 : i32, i32
  }
  func.func @transform_5(%arg0: i32) -> (i32, i32) {
    %c0_i32 = arith.constant 0 : i32
    %c0_i32_0 = arith.constant 0 : i32
    %c0_i32_1 = arith.constant 0 : i32
    return %c0_i32, %c0_i32_0 : i32, i32
  }
  func.func @transform_6(%arg0: i32) -> (i32, i32) {
    %c0_i32 = arith.constant 0 : i32
    %c0_i32_0 = arith.constant 0 : i32
    %c0_i32_1 = arith.constant 0 : i32
    return %c0_i32, %c0_i32_0 : i32, i32
  }
  func.func @transform_7(%arg0: i32) -> (i32, i32) {
    %c0_i32 = arith.constant 0 : i32
    %c0_i32_0 = arith.constant 0 : i32
    %c0_i32_1 = arith.constant 0 : i32
    return %c0_i32, %c0_i32_0 : i32, i32
  }
  func.func @transform_8(%arg0: i32) -> (i32, i32) {
    %c0_i32 = arith.constant 0 : i32
    %c0_i32_0 = arith.constant 0 : i32
    %c0_i32_1 = arith.constant 0 : i32
    return %c0_i32, %c0_i32_0 : i32, i32
  }
}

</mosaic_0001>

<llo_original>
// kernel: forward.1
$region0: #{forward.1}
  #allocation0 [shape = 'u32[]', space=smem, size = 0x4, offset = 0x4, fixed_abs, tag = 'smem constant byte address 0x4 - core index']
  #allocation1 [shape = 'u32[144,128]{1,0:T(1,128)}', space=vmem, size = 0x12000, scoped, tag = 'internal scratch']
  %s0 = inlined_call_operand.vmem [shape: bf16[64,1024], index: 0, kind: input, shape index: {}]
  %s1 = inlined_call_operand.vmem [shape: bf16[1024,256], index: 1, kind: input, shape index: {}]
  %s2 = inlined_call_operand.vmem [shape: f32[1,256], index: 2, kind: input, shape index: {}]
  %s3 = inlined_call_operand.vmem [shape: f32[1,256], index: 3, kind: input, shape index: {}]
  %s4 = inlined_call_operand.vmem [shape: bf16[2304,256], index: 4, kind: input, shape index: {}]
  %s5 = inlined_call_operand.vmem [shape: f32[1,256], index: 5, kind: input, shape index: {}]
  %s6 = inlined_call_operand.vmem [shape: f32[1,256], index: 6, kind: input, shape index: {}]
  %s7 = inlined_call_operand.vmem [shape: f32[64,9], index: 7, kind: input, shape index: {}]
  %s8 = inlined_call_operand.hbm [shape: f32[64,256], index: 8, kind: output, shape index: {}]
  %s9 = sld [smem:[#allocation0]]
  $region111: #{forward.1} parent=0
    _
  %s11 = ssub.s32 1, %s9
  %s12 = scalar_select 0, %s11, %s9
  $region1: #{forward.1} parent=0
    #allocation2 [shape = 'u8[65536]{0}', space=vmem, size = 0x10000, scoped, tag = 'input window, operand 0']
    #allocation3 [shape = 'u8[65536]{0}', space=vmem, size = 0x10000, scoped, tag = 'output window, operand 0, single buffered']
    #allocation4 [shape = 's32[2]{0}', space=sflag, size = 0x8, scoped, tag = 'scoped memory for forward.1']
    %13 = vsyncpa [#allocation4], 0
    loop: start=0, step=1, limit=6
    $region2: #{forward.1} parent=1 // loop_pre_header
      _
    $region3: #{forward.1} parent=1 // loop_header
      %s15 = sphi 0, %s19
      %p16 = scmp.ge.s32.totalorder %s15, 6
      %s25 = sphi 0, %s27
      %s28 = sphi 0, %s25
      %s29 = sphi 0, %s28
      %s45 = sphi 0, %s29
      %s51 = sphi 0, %s53
      %s54 = sphi 0, %s51
      %s55 = sphi 0, %s54
      %s71 = sphi 0, %s55
      %s75 = sphi 0, %s75
      %s77 = sphi 0, %s75
      %s78 = sphi 0, %s77
      %s92 = sphi 0, %s78
      %s96 = sphi 0, %s96
      %s98 = sphi 0, %s96
      %s99 = sphi 0, %s98
      %s113 = sphi 0, %s99
      %s117 = sphi 0, %s117
      %s119 = sphi 0, %s117
      %s120 = sphi 0, %s119
      %s134 = sphi 0, %s120
      %s138 = sphi 0, %s138
      %s140 = sphi 0, %s138
      %s141 = sphi 0, %s140
      %s155 = sphi 0, %s141
      %s159 = sphi 0, %s159
      %s161 = sphi 0, %s159
      %s162 = sphi 0, %s161
      %s176 = sphi 0, %s162
      %s180 = sphi 0, %s180
      %s182 = sphi 0, %s180
      %s183 = sphi 0, %s182
      %s197 = sphi 0, %s183
      %s201 = sphi 0, %s201
      %s203 = sphi 0, %s201
      %s204 = sphi 0, %s203
      %s218 = sphi 0, %s204
    $region4: #{forward.1} parent=1 // loop_header_branch
      %18 = sbr.rel (%p16) target = $region8
    $region5: #{forward.1} parent=1 // loop_body
      %s20 = ssub.s32 %s15, 1
      %s21 = ssub.s32 %s15, 2
      %s22 = sadd.s32 %s15, 1
      %s23 = ssub.s32 %s15, %s22
      %p24 = scmp.eq.s32.totalorder %s23, 0
      %s26 = sadd.s32 %s25, 1
      %s27 = scalar_select %p24, %s25, %s26
      %p30 = pneg %p24
      %p31 = scmp.eq.s32.totalorder %s15, 3
      %p32 = por %p30, %p31
      %p33 = scmp.ne.s32.totalorder %s25, %s28
      %p34 = scmp.eq.s32.totalorder %s15, 0
      %p35 = por %p33, %p34
      %p36 = scmp.ne.s32.totalorder %s25, %s28
      %p37 = scmp.eq.s32.totalorder %s20, 3
      %p38 = por %p36, %p37
      %p39 = scmp.ne.s32.totalorder %s28, %s29
      %p40 = scmp.eq.s32.totalorder %s20, 0
      %p41 = por %p39, %p40
      %p42 = scmp.ne.s32.totalorder %s28, %s29
      %p43 = scmp.eq.s32.totalorder %s21, 3
      %p44 = por %p42, %p43
      %p46 = scmp.ne.s32.totalorder %s29, %s45
      %p47 = scmp.eq.s32.totalorder %s21, 0
      %p48 = por %p46, %p47
      %s49 = ssub.s32 %s15, %s22
      %p50 = scmp.eq.s32.totalorder %s49, 0
      %s52 = sadd.s32 %s51, 1
      %s53 = scalar_select %p50, %s51, %s52
      %p56 = pneg %p50
      %p57 = scmp.eq.s32.totalorder %s15, 3
      %p58 = por %p56, %p57
      %p59 = scmp.ne.s32.totalorder %s51, %s54
      %p60 = scmp.eq.s32.totalorder %s15, 0
      %p61 = por %p59, %p60
      %p62 = scmp.ne.s32.totalorder %s51, %s54
      %p63 = scmp.eq.s32.totalorder %s20, 3
      %p64 = por %p62, %p63
      %p65 = scmp.ne.s32.totalorder %s54, %s55
      %p66 = scmp.eq.s32.totalorder %s20, 0
      %p67 = por %p65, %p66
      %p68 = scmp.ne.s32.totalorder %s54, %s55
      %p69 = scmp.eq.s32.totalorder %s21, 3
      %p70 = por %p68, %p69
      %p72 = scmp.ne.s32.totalorder %s55, %s71
      %p73 = scmp.eq.s32.totalorder %s21, 0
      %p74 = por %p72, %p73
      %s76 = sadd.s32 %s75, 1
      %p79 = scmp.eq.s32.totalorder %s15, 3
      %p80 = scmp.ne.s32.totalorder %s75, %s77
      %p81 = scmp.eq.s32.totalorder %s15, 0
      %p82 = por %p80, %p81
      %p83 = scmp.ne.s32.totalorder %s75, %s77
      %p84 = scmp.eq.s32.totalorder %s20, 3
      %p85 = por %p83, %p84
      %p86 = scmp.ne.s32.totalorder %s77, %s78
      %p87 = scmp.eq.s32.totalorder %s20, 0
      %p88 = por %p86, %p87
      %p89 = scmp.ne.s32.totalorder %s77, %s78
      %p90 = scmp.eq.s32.totalorder %s21, 3
      %p91 = por %p89, %p90
      %p93 = scmp.ne.s32.totalorder %s78, %s92
      %p94 = scmp.eq.s32.totalorder %s21, 0
      %p95 = por %p93, %p94
      %s97 = sadd.s32 %s96, 1
      %p100 = scmp.eq.s32.totalorder %s15, 3
      %p101 = scmp.ne.s32.totalorder %s96, %s98
      %p102 = scmp.eq.s32.totalorder %s15, 0
      %p103 = por %p101, %p102
      %p104 = scmp.ne.s32.totalorder %s96, %s98
      %p105 = scmp.eq.s32.totalorder %s20, 3
      %p106 = por %p104, %p105
      %p107 = scmp.ne.s32.totalorder %s98, %s99
      %p108 = scmp.eq.s32.totalorder %s20, 0
      %p109 = por %p107, %p108
      %p110 = scmp.ne.s32.totalorder %s98, %s99
      %p111 = scmp.eq.s32.totalorder %s21, 3
      %p112 = por %p110, %p111
      %p114 = scmp.ne.s32.totalorder %s99, %s113
      %p115 = scmp.eq.s32.totalorder %s21, 0
      %p116 = por %p114, %p115
      %s118 = sadd.s32 %s117, 1
      %p121 = scmp.eq.s32.totalorder %s15, 3
      %p122 = scmp.ne.s32.totalorder %s117, %s119
      %p123 = scmp.eq.s32.totalorder %s15, 0
      %p124 = por %p122, %p123
      %p125 = scmp.ne.s32.totalorder %s117, %s119
      %p126 = scmp.eq.s32.totalorder %s20, 3
      %p127 = por %p125, %p126
      %p128 = scmp.ne.s32.totalorder %s119, %s120
      %p129 = scmp.eq.s32.totalorder %s20, 0
      %p130 = por %p128, %p129
      %p131 = scmp.ne.s32.totalorder %s119, %s120
      %p132 = scmp.eq.s32.totalorder %s21, 3
      %p133 = por %p131, %p132
      %p135 = scmp.ne.s32.totalorder %s120, %s134
      %p136 = scmp.eq.s32.totalorder %s21, 0
      %p137 = por %p135, %p136
      %s139 = sadd.s32 %s138, 1
      %p142 = scmp.eq.s32.totalorder %s15, 3
      %p143 = scmp.ne.s32.totalorder %s138, %s140
      %p144 = scmp.eq.s32.totalorder %s15, 0
      %p145 = por %p143, %p144
      %p146 = scmp.ne.s32.totalorder %s138, %s140
      %p147 = scmp.eq.s32.totalorder %s20, 3
      %p148 = por %p146, %p147
      %p149 = scmp.ne.s32.totalorder %s140, %s141
      %p150 = scmp.eq.s32.totalorder %s20, 0
      %p151 = por %p149, %p150
      %p152 = scmp.ne.s32.totalorder %s140, %s141
      %p153 = scmp.eq.s32.totalorder %s21, 3
      %p154 = por %p152, %p153
      %p156 = scmp.ne.s32.totalorder %s141, %s155
      %p157 = scmp.eq.s32.totalorder %s21, 0
      %p158 = por %p156, %p157
      %s160 = sadd.s32 %s159, 1
      %p163 = scmp.eq.s32.totalorder %s15, 3
      %p164 = scmp.ne.s32.totalorder %s159, %s161
      %p165 = scmp.eq.s32.totalorder %s15, 0
      %p166 = por %p164, %p165
      %p167 = scmp.ne.s32.totalorder %s159, %s161
      %p168 = scmp.eq.s32.totalorder %s20, 3
      %p169 = por %p167, %p168
      %p170 = scmp.ne.s32.totalorder %s161, %s162
      %p171 = scmp.eq.s32.totalorder %s20, 0
      %p172 = por %p170, %p171
      %p173 = scmp.ne.s32.totalorder %s161, %s162
      %p174 = scmp.eq.s32.totalorder %s21, 3
      %p175 = por %p173, %p174
      %p177 = scmp.ne.s32.totalorder %s162, %s176
      %p178 = scmp.eq.s32.totalorder %s21, 0
      %p179 = por %p177, %p178
      %s181 = sadd.s32 %s180, 1
      %p184 = scmp.eq.s32.totalorder %s15, 3
      %p185 = scmp.ne.s32.totalorder %s180, %s182
      %p186 = scmp.eq.s32.totalorder %s15, 0
      %p187 = por %p185, %p186
      %p188 = scmp.ne.s32.totalorder %s180, %s182
      %p189 = scmp.eq.s32.totalorder %s20, 3
      %p190 = por %p188, %p189
      %p191 = scmp.ne.s32.totalorder %s182, %s183
      %p192 = scmp.eq.s32.totalorder %s20, 0
      %p193 = por %p191, %p192
      %p194 = scmp.ne.s32.totalorder %s182, %s183
      %p195 = scmp.eq.s32.totalorder %s21, 3
      %p196 = por %p194, %p195
      %p198 = scmp.ne.s32.totalorder %s183, %s197
      %p199 = scmp.eq.s32.totalorder %s21, 0
      %p200 = por %p198, %p199
      %s202 = sadd.s32 %s201, 1
      %p205 = scmp.eq.s32.totalorder %s15, 3
      %p206 = scmp.ne.s32.totalorder %s201, %s203
      %p207 = scmp.eq.s32.totalorder %s15, 0
      %p208 = por %p206, %p207
      %p209 = scmp.ne.s32.totalorder %s201, %s203
      %p210 = scmp.eq.s32.totalorder %s20, 3
      %p211 = por %p209, %p210
      %p212 = scmp.ne.s32.totalorder %s203, %s204
      %p213 = scmp.eq.s32.totalorder %s20, 0
      %p214 = por %p212, %p213
      %p215 = scmp.ne.s32.totalorder %s203, %s204
      %p216 = scmp.eq.s32.totalorder %s21, 3
      %p217 = por %p215, %p216
      %p219 = scmp.ne.s32.totalorder %s204, %s218
      %p220 = scmp.eq.s32.totalorder %s21, 0
      %p221 = por %p219, %p220
      %p222 = scmp.le.s32.totalorder 1, %s15
      %p223 = scmp.lt.s32.totalorder %s15, 5
      %p224 = pnand %p222, %p223
      %p225 = pneg %p224
      // Predicated region
      $region9: #{forward.1} parent=5 // pred_check
        _
      $region10: #{forward.1} parent=5 // pred_check_branch
        %227 = sbr.rel (%p224) target = $region12
      $region11: #{forward.1} parent=5 // pred_region
        %s228 = ssub.s32 %s15, 1
        // Predicated region
        $region13: #{forward.1} parent=11 // pred_check
          %p229 = pneg %p88
        $region14: #{forward.1} parent=11 // pred_check_branch
          %231 = sbr.rel (%p229) target = $region16
        $region15: #{forward.1} parent=11 // pred_region
          _
        $region16: #{forward.1} parent=11 // pred_fallthru
          _
        // Predicated region
        $region17: #{forward.1} parent=11 // pred_check
          %p232 = pneg %p109
        $region18: #{forward.1} parent=11 // pred_check_branch
          %234 = sbr.rel (%p232) target = $region20
        $region19: #{forward.1} parent=11 // pred_region
          _
        $region20: #{forward.1} parent=11 // pred_fallthru
          _
        // Predicated region
        $region21: #{forward.1} parent=11 // pred_check
          %p235 = pneg %p130
        $region22: #{forward.1} parent=11 // pred_check_branch
          %237 = sbr.rel (%p235) target = $region24
        $region23: #{forward.1} parent=11 // pred_region
          _
        $region24: #{forward.1} parent=11 // pred_fallthru
          _
        // Predicated region
        $region25: #{forward.1} parent=11 // pred_check
          %p238 = pneg %p151
        $region26: #{forward.1} parent=11 // pred_check_branch
          %240 = sbr.rel (%p238) target = $region28
        $region27: #{forward.1} parent=11 // pred_region
          _
        $region28: #{forward.1} parent=11 // pred_fallthru
          _
        // Predicated region
        $region29: #{forward.1} parent=11 // pred_check
          %p241 = pneg %p172
        $region30: #{forward.1} parent=11 // pred_check_branch
          %243 = sbr.rel (%p241) target = $region32
        $region31: #{forward.1} parent=11 // pred_region
          _
        $region32: #{forward.1} parent=11 // pred_fallthru
          _
        // Predicated region
        $region33: #{forward.1} parent=11 // pred_check
          %p244 = pneg %p193
        $region34: #{forward.1} parent=11 // pred_check_branch
          %246 = sbr.rel (%p244) target = $region36
        $region35: #{forward.1} parent=11 // pred_region
          _
        $region36: #{forward.1} parent=11 // pred_fallthru
          _
      $region12: #{forward.1} parent=5 // pred_fallthru
        _
      %p247 = scmp.lt.s32.totalorder %s15, 4
      // Predicated region
      $region37: #{forward.1} parent=5 // pred_check
        %p248 = pneg %p247
      $region38: #{forward.1} parent=5 // pred_check_branch
        %250 = sbr.rel (%p248) target = $region40
      $region39: #{forward.1} parent=5 // pred_region
        // Predicated region
        $region41: #{forward.1} parent=39 // pred_check
          %p251 = pneg %p35
        $region42: #{forward.1} parent=39 // pred_check_branch
          %253 = sbr.rel (%p251) target = $region44
        $region43: #{forward.1} parent=39 // pred_region
          %s254 = sand.u32 %s25, 1
          %s255 = sand.u32 %s25, 1
          %s256 = smul.addr %s255, 64
          %s257 = scalar_lea.vmem [#allocation2], %s256
          %s258 = smul.u32 2, %s15
          %s259 = smul.addr %s258, 4
          %s260 = scalar_lea.vmem %s0, %s259
          // Predicated region
          $region45: #{forward.1} parent=43 // pred_check
            _
          $region46: #{forward.1} parent=43 // pred_check_branch
            %262 = sbr.rel (0) target = $region48
          $region47: #{forward.1} parent=43 // pred_region
            // Predicated region
            $region49: #{forward.1} parent=47 // pred_check
              _
            $region50: #{forward.1} parent=47 // pred_check_branch
              %264 = sbr.rel (0) target = $region52
            $region51: #{forward.1} parent=47 // pred_region
              // Predicated region
              $region64: #{forward.1} parent=51 // pred_check
                _
              $region65: #{forward.1} parent=51 // pred_check_branch
                %293 = sbr.rel (0) target = $region67
              $region66: #{forward.1} parent=51 // pred_region
                loop: start=0, step=1, limit=1
                $region68: #{forward.1} parent=66 // loop_pre_header
                  _
                $region69: #{forward.1} parent=66 // loop_header
                  %s295 = sphi 0, %s299
                  %p296 = scmp.ge.s32.totalorder %s295, 1
                  %s300 = sphi %s260, %s260
                  %s301 = sphi %s257, %s257
                $region70: #{forward.1} parent=66 // loop_header_branch
                  %298 = sbr.rel (%p296) target = $region74
                $region71: #{forward.1} parent=66 // loop_body
                  %v302 = vld [vmem:[%s300] sm:$0xff]
                  %303 = vst [vmem:[%s301] sm:$0xff] %v302
                  %v304 = vld [vmem:[%s300 + $0x20] sm:$0xff]
                  %305 = vst [vmem:[%s301 + $0x8] sm:$0xff] %v304
                  %v306 = vld [vmem:[%s300 + $0x40] sm:$0xff]
                  %307 = vst [vmem:[%s301 + $0x10] sm:$0xff] %v306
                  %v308 = vld [vmem:[%s300 + $0x60] sm:$0xff]
                  %309 = vst [vmem:[%s301 + $0x18] sm:$0xff] %v308
                  %v310 = vld [vmem:[%s300 + $0x80] sm:$0xff]
                  %311 = vst [vmem:[%s301 + $0x20] sm:$0xff] %v310
                  %v312 = vld [vmem:[%s300 + $0xa0] sm:$0xff]
                  %313 = vst [vmem:[%s301 + $0x28] sm:$0xff] %v312
                  %v314 = vld [vmem:[%s300 + $0xc0] sm:$0xff]
                  %315 = vst [vmem:[%s301 + $0x30] sm:$0xff] %v314
                  %v316 = vld [vmem:[%s300 + $0xe0] sm:$0xff]
                  %317 = vst [vmem:[%s301 + $0x38] sm:$0xff] %v316
                $region72: #{forward.1} parent=66 // loop_footer
                  %s299 = sadd.s32 1, %s295
                $region73: #{forward.1} parent=66 // loop_footer_branch
                  %294 = sbr.rel target = $region69
                $region74: #{forward.1} parent=66 // loop_exit
                  _
              $region67: #{forward.1} parent=51 // pred_fallthru
                _
              // Predicated region
              $region75: #{forward.1} parent=51 // pred_check
                _
              $region76: #{forward.1} parent=51 // pred_check_branch
                %319 = sbr.rel target = $region78
              $region77: #{forward.1} parent=51 // pred_region
                _
              $region78: #{forward.1} parent=51 // pred_fallthru
                _
            $region52: #{forward.1} parent=47 // pred_fallthru
              _
            // Predicated region
            $region53: #{forward.1} parent=47 // pred_check
              _
            $region54: #{forward.1} parent=47 // pred_check_branch
              %266 = sbr.rel target = $region56
            $region55: #{forward.1} parent=47 // pred_region
              loop: start=0, step=1, limit=1
              $region57: #{forward.1} parent=55 // loop_pre_header
                _
              $region58: #{forward.1} parent=55 // loop_header
                %s269 = sphi 0, %s273
                %p270 = scmp.ge.s32.totalorder %s269, 1
                %s274 = sphi %s260, %s260
                %s275 = sphi %s257, %s257
              $region59: #{forward.1} parent=55 // loop_header_branch
                %272 = sbr.rel (%p270) target = $region63
              $region60: #{forward.1} parent=55 // loop_body
                %v276 = vld [vmem:[%s274] sm:$0xff]
                %277 = vst [vmem:[%s275] sm:$0xff] %v276
                %v278 = vld [vmem:[%s274 + $0x20] sm:$0xff]
                %279 = vst [vmem:[%s275 + $0x8] sm:$0xff] %v278
                %v280 = vld [vmem:[%s274 + $0x40] sm:$0xff]
                %281 = vst [vmem:[%s275 + $0x10] sm:$0xff] %v280
                %v282 = vld [vmem:[%s274 + $0x60] sm:$0xff]
                %283 = vst [vmem:[%s275 + $0x18] sm:$0xff] %v282
                %v284 = vld [vmem:[%s274 + $0x80] sm:$0xff]
                %285 = vst [vmem:[%s275 + $0x20] sm:$0xff] %v284
                %v286 = vld [vmem:[%s274 + $0xa0] sm:$0xff]
                %287 = vst [vmem:[%s275 + $0x28] sm:$0xff] %v286
                %v288 = vld [vmem:[%s274 + $0xc0] sm:$0xff]
                %289 = vst [vmem:[%s275 + $0x30] sm:$0xff] %v288
                %v290 = vld [vmem:[%s274 + $0xe0] sm:$0xff]
                %291 = vst [vmem:[%s275 + $0x38] sm:$0xff] %v290
              $region61: #{forward.1} parent=55 // loop_footer
                %s273 = sadd.s32 1, %s269
              $region62: #{forward.1} parent=55 // loop_footer_branch
                %268 = sbr.rel target = $region58
              $region63: #{forward.1} parent=55 // loop_exit
                _
            $region56: #{forward.1} parent=47 // pred_fallthru
              _
          $region48: #{forward.1} parent=43 // pred_fallthru
            _
          %320 = vnop
        $region44: #{forward.1} parent=39 // pred_fallthru
          _
        // Predicated region
        $region79: #{forward.1} parent=39 // pred_check
          %p321 = pneg %p61
        $region80: #{forward.1} parent=39 // pred_check_branch
          %323 = sbr.rel (%p321) target = $region82
        $region81: #{forward.1} parent=39 // pred_region
          %s324 = smul.u32 32, %s15
          %p325 = scmp.lt.s32.totalorder %s324, 127
          %s326 = scalar_select %p325, %s324, 127
          %s327 = smul.addr %s326, 2
          %s328 = smul.addr %s327, 4
          %s329 = scalar_lea.vmem %s1, %s328
          %s330 = smul.u32 32, %s15
        $region82: #{forward.1} parent=39 // pred_fallthru
          _
      $region40: #{forward.1} parent=5 // pred_fallthru
        _
      %p331 = scmp.le.s32.totalorder 1, %s15
      %p332 = scmp.lt.s32.totalorder %s15, 5
      %p333 = pnand %p331, %p332
      %p334 = pneg %p333
      // Predicated region
      $region83: #{forward.1} parent=5 // pred_check
        _
      $region84: #{forward.1} parent=5 // pred_check_branch
        %336 = sbr.rel (%p333) target = $region86
      $region85: #{forward.1} parent=5 // pred_region
        %s337 = ssub.s32 %s15, 1
        %s338 = sand.u32 %s28, 1
        %s339 = sand.u32 %s28, 1
        %s340 = smul.addr %s339, 64
        %s341 = scalar_lea.vmem [#allocation2], %s340
        // Predicated region
        $region87: #{forward.1} parent=85 // pred_check
          %p342 = pneg %p41
        $region88: #{forward.1} parent=85 // pred_check_branch
          %344 = sbr.rel (%p342) target = $region90
        $region89: #{forward.1} parent=85 // pred_region
          _
        $region90: #{forward.1} parent=85 // pred_fallthru
          _
        %s345 = sand.u32 %s28, 1
        %s346 = sand.u32 %s28, 1
        %s347 = smul.addr %s346, 64
        %s348 = scalar_lea.vmem [#allocation2], %s347
        %p349 = pneg %p41
        %p350 = pneg %p38
        %s351 = smul.u32 32, %s20
        %p352 = scmp.lt.s32.totalorder %s351, 127
        %s353 = scalar_select %p352, %s351, 127
        %s354 = smul.addr %s353, 2
        %s355 = smul.addr %s354, 4
        %s356 = scalar_lea.vmem %s1, %s355
        %p357 = pneg %p67
        %p358 = pneg %p64
        %p359 = pneg %p88
        %p360 = pneg %p85
        %p361 = pneg %p109
        %p362 = pneg %p106
        %p363 = pneg %p130
        %p364 = pneg %p127
        %p365 = pneg %p151
        %p366 = pneg %p148
        %p367 = pneg %p172
        %p368 = pneg %p169
        %p369 = pneg %p193
        %p370 = pneg %p190
        %p371 = pneg %p214
        %p372 = pneg %p211
        %s373 = smul.u32 2, %s20
        %s374 = smul.u32 32, %s20
        %p375 = scmp.lt.s32.totalorder %s374, 127
        %s376 = scalar_select %p375, %s374, 127
        %s377 = smul.addr %s376, 2
        %s378 = smul.addr %s377, 4
        %s379 = scalar_lea.vmem %s1, %s378
        %s380 = smul.u32 32, %s20
        %p381 = scmp.eq.s32.totalorder %s20, 0
        // Predicated region
        $region91: #{forward.1} parent=85 // pred_check
          %p382 = pneg %p381
        $region92: #{forward.1} parent=85 // pred_check_branch
          %384 = sbr.rel (%p382) target = $region94
        $region93: #{forward.1} parent=85 // pred_region
          %385 = vst [vmem:[#allocation3] sm:$0xff] 0.0
          %386 = vst [vmem:[#allocation3 + $0x8] sm:$0xff] 0.0
          %387 = vst [vmem:[#allocation3 + $0x10] sm:$0xff] 0.0
          %388 = vst [vmem:[#allocation3 + $0x18] sm:$0xff] 0.0
          %389 = vst [vmem:[#allocation3 + $0x20] sm:$0xff] 0.0
          %390 = vst [vmem:[#allocation3 + $0x28] sm:$0xff] 0.0
          %391 = vst [vmem:[#allocation3 + $0x30] sm:$0xff] 0.0
          %392 = vst [vmem:[#allocation3 + $0x38] sm:$0xff] 0.0
          %393 = vst [vmem:[#allocation3 + $0x40] sm:$0xff] 0.0
          %394 = vst [vmem:[#allocation3 + $0x48] sm:$0xff] 0.0
          %395 = vst [vmem:[#allocation3 + $0x50] sm:$0xff] 0.0
          %396 = vst [vmem:[#allocation3 + $0x58] sm:$0xff] 0.0
          %397 = vst [vmem:[#allocation3 + $0x60] sm:$0xff] 0.0
          %398 = vst [vmem:[#allocation3 + $0x68] sm:$0xff] 0.0
          %399 = vst [vmem:[#allocation3 + $0x70] sm:$0xff] 0.0
          %400 = vst [vmem:[#allocation3 + $0x78] sm:$0xff] 0.0
        $region94: #{forward.1} parent=85 // pred_fallthru
          _
        %v401 = vld [vmem:[#allocation3] sm:$0xff]
        %v402 = vld [vmem:[#allocation3 + $0x8] sm:$0xff]
        %v403 = vld [vmem:[#allocation3 + $0x10] sm:$0xff]
        %v404 = vld [vmem:[#allocation3 + $0x18] sm:$0xff]
        %v405 = vld [vmem:[#allocation3 + $0x20] sm:$0xff]
        %v406 = vld [vmem:[#allocation3 + $0x28] sm:$0xff]
        %v407 = vld [vmem:[#allocation3 + $0x30] sm:$0xff]
        %v408 = vld [vmem:[#allocation3 + $0x38] sm:$0xff]
        %v409 = vld [vmem:[#allocation3 + $0x40] sm:$0xff]
        %v410 = vld [vmem:[#allocation3 + $0x48] sm:$0xff]
        %v411 = vld [vmem:[#allocation3 + $0x50] sm:$0xff]
        %v412 = vld [vmem:[#allocation3 + $0x58] sm:$0xff]
        %v413 = vld [vmem:[#allocation3 + $0x60] sm:$0xff]
        %v414 = vld [vmem:[#allocation3 + $0x68] sm:$0xff]
        %v415 = vld [vmem:[#allocation3 + $0x70] sm:$0xff]
        %v416 = vld [vmem:[#allocation3 + $0x78] sm:$0xff]
        %v417 = vld [vmem:[%s341] sm:$0xff]
        %v418 = vld [vmem:[%s341 + $0x8] sm:$0xff]
        %v419 = vld [vmem:[%s341 + $0x10] sm:$0xff]
        %v420 = vld [vmem:[%s341 + $0x18] sm:$0xff]
        %v421 = vld [vmem:[%s341 + $0x20] sm:$0xff]
        %v422 = vld [vmem:[%s341 + $0x28] sm:$0xff]
        %v423 = vld [vmem:[%s341 + $0x30] sm:$0xff]
        %v424 = vld [vmem:[%s341 + $0x38] sm:$0xff]
        %v425 = vld [vmem:[%s379] sm:$0xff]
        %v426 = vld [vmem:[%s379 + $0x8] sm:$0xff]
        %v427 = vld [vmem:[%s379 + $0x10] sm:$0xff]
        %v428 = vld [vmem:[%s379 + $0x18] sm:$0xff]
        %v429 = vld [vmem:[%s379 + $0x20] sm:$0xff]
        %v430 = vld [vmem:[%s379 + $0x28] sm:$0xff]
        %v431 = vld [vmem:[%s379 + $0x30] sm:$0xff]
        %v432 = vld [vmem:[%s379 + $0x38] sm:$0xff]
        %v433 = vld [vmem:[%s379 + $0x40] sm:$0xff]
        %v434 = vld [vmem:[%s379 + $0x48] sm:$0xff]
        %v435 = vld [vmem:[%s379 + $0x50] sm:$0xff]
        %v436 = vld [vmem:[%s379 + $0x58] sm:$0xff]
        %v437 = vld [vmem:[%s379 + $0x60] sm:$0xff]
        %v438 = vld [vmem:[%s379 + $0x68] sm:$0xff]
        %v439 = vld [vmem:[%s379 + $0x70] sm:$0xff]
        %v440 = vld [vmem:[%s379 + $0x78] sm:$0xff]
        %v441 = vld [vmem:[%s379 + $0x80] sm:$0xff]
        %v442 = vld [vmem:[%s379 + $0x88] sm:$0xff]
        %v443 = vld [vmem:[%s379 + $0x90] sm:$0xff]
        %v444 = vld [vmem:[%s379 + $0x98] sm:$0xff]
        %v445 = vld [vmem:[%s379 + $0xa0] sm:$0xff]
        %v446 = vld [vmem:[%s379 + $0xa8] sm:$0xff]
        %v447 = vld [vmem:[%s379 + $0xb0] sm:$0xff]
        %v448 = vld [vmem:[%s379 + $0xb8] sm:$0xff]
        %v449 = vld [vmem:[%s379 + $0xc0] sm:$0xff]
        %v450 = vld [vmem:[%s379 + $0xc8] sm:$0xff]
        %v451 = vld [vmem:[%s379 + $0xd0] sm:$0xff]
        %v452 = vld [vmem:[%s379 + $0xd8] sm:$0xff]
        %v453 = vld [vmem:[%s379 + $0xe0] sm:$0xff]
        %v454 = vld [vmem:[%s379 + $0xe8] sm:$0xff]
        %v455 = vld [vmem:[%s379 + $0xf0] sm:$0xff]
        %v456 = vld [vmem:[%s379 + $0xf8] sm:$0xff]
        %v465 = vunpack.c.l.b16 %v417
        %v466 = vunpack.c.h.b16 %v417
        %v467 = vunpack.c.l.b16 %v418
        %v468 = vunpack.c.h.b16 %v418
        %v469 = vunpack.c.l.b16 %v419
        %v470 = vunpack.c.h.b16 %v419
        %v471 = vunpack.c.l.b16 %v420
        %v472 = vunpack.c.h.b16 %v420
        %v473 = vunpack.c.l.b16 %v421
        %v474 = vunpack.c.h.b16 %v421
        %v475 = vunpack.c.l.b16 %v422
        %v476 = vunpack.c.h.b16 %v422
        %v477 = vunpack.c.l.b16 %v423
        %v478 = vunpack.c.h.b16 %v423
        %v479 = vunpack.c.l.b16 %v424
        %v480 = vunpack.c.h.b16 %v424
        %v481 = vpack.c.b16 %v467, %v465
        %v482 = vpack.c.b16 %v468, %v466
        %v483 = vpack.c.b16 %v471, %v469
        %v484 = vpack.c.b16 %v472, %v470
        %v485 = vpack.c.b16 %v475, %v473
        %v486 = vpack.c.b16 %v476, %v474
        %v487 = vpack.c.b16 %v479, %v477
        %v488 = vpack.c.b16 %v480, %v478
        %v529 = vunpack.c.l.b16 %v425
        %v530 = vunpack.c.h.b16 %v425
        %v531 = vunpack.c.l.b16 %v426
        %v532 = vunpack.c.h.b16 %v426
        %v533 = vunpack.c.l.b16 %v427
        %v534 = vunpack.c.h.b16 %v427
        %v535 = vunpack.c.l.b16 %v428
        %v536 = vunpack.c.h.b16 %v428
        %v537 = vunpack.c.l.b16 %v429
        %v538 = vunpack.c.h.b16 %v429
        %v539 = vunpack.c.l.b16 %v430
        %v540 = vunpack.c.h.b16 %v430
        %v541 = vunpack.c.l.b16 %v431
        %v542 = vunpack.c.h.b16 %v431
        %v543 = vunpack.c.l.b16 %v432
        %v544 = vunpack.c.h.b16 %v432
        %v545 = vunpack.c.l.b16 %v433
        %v546 = vunpack.c.h.b16 %v433
        %v547 = vunpack.c.l.b16 %v434
        %v548 = vunpack.c.h.b16 %v434
        %v549 = vunpack.c.l.b16 %v435
        %v550 = vunpack.c.h.b16 %v435
        %v551 = vunpack.c.l.b16 %v436
        %v552 = vunpack.c.h.b16 %v436
        %v553 = vunpack.c.l.b16 %v437
        %v554 = vunpack.c.h.b16 %v437
        %v555 = vunpack.c.l.b16 %v438
        %v556 = vunpack.c.h.b16 %v438
        %v557 = vunpack.c.l.b16 %v439
        %v558 = vunpack.c.h.b16 %v439
        %v559 = vunpack.c.l.b16 %v440
        %v560 = vunpack.c.h.b16 %v440
        %v561 = vunpack.c.l.b16 %v441
        %v562 = vunpack.c.h.b16 %v441
        %v563 = vunpack.c.l.b16 %v442
        %v564 = vunpack.c.h.b16 %v442
        %v565 = vunpack.c.l.b16 %v443
        %v566 = vunpack.c.h.b16 %v443
        %v567 = vunpack.c.l.b16 %v444
        %v568 = vunpack.c.h.b16 %v444
        %v569 = vunpack.c.l.b16 %v445
        %v570 = vunpack.c.h.b16 %v445
        %v571 = vunpack.c.l.b16 %v446
        %v572 = vunpack.c.h.b16 %v446
        %v573 = vunpack.c.l.b16 %v447
        %v574 = vunpack.c.h.b16 %v447
        %v575 = vunpack.c.l.b16 %v448
        %v576 = vunpack.c.h.b16 %v448
        %v577 = vunpack.c.l.b16 %v449
        %v578 = vunpack.c.h.b16 %v449
        %v579 = vunpack.c.l.b16 %v450
        %v580 = vunpack.c.h.b16 %v450
        %v581 = vunpack.c.l.b16 %v451
        %v582 = vunpack.c.h.b16 %v451
        %v583 = vunpack.c.l.b16 %v452
        %v584 = vunpack.c.h.b16 %v452
        %v585 = vunpack.c.l.b16 %v453
        %v586 = vunpack.c.h.b16 %v453
        %v587 = vunpack.c.l.b16 %v454
        %v588 = vunpack.c.h.b16 %v454
        %v589 = vunpack.c.l.b16 %v455
        %v590 = vunpack.c.h.b16 %v455
        %v591 = vunpack.c.l.b16 %v456
        %v592 = vunpack.c.h.b16 %v456
        %v593 = vpack.c.b16 %v531, %v529
        %v594 = vpack.c.b16 %v532, %v530
        %v595 = vpack.c.b16 %v535, %v533
        %v596 = vpack.c.b16 %v536, %v534
        %v597 = vpack.c.b16 %v539, %v537
        %v598 = vpack.c.b16 %v540, %v538
        %v599 = vpack.c.b16 %v543, %v541
        %v600 = vpack.c.b16 %v544, %v542
        %v601 = vpack.c.b16 %v547, %v545
        %v602 = vpack.c.b16 %v548, %v546
        %v603 = vpack.c.b16 %v551, %v549
        %v604 = vpack.c.b16 %v552, %v550
        %v605 = vpack.c.b16 %v555, %v553
        %v606 = vpack.c.b16 %v556, %v554
        %v607 = vpack.c.b16 %v559, %v557
        %v608 = vpack.c.b16 %v560, %v558
        %v609 = vpack.c.b16 %v563, %v561
        %v610 = vpack.c.b16 %v564, %v562
        %v611 = vpack.c.b16 %v567, %v565
        %v612 = vpack.c.b16 %v568, %v566
        %v613 = vpack.c.b16 %v571, %v569
        %v614 = vpack.c.b16 %v572, %v570
        %v615 = vpack.c.b16 %v575, %v573
        %v616 = vpack.c.b16 %v576, %v574
        %v617 = vpack.c.b16 %v579, %v577
        %v618 = vpack.c.b16 %v580, %v578
        %v619 = vpack.c.b16 %v583, %v581
        %v620 = vpack.c.b16 %v584, %v582
        %v621 = vpack.c.b16 %v587, %v585
        %v622 = vpack.c.b16 %v588, %v586
        %v623 = vpack.c.b16 %v591, %v589
        %v624 = vpack.c.b16 %v592, %v590
        %657 = vmatprep.subr.bf16.mxu0 %v594
        %658 = vmatpush1.bf16.msra.mxu0 %v593
        %659 = vmatprep.subr.bf16.mxu0 %v596
        %660 = vmatpush1.bf16.msra.mxu0 %v595
        %661 = vmatprep.subr.bf16.mxu0 %v598
        %662 = vmatpush1.bf16.msra.mxu0 %v597
        %663 = vmatprep.subr.bf16.mxu0 %v600
        %664 = vmatpush1.bf16.msra.mxu0 %v599
        %665 = vmatprep.subr.bf16.mxu0 %v602
        %666 = vmatpush1.bf16.msra.mxu0 %v601
        %667 = vmatprep.subr.bf16.mxu0 %v604
        %668 = vmatpush1.bf16.msra.mxu0 %v603
        %669 = vmatprep.subr.bf16.mxu0 %v606
        %670 = vmatpush1.bf16.msra.mxu0 %v605
        %671 = vmatprep.subr.bf16.mxu0 %v608
        %672 = vmatpush1.bf16.msra.mxu0 %v607
        %673 = vmatprep.subr.bf16.mxu0 %v610
        %674 = vmatpush1.bf16.msra.mxu0 %v609
        %675 = vmatprep.subr.bf16.mxu0 %v612
        %676 = vmatpush1.bf16.msra.mxu0 %v611
        %677 = vmatprep.subr.bf16.mxu0 %v614
        %678 = vmatpush1.bf16.msra.mxu0 %v613
        %679 = vmatprep.subr.bf16.mxu0 %v616
        %680 = vmatpush1.bf16.msra.mxu0 %v615
        %681 = vmatprep.subr.bf16.mxu0 %v618
        %682 = vmatpush1.bf16.msra.mxu0 %v617
        %683 = vmatprep.subr.bf16.mxu0 %v620
        %684 = vmatpush1.bf16.msra.mxu0 %v619
        %685 = vmatprep.subr.bf16.mxu0 %v622
        %686 = vmatpush1.bf16.msra.mxu0 %v621
        %687 = vmatprep.subr.bf16.mxu0 %v624
        %688 = vmatpush1.bf16.msra.mxu0 %v623
        %689 = vmatprep.mubr.bf16.mxu0 %v482
        %690 = vmatmul.mubr.bf16.gmra.mrb[0].mxu0 %v481
        %v691 = vpop.f32.mrb[0].mxu0
        %v692 = vadd.f32 0.0, %v691
        %v693 = vpop.f32.mrb[0].mxu0
        %v694 = vadd.f32 0.0, %v693
        %v695 = vpop.f32.mrb[0].mxu0
        %v696 = vadd.f32 0.0, %v695
        %v697 = vpop.f32.mrb[0].mxu0
        %v698 = vadd.f32 0.0, %v697
        %699 = vmatprep.mubr.bf16.mxu0 %v484
        %700 = vmatmul.mubr.bf16.gmra.mrb[0].mxu0 %v483
        %v701 = vpop.f32.mrb[0].mxu0
        %v702 = vadd.f32 0.0, %v701
        %v703 = vpop.f32.mrb[0].mxu0
        %v704 = vadd.f32 0.0, %v703
        %v705 = vpop.f32.mrb[0].mxu0
        %v706 = vadd.f32 0.0, %v705
        %v707 = vpop.f32.mrb[0].mxu0
        %v708 = vadd.f32 0.0, %v707
        %709 = vmatprep.mubr.bf16.mxu0 %v486
        %710 = vmatmul.mubr.bf16.gmra.mrb[0].mxu0 %v485
        %v711 = vpop.f32.mrb[0].mxu0
        %v712 = vadd.f32 0.0, %v711
        %v713 = vpop.f32.mrb[0].mxu0
        %v714 = vadd.f32 0.0, %v713
        %v715 = vpop.f32.mrb[0].mxu0
        %v716 = vadd.f32 0.0, %v715
        %v717 = vpop.f32.mrb[0].mxu0
        %v718 = vadd.f32 0.0, %v717
        %719 = vmatprep.mubr.bf16.mxu0 %v488
        %720 = vmatmul.mubr.bf16.gmra.mrb[0].mxu0 %v487
        %v721 = vpop.f32.mrb[0].mxu0
        %v722 = vadd.f32 0.0, %v721
        %v723 = vpop.f32.mrb[0].mxu0
        %v724 = vadd.f32 0.0, %v723
        %v725 = vpop.f32.mrb[0].mxu0
        %v726 = vadd.f32 0.0, %v725
        %v727 = vpop.f32.mrb[0].mxu0
        %v728 = vadd.f32 0.0, %v727
        %729 = vdwg.mxu0
        %v730 = vadd.f32 %v401, %v692
        %v731 = vadd.f32 %v402, %v694
        %v732 = vadd.f32 %v403, %v696
        %v733 = vadd.f32 %v404, %v698
        %v734 = vadd.f32 %v405, %v702
        %v735 = vadd.f32 %v406, %v704
        %v736 = vadd.f32 %v407, %v706
        %v737 = vadd.f32 %v408, %v708
        %v738 = vadd.f32 %v409, %v712
        %v739 = vadd.f32 %v410, %v714
        %v740 = vadd.f32 %v411, %v716
        %v741 = vadd.f32 %v412, %v718
        %v742 = vadd.f32 %v413, %v722
        %v743 = vadd.f32 %v414, %v724
        %v744 = vadd.f32 %v415, %v726
        %v745 = vadd.f32 %v416, %v728
        %746 = vst [vmem:[#allocation3] sm:$0xff] %v730
        %747 = vst [vmem:[#allocation3 + $0x8] sm:$0xff] %v731
        %748 = vst [vmem:[#allocation3 + $0x10] sm:$0xff] %v732
        %749 = vst [vmem:[#allocation3 + $0x18] sm:$0xff] %v733
        %750 = vst [vmem:[#allocation3 + $0x20] sm:$0xff] %v734
        %751 = vst [vmem:[#allocation3 + $0x28] sm:$0xff] %v735
        %752 = vst [vmem:[#allocation3 + $0x30] sm:$0xff] %v736
        %753 = vst [vmem:[#allocation3 + $0x38] sm:$0xff] %v737
        %754 = vst [vmem:[#allocation3 + $0x40] sm:$0xff] %v738
        %755 = vst [vmem:[#allocation3 + $0x48] sm:$0xff] %v739
        %756 = vst [vmem:[#allocation3 + $0x50] sm:$0xff] %v740
        %757 = vst [vmem:[#allocation3 + $0x58] sm:$0xff] %v741
        %758 = vst [vmem:[#allocation3 + $0x60] sm:$0xff] %v742
        %759 = vst [vmem:[#allocation3 + $0x68] sm:$0xff] %v743
        %760 = vst [vmem:[#allocation3 + $0x70] sm:$0xff] %v744
        %761 = vst [vmem:[#allocation3 + $0x78] sm:$0xff] %v745
        %p762 = scmp.eq.s32.totalorder %s20, 3
        // Predicated region
        $region95: #{forward.1} parent=85 // pred_check
          %p763 = pneg %p762
        $region96: #{forward.1} parent=85 // pred_check_branch
          %765 = sbr.rel (%p763) target = $region98
        $region97: #{forward.1} parent=85 // pred_region
          %v766 = vld [vmem:[#allocation3] sm:$0xff]
          %v767 = vld [vmem:[#allocation3 + $0x8] sm:$0xff]
          %v768 = vld [vmem:[#allocation3 + $0x10] sm:$0xff]
          %v769 = vld [vmem:[#allocation3 + $0x18] sm:$0xff]
          %v770 = vld [vmem:[#allocation3 + $0x20] sm:$0xff]
          %v771 = vld [vmem:[#allocation3 + $0x28] sm:$0xff]
          %v772 = vld [vmem:[#allocation3 + $0x30] sm:$0xff]
          %v773 = vld [vmem:[#allocation3 + $0x38] sm:$0xff]
          %v774 = vld [vmem:[#allocation3 + $0x40] sm:$0xff]
          %v775 = vld [vmem:[#allocation3 + $0x48] sm:$0xff]
          %v776 = vld [vmem:[#allocation3 + $0x50] sm:$0xff]
          %v777 = vld [vmem:[#allocation3 + $0x58] sm:$0xff]
          %v778 = vld [vmem:[#allocation3 + $0x60] sm:$0xff]
          %v779 = vld [vmem:[#allocation3 + $0x68] sm:$0xff]
          %v780 = vld [vmem:[#allocation3 + $0x70] sm:$0xff]
          %v781 = vld [vmem:[#allocation3 + $0x78] sm:$0xff]
          %v782 = vld [vmem:[%s2] sm:$0x3]
          %v783 = vld [vmem:[%s3] sm:$0x3]
          %v784 = vadd.f32 %v766, %v768
          %v785 = vadd.f32 %v784, %v770
          %v786 = vadd.f32 %v785, %v772
          %v787 = vadd.f32 %v786, %v774
          %v788 = vadd.f32 %v787, %v776
          %v789 = vadd.f32 %v788, %v778
          %v790 = vadd.f32 %v789, %v780
          %v791 = vrot.slane %v790, 4
          %v792 = vadd.f32 %v790, %v791
          %v793 = vrot.slane %v792, 2
          %v794 = vadd.f32 %v792, %v793
          %v795 = vrot.slane %v794, 1
          %v796 = vadd.f32 %v794, %v795
          %v797 = vadd.f32 %v767, %v769
          %v798 = vadd.f32 %v797, %v771
          %v799 = vadd.f32 %v798, %v773
          %v800 = vadd.f32 %v799, %v775
          %v801 = vadd.f32 %v800, %v777
          %v802 = vadd.f32 %v801, %v779
          %v803 = vadd.f32 %v802, %v781
          %v804 = vrot.slane %v803, 4
          %v805 = vadd.f32 %v803, %v804
          %v806 = vrot.slane %v805, 2
          %v807 = vadd.f32 %v805, %v806
          %v808 = vrot.slane %v807, 1
          %v809 = vadd.f32 %v807, %v808
          %v810 = vmul.f32 %v796, 0.015625
          %v811 = vmul.f32 %v809, 0.015625
          %v812 = vsub.f32 %v766, %v810
          %v813 = vsub.f32 %v767, %v811
          %v814 = vsub.f32 %v768, %v810
          %v815 = vsub.f32 %v769, %v811
          %v816 = vsub.f32 %v770, %v810
          %v817 = vsub.f32 %v771, %v811
          %v818 = vsub.f32 %v772, %v810
          %v819 = vsub.f32 %v773, %v811
          %v820 = vsub.f32 %v774, %v810
          %v821 = vsub.f32 %v775, %v811
          %v822 = vsub.f32 %v776, %v810
          %v823 = vsub.f32 %v777, %v811
          %v824 = vsub.f32 %v778, %v810
          %v825 = vsub.f32 %v779, %v811
          %v826 = vsub.f32 %v780, %v810
          %v827 = vsub.f32 %v781, %v811
          %v828 = vmul.f32 %v812, %v812
          %v829 = vmul.f32 %v813, %v813
          %v830 = vmul.f32 %v814, %v814
          %v831 = vmul.f32 %v815, %v815
          %v832 = vmul.f32 %v816, %v816
          %v833 = vmul.f32 %v817, %v817
          %v834 = vmul.f32 %v818, %v818
          %v835 = vmul.f32 %v819, %v819
          %v836 = vmul.f32 %v820, %v820
          %v837 = vmul.f32 %v821, %v821
          %v838 = vmul.f32 %v822, %v822
          %v839 = vmul.f32 %v823, %v823
          %v840 = vmul.f32 %v824, %v824
          %v841 = vmul.f32 %v825, %v825
          %v842 = vmul.f32 %v826, %v826
          %v843 = vmul.f32 %v827, %v827
          %v844 = vadd.f32 %v828, %v830
          %v845 = vadd.f32 %v844, %v832
          %v846 = vadd.f32 %v845, %v834
          %v847 = vadd.f32 %v846, %v836
          %v848 = vadd.f32 %v847, %v838
          %v849 = vadd.f32 %v848, %v840
          %v850 = vadd.f32 %v849, %v842
          %v851 = vrot.slane %v850, 4
          %v852 = vadd.f32 %v850, %v851
          %v853 = vrot.slane %v852, 2
          %v854 = vadd.f32 %v852, %v853
          %v855 = vrot.slane %v854, 1
          %v856 = vadd.f32 %v854, %v855
          %v857 = vadd.f32 %v829, %v831
          %v858 = vadd.f32 %v857, %v833
          %v859 = vadd.f32 %v858, %v835
          %v860 = vadd.f32 %v859, %v837
          %v861 = vadd.f32 %v860, %v839
          %v862 = vadd.f32 %v861, %v841
          %v863 = vadd.f32 %v862, %v843
          %v864 = vrot.slane %v863, 4
          %v865 = vadd.f32 %v863, %v864
          %v866 = vrot.slane %v865, 2
          %v867 = vadd.f32 %v865, %v866
          %v868 = vrot.slane %v867, 1
          %v869 = vadd.f32 %v867, %v868
          %v870 = vmul.f32 %v856, 0.015625
          %v871 = vmul.f32 %v869, 0.015625
          %v872 = vadd.f32 %v870, 1e-05
          %v873 = vadd.f32 %v871, 1e-05
          %v874 = vrsqrt.pop %v872
          %v875 = vrsqrt.pop %v873
          %v877 = vlaneseq
          %v878 = vshrl.u32 %v877, 7
          %v879 = vsub.s32 0, %v878
          %v880 = vrot.slane %v782, %v879
          %v881 = vlaneseq
          %v882 = vshrl.u32 %v881, 7
          %v883 = vsub.s32 1, %v882
          %v884 = vrot.slane %v782, %v883
          %v887 = vmul.f32 %v874, %v880
          %v888 = vmul.f32 %v875, %v884
          %v889 = vlaneseq
          %v890 = vshrl.u32 %v889, 7
          %v891 = vsub.s32 0, %v890
          %v892 = vrot.slane %v887, %v891
          %v893 = vlaneseq
          %v894 = vshrl.u32 %v893, 7
          %v895 = vsub.s32 0, %v894
          %v896 = vrot.slane %v888, %v895
          %v897 = vmul.f32 %v812, %v892
          %v898 = vmul.f32 %v813, %v896
          %v899 = vmul.f32 %v814, %v892
          %v900 = vmul.f32 %v815, %v896
          %v901 = vmul.f32 %v816, %v892
          %v902 = vmul.f32 %v817, %v896
          %v903 = vmul.f32 %v818, %v892
          %v904 = vmul.f32 %v819, %v896
          %v905 = vmul.f32 %v820, %v892
          %v906 = vmul.f32 %v821, %v896
          %v907 = vmul.f32 %v822, %v892
          %v908 = vmul.f32 %v823, %v896
          %v909 = vmul.f32 %v824, %v892
          %v910 = vmul.f32 %v825, %v896
          %v911 = vmul.f32 %v826, %v892
          %v912 = vmul.f32 %v827, %v896
          %v914 = vlaneseq
          %v915 = vshrl.u32 %v914, 7
          %v916 = vsub.s32 0, %v915
          %v917 = vrot.slane %v783, %v916
          %v918 = vlaneseq
          %v919 = vshrl.u32 %v918, 7
          %v920 = vsub.s32 1, %v919
          %v921 = vrot.slane %v783, %v920
          %v924 = vadd.f32 %v897, %v917
          %v925 = vadd.f32 %v898, %v921
          %v926 = vadd.f32 %v899, %v917
          %v927 = vadd.f32 %v900, %v921
          %v928 = vadd.f32 %v901, %v917
          %v929 = vadd.f32 %v902, %v921
          %v930 = vadd.f32 %v903, %v917
          %v931 = vadd.f32 %v904, %v921
          %v932 = vadd.f32 %v905, %v917
          %v933 = vadd.f32 %v906, %v921
          %v934 = vadd.f32 %v907, %v917
          %v935 = vadd.f32 %v908, %v921
          %v936 = vadd.f32 %v909, %v917
          %v937 = vadd.f32 %v910, %v921
          %v938 = vadd.f32 %v911, %v917
          %v939 = vadd.f32 %v912, %v921
          %v940 = vmax.f32 %v924, 0.0
          %v941 = vmax.f32 %v925, 0.0
          %v942 = vmax.f32 %v926, 0.0
          %v943 = vmax.f32 %v927, 0.0
          %v944 = vmax.f32 %v928, 0.0
          %v945 = vmax.f32 %v929, 0.0
          %v946 = vmax.f32 %v930, 0.0
          %v947 = vmax.f32 %v931, 0.0
          %v948 = vmax.f32 %v932, 0.0
          %v949 = vmax.f32 %v933, 0.0
          %v950 = vmax.f32 %v934, 0.0
          %v951 = vmax.f32 %v935, 0.0
          %v952 = vmax.f32 %v936, 0.0
          %v953 = vmax.f32 %v937, 0.0
          %v954 = vmax.f32 %v938, 0.0
          %v955 = vmax.f32 %v939, 0.0
          %v956 = vpack.c.bf16 %v942, %v940
          %v957 = vpack.c.bf16 %v943, %v941
          %v958 = vpack.c.bf16 %v946, %v944
          %v959 = vpack.c.bf16 %v947, %v945
          %v960 = vpack.c.bf16 %v950, %v948
          %v961 = vpack.c.bf16 %v951, %v949
          %v962 = vpack.c.bf16 %v954, %v952
          %v963 = vpack.c.bf16 %v955, %v953
          %v964 = vld [vmem:[%s7] sm:$0xff]
          %v965 = vld [vmem:[%s7 + $0x8] sm:$0xff]
          %v966 = vld [vmem:[%s7 + $0x10] sm:$0xff]
          %v967 = vld [vmem:[%s7 + $0x18] sm:$0xff]
          %v968 = vld [vmem:[%s7 + $0x20] sm:$0xff]
          %v969 = vld [vmem:[%s7 + $0x28] sm:$0xff]
          %v970 = vld [vmem:[%s7 + $0x30] sm:$0xff]
          %v971 = vld [vmem:[%s7 + $0x38] sm:$0xff]
          %v972 = vrot.slane %v940, 6
          %v973 = vrot.slane %v941, 6
          %v974 = vrot.slane %v942, 6
          %v975 = vrot.slane %v943, 6
          %v976 = vrot.slane %v944, 6
          %v977 = vrot.slane %v945, 6
          %v978 = vrot.slane %v946, 6
          %v979 = vrot.slane %v947, 6
          %v980 = vrot.slane %v948, 6
          %v981 = vrot.slane %v949, 6
          %v982 = vrot.slane %v950, 6
          %v983 = vrot.slane %v951, 6
          %v984 = vrot.slane %v952, 6
          %v985 = vrot.slane %v953, 6
          %v986 = vrot.slane %v954, 6
          %v987 = vrot.slane %v955, 6
          %v988 = vlaneseq
          %v989 = vshrl.u32 %v988, 7
          %vm990 = vcmp.lt.s32.totalorder %v989, 2
          %v991 = vsel %vm990, %v984, %v986
          %v992 = vsel %vm990, %v985, %v987
          %v993 = vsel %vm990, %v982, %v984
          %v994 = vsel %vm990, %v983, %v985
          %v995 = vsel %vm990, %v980, %v982
          %v996 = vsel %vm990, %v981, %v983
          %v997 = vsel %vm990, %v978, %v980
          %v998 = vsel %vm990, %v979, %v981
          %v999 = vsel %vm990, %v976, %v978
          %v1000 = vsel %vm990, %v977, %v979
          %v1001 = vsel %vm990, %v974, %v976
          %v1002 = vsel %vm990, %v975, %v977
          %v1003 = vsel %vm990, %v972, %v974
          %v1004 = vsel %vm990, %v973, %v975
          %v1005 = vsel %vm990, %v986, %v972
          %v1006 = vsel %vm990, %v987, %v973
          %1008 = vset.pattern.permute.xlu0 0
          %1009 = vperm.xlu0 %1008, %v964
          %v1010 = vpop.permute.xlu0 %1009
          %1013 = vset.pattern.permute.xlu0 0
          %1014 = vperm.xlu0 %1013, %v965
          %v1015 = vpop.permute.xlu0 %1014
          %1018 = vset.pattern.permute.xlu0 0
          %1019 = vperm.xlu0 %1018, %v966
          %v1020 = vpop.permute.xlu0 %1019
          %1023 = vset.pattern.permute.xlu0 0
          %1024 = vperm.xlu0 %1023, %v967
          %v1025 = vpop.permute.xlu0 %1024
          %1028 = vset.pattern.permute.xlu0 0
          %1029 = vperm.xlu0 %1028, %v968
          %v1030 = vpop.permute.xlu0 %1029
          %1033 = vset.pattern.permute.xlu0 0
          %1034 = vperm.xlu0 %1033, %v969
          %v1035 = vpop.permute.xlu0 %1034
          %1038 = vset.pattern.permute.xlu0 0
          %1039 = vperm.xlu0 %1038, %v970
          %v1040 = vpop.permute.xlu0 %1039
          %1043 = vset.pattern.permute.xlu0 0
          %1044 = vperm.xlu0 %1043, %v971
          %v1045 = vpop.permute.xlu0 %1044
          %v1047 = vmul.f32 %v993, %v1010
          %v1048 = vmul.f32 %v994, %v1010
          %v1049 = vmul.f32 %v991, %v1015
          %v1050 = vmul.f32 %v992, %v1015
          %v1051 = vmul.f32 %v1005, %v1020
          %v1052 = vmul.f32 %v1006, %v1020
          %v1053 = vmul.f32 %v1003, %v1025
          %v1054 = vmul.f32 %v1004, %v1025
          %v1055 = vmul.f32 %v1001, %v1030
          %v1056 = vmul.f32 %v1002, %v1030
          %v1057 = vmul.f32 %v999, %v1035
          %v1058 = vmul.f32 %v1000, %v1035
          %v1059 = vmul.f32 %v997, %v1040
          %v1060 = vmul.f32 %v998, %v1040
          %v1061 = vmul.f32 %v995, %v1045
          %v1062 = vmul.f32 %v996, %v1045
          %v1063 = vpack.c.bf16 %v1049, %v1047
          %v1064 = vpack.c.bf16 %v1050, %v1048
          %v1065 = vpack.c.bf16 %v1053, %v1051
          %v1066 = vpack.c.bf16 %v1054, %v1052
          %v1067 = vpack.c.bf16 %v1057, %v1055
          %v1068 = vpack.c.bf16 %v1058, %v1056
          %v1069 = vpack.c.bf16 %v1061, %v1059
          %v1070 = vpack.c.bf16 %v1062, %v1060
          %v1071 = vld [vmem:[%s4] sm:$0xff]
          %v1072 = vld [vmem:[%s4 + $0x8] sm:$0xff]
          %v1073 = vld [vmem:[%s4 + $0x10] sm:$0xff]
          %v1074 = vld [vmem:[%s4 + $0x18] sm:$0xff]
          %v1075 = vld [vmem:[%s4 + $0x20] sm:$0xff]
          %v1076 = vld [vmem:[%s4 + $0x28] sm:$0xff]
          %v1077 = vld [vmem:[%s4 + $0x30] sm:$0xff]
          %v1078 = vld [vmem:[%s4 + $0x38] sm:$0xff]
          %v1079 = vld [vmem:[%s4 + $0x40] sm:$0xff]
          %v1080 = vld [vmem:[%s4 + $0x48] sm:$0xff]
          %v1081 = vld [vmem:[%s4 + $0x50] sm:$0xff]
          %v1082 = vld [vmem:[%s4 + $0x58] sm:$0xff]
          %v1083 = vld [vmem:[%s4 + $0x60] sm:$0xff]
          %v1084 = vld [vmem:[%s4 + $0x68] sm:$0xff]
          %v1085 = vld [vmem:[%s4 + $0x70] sm:$0xff]
          %v1086 = vld [vmem:[%s4 + $0x78] sm:$0xff]
          %v1087 = vld [vmem:[%s4 + $0x80] sm:$0xff]
          %v1088 = vld [vmem:[%s4 + $0x88] sm:$0xff]
          %v1089 = vld [vmem:[%s4 + $0x90] sm:$0xff]
          %v1090 = vld [vmem:[%s4 + $0x98] sm:$0xff]
          %v1091 = vld [vmem:[%s4 + $0xa0] sm:$0xff]
          %v1092 = vld [vmem:[%s4 + $0xa8] sm:$0xff]
          %v1093 = vld [vmem:[%s4 + $0xb0] sm:$0xff]
          %v1094 = vld [vmem:[%s4 + $0xb8] sm:$0xff]
          %v1095 = vld [vmem:[%s4 + $0xc0] sm:$0xff]
          %v1096 = vld [vmem:[%s4 + $0xc8] sm:$0xff]
          %v1097 = vld [vmem:[%s4 + $0xd0] sm:$0xff]
          %v1098 = vld [vmem:[%s4 + $0xd8] sm:$0xff]
          %v1099 = vld [vmem:[%s4 + $0xe0] sm:$0xff]
          %v1100 = vld [vmem:[%s4 + $0xe8] sm:$0xff]
          %v1101 = vld [vmem:[%s4 + $0xf0] sm:$0xff]
          %v1102 = vld [vmem:[%s4 + $0xf8] sm:$0xff]
          %1103 = vset.pattern.permute.xlu0 1
          %1104 = vperm.xlu0 %1103, %v964
          %v1105 = vpop.permute.xlu0 %1104
          %1107 = vset.pattern.permute.xlu0 1
          %1108 = vperm.xlu0 %1107, %v965
          %v1109 = vpop.permute.xlu0 %1108
          %1111 = vset.pattern.permute.xlu0 1
          %1112 = vperm.xlu0 %1111, %v966
          %v1113 = vpop.permute.xlu0 %1112
          %1115 = vset.pattern.permute.xlu0 1
          %1116 = vperm.xlu0 %1115, %v967
          %v1117 = vpop.permute.xlu0 %1116
          %1119 = vset.pattern.permute.xlu0 1
          %1120 = vperm.xlu0 %1119, %v968
          %v1121 = vpop.permute.xlu0 %1120
          %1123 = vset.pattern.permute.xlu0 1
          %1124 = vperm.xlu0 %1123, %v969
          %v1125 = vpop.permute.xlu0 %1124
          %1127 = vset.pattern.permute.xlu0 1
          %1128 = vperm.xlu0 %1127, %v970
          %v1129 = vpop.permute.xlu0 %1128
          %1131 = vset.pattern.permute.xlu0 1
          %1132 = vperm.xlu0 %1131, %v971
          %v1133 = vpop.permute.xlu0 %1132
          %v1135 = vmul.f32 %v952, %v1105
          %v1136 = vmul.f32 %v953, %v1105
          %v1137 = vmul.f32 %v954, %v1109
          %v1138 = vmul.f32 %v955, %v1109
          %v1139 = vmul.f32 %v940, %v1113
          %v1140 = vmul.f32 %v941, %v1113
          %v1141 = vmul.f32 %v942, %v1117
          %v1142 = vmul.f32 %v943, %v1117
          %v1143 = vmul.f32 %v944, %v1121
          %v1144 = vmul.f32 %v945, %v1121
          %v1145 = vmul.f32 %v946, %v1125
          %v1146 = vmul.f32 %v947, %v1125
          %v1147 = vmul.f32 %v948, %v1129
          %v1148 = vmul.f32 %v949, %v1129
          %v1149 = vmul.f32 %v950, %v1133
          %v1150 = vmul.f32 %v951, %v1133
          %v1151 = vpack.c.bf16 %v1137, %v1135
          %v1152 = vpack.c.bf16 %v1138, %v1136
          %v1153 = vpack.c.bf16 %v1141, %v1139
          %v1154 = vpack.c.bf16 %v1142, %v1140
          %v1155 = vpack.c.bf16 %v1145, %v1143
          %v1156 = vpack.c.bf16 %v1146, %v1144
          %v1157 = vpack.c.bf16 %v1149, %v1147
          %v1158 = vpack.c.bf16 %v1150, %v1148
          %v1159 = vld [vmem:[%s4 + $0x100] sm:$0xff]
          %v1160 = vld [vmem:[%s4 + $0x108] sm:$0xff]
          %v1161 = vld [vmem:[%s4 + $0x110] sm:$0xff]
          %v1162 = vld [vmem:[%s4 + $0x118] sm:$0xff]
          %v1163 = vld [vmem:[%s4 + $0x120] sm:$0xff]
          %v1164 = vld [vmem:[%s4 + $0x128] sm:$0xff]
          %v1165 = vld [vmem:[%s4 + $0x130] sm:$0xff]
          %v1166 = vld [vmem:[%s4 + $0x138] sm:$0xff]
          %v1167 = vld [vmem:[%s4 + $0x140] sm:$0xff]
          %v1168 = vld [vmem:[%s4 + $0x148] sm:$0xff]
          %v1169 = vld [vmem:[%s4 + $0x150] sm:$0xff]
          %v1170 = vld [vmem:[%s4 + $0x158] sm:$0xff]
          %v1171 = vld [vmem:[%s4 + $0x160] sm:$0xff]
          %v1172 = vld [vmem:[%s4 + $0x168] sm:$0xff]
          %v1173 = vld [vmem:[%s4 + $0x170] sm:$0xff]
          %v1174 = vld [vmem:[%s4 + $0x178] sm:$0xff]
          %v1175 = vld [vmem:[%s4 + $0x180] sm:$0xff]
          %v1176 = vld [vmem:[%s4 + $0x188] sm:$0xff]
          %v1177 = vld [vmem:[%s4 + $0x190] sm:$0xff]
          %v1178 = vld [vmem:[%s4 + $0x198] sm:$0xff]
          %v1179 = vld [vmem:[%s4 + $0x1a0] sm:$0xff]
          %v1180 = vld [vmem:[%s4 + $0x1a8] sm:$0xff]
          %v1181 = vld [vmem:[%s4 + $0x1b0] sm:$0xff]
          %v1182 = vld [vmem:[%s4 + $0x1b8] sm:$0xff]
          %v1183 = vld [vmem:[%s4 + $0x1c0] sm:$0xff]
          %v1184 = vld [vmem:[%s4 + $0x1c8] sm:$0xff]
          %v1185 = vld [vmem:[%s4 + $0x1d0] sm:$0xff]
          %v1186 = vld [vmem:[%s4 + $0x1d8] sm:$0xff]
          %v1187 = vld [vmem:[%s4 + $0x1e0] sm:$0xff]
          %v1188 = vld [vmem:[%s4 + $0x1e8] sm:$0xff]
          %v1189 = vld [vmem:[%s4 + $0x1f0] sm:$0xff]
          %v1190 = vld [vmem:[%s4 + $0x1f8] sm:$0xff]
          %v1223 = vunpack.c.l.b16 %v1159
          %v1224 = vunpack.c.h.b16 %v1159
          %v1225 = vunpack.c.l.b16 %v1160
          %v1226 = vunpack.c.h.b16 %v1160
          %v1227 = vunpack.c.l.b16 %v1161
          %v1228 = vunpack.c.h.b16 %v1161
          %v1229 = vunpack.c.l.b16 %v1162
          %v1230 = vunpack.c.h.b16 %v1162
          %v1231 = vunpack.c.l.b16 %v1163
          %v1232 = vunpack.c.h.b16 %v1163
          %v1233 = vunpack.c.l.b16 %v1164
          %v1234 = vunpack.c.h.b16 %v1164
          %v1235 = vunpack.c.l.b16 %v1165
          %v1236 = vunpack.c.h.b16 %v1165
          %v1237 = vunpack.c.l.b16 %v1166
          %v1238 = vunpack.c.h.b16 %v1166
          %v1239 = vunpack.c.l.b16 %v1167
          %v1240 = vunpack.c.h.b16 %v1167
          %v1241 = vunpack.c.l.b16 %v1168
          %v1242 = vunpack.c.h.b16 %v1168
          %v1243 = vunpack.c.l.b16 %v1169
          %v1244 = vunpack.c.h.b16 %v1169
          %v1245 = vunpack.c.l.b16 %v1170
          %v1246 = vunpack.c.h.b16 %v1170
          %v1247 = vunpack.c.l.b16 %v1171
          %v1248 = vunpack.c.h.b16 %v1171
          %v1249 = vunpack.c.l.b16 %v1172
          %v1250 = vunpack.c.h.b16 %v1172
          %v1251 = vunpack.c.l.b16 %v1173
          %v1252 = vunpack.c.h.b16 %v1173
          %v1253 = vunpack.c.l.b16 %v1174
          %v1254 = vunpack.c.h.b16 %v1174
          %v1255 = vunpack.c.l.b16 %v1175
          %v1256 = vunpack.c.h.b16 %v1175
          %v1257 = vunpack.c.l.b16 %v1176
          %v1258 = vunpack.c.h.b16 %v1176
          %v1259 = vunpack.c.l.b16 %v1177
          %v1260 = vunpack.c.h.b16 %v1177
          %v1261 = vunpack.c.l.b16 %v1178
          %v1262 = vunpack.c.h.b16 %v1178
          %v1263 = vunpack.c.l.b16 %v1179
          %v1264 = vunpack.c.h.b16 %v1179
          %v1265 = vunpack.c.l.b16 %v1180
          %v1266 = vunpack.c.h.b16 %v1180
          %v1267 = vunpack.c.l.b16 %v1181
          %v1268 = vunpack.c.h.b16 %v1181
          %v1269 = vunpack.c.l.b16 %v1182
          %v1270 = vunpack.c.h.b16 %v1182
          %v1271 = vunpack.c.l.b16 %v1183
          %v1272 = vunpack.c.h.b16 %v1183
          %v1273 = vunpack.c.l.b16 %v1184
          %v1274 = vunpack.c.h.b16 %v1184
          %v1275 = vunpack.c.l.b16 %v1185
          %v1276 = vunpack.c.h.b16 %v1185
          %v1277 = vunpack.c.l.b16 %v1186
          %v1278 = vunpack.c.h.b16 %v1186
          %v1279 = vunpack.c.l.b16 %v1187
          %v1280 = vunpack.c.h.b16 %v1187
          %v1281 = vunpack.c.l.b16 %v1188
          %v1282 = vunpack.c.h.b16 %v1188
          %v1283 = vunpack.c.l.b16 %v1189
          %v1284 = vunpack.c.h.b16 %v1189
          %v1285 = vunpack.c.l.b16 %v1190
          %v1286 = vunpack.c.h.b16 %v1190
          %v1287 = vpack.c.b16 %v1225, %v1223
          %v1288 = vpack.c.b16 %v1226, %v1224
          %v1289 = vpack.c.b16 %v1229, %v1227
          %v1290 = vpack.c.b16 %v1230, %v1228
          %v1291 = vpack.c.b16 %v1233, %v1231
          %v1292 = vpack.c.b16 %v1234, %v1232
          %v1293 = vpack.c.b16 %v1237, %v1235
          %v1294 = vpack.c.b16 %v1238, %v1236
          %v1295 = vpack.c.b16 %v1241, %v1239
          %v1296 = vpack.c.b16 %v1242, %v1240
          %v1297 = vpack.c.b16 %v1245, %v1243
          %v1298 = vpack.c.b16 %v1246, %v1244
          %v1299 = vpack.c.b16 %v1249, %v1247
          %v1300 = vpack.c.b16 %v1250, %v1248
          %v1301 = vpack.c.b16 %v1253, %v1251
          %v1302 = vpack.c.b16 %v1254, %v1252
          %v1303 = vpack.c.b16 %v1257, %v1255
          %v1304 = vpack.c.b16 %v1258, %v1256
          %v1305 = vpack.c.b16 %v1261, %v1259
          %v1306 = vpack.c.b16 %v1262, %v1260
          %v1307 = vpack.c.b16 %v1265, %v1263
          %v1308 = vpack.c.b16 %v1266, %v1264
          %v1309 = vpack.c.b16 %v1269, %v1267
          %v1310 = vpack.c.b16 %v1270, %v1268
          %v1311 = vpack.c.b16 %v1273, %v1271
          %v1312 = vpack.c.b16 %v1274, %v1272
          %v1313 = vpack.c.b16 %v1277, %v1275
          %v1314 = vpack.c.b16 %v1278, %v1276
          %v1315 = vpack.c.b16 %v1281, %v1279
          %v1316 = vpack.c.b16 %v1282, %v1280
          %v1317 = vpack.c.b16 %v1285, %v1283
          %v1318 = vpack.c.b16 %v1286, %v1284
          %1351 = vmatprep.subr.bf16.mxu0 %v1288
          %1352 = vmatpush1.bf16.msra.mxu0 %v1287
          %1353 = vmatprep.subr.bf16.mxu0 %v1290
          %1354 = vmatpush1.bf16.msra.mxu0 %v1289
          %1355 = vmatprep.subr.bf16.mxu0 %v1292
          %1356 = vmatpush1.bf16.msra.mxu0 %v1291
          %1357 = vmatprep.subr.bf16.mxu0 %v1294
          %1358 = vmatpush1.bf16.msra.mxu0 %v1293
          %1359 = vmatprep.subr.bf16.mxu0 %v1296
          %1360 = vmatpush1.bf16.msra.mxu0 %v1295
          %1361 = vmatprep.subr.bf16.mxu0 %v1298
          %1362 = vmatpush1.bf16.msra.mxu0 %v1297
          %1363 = vmatprep.subr.bf16.mxu0 %v1300
          %1364 = vmatpush1.bf16.msra.mxu0 %v1299
          %1365 = vmatprep.subr.bf16.mxu0 %v1302
          %1366 = vmatpush1.bf16.msra.mxu0 %v1301
          %1367 = vmatprep.subr.bf16.mxu0 %v1304
          %1368 = vmatpush1.bf16.msra.mxu0 %v1303
          %1369 = vmatprep.subr.bf16.mxu0 %v1306
          %1370 = vmatpush1.bf16.msra.mxu0 %v1305
          %1371 = vmatprep.subr.bf16.mxu0 %v1308
          %1372 = vmatpush1.bf16.msra.mxu0 %v1307
          %1373 = vmatprep.subr.bf16.mxu0 %v1310
          %1374 = vmatpush1.bf16.msra.mxu0 %v1309
          %1375 = vmatprep.subr.bf16.mxu0 %v1312
          %1376 = vmatpush1.bf16.msra.mxu0 %v1311
          %1377 = vmatprep.subr.bf16.mxu0 %v1314
          %1378 = vmatpush1.bf16.msra.mxu0 %v1313
          %1379 = vmatprep.subr.bf16.mxu0 %v1316
          %1380 = vmatpush1.bf16.msra.mxu0 %v1315
          %1381 = vmatprep.subr.bf16.mxu0 %v1318
          %1382 = vmatpush1.bf16.msra.mxu0 %v1317
          %1383 = vmatprep.mubr.bf16.mxu0 %v1152
          %1384 = vmatmul.mubr.bf16.gmra.mrb[0].mxu0 %v1151
          %v1385 = vpop.f32.mrb[0].mxu0
          %v1386 = vadd.f32 0.0, %v1385
          %v1387 = vpop.f32.mrb[0].mxu0
          %v1388 = vadd.f32 0.0, %v1387
          %v1389 = vpop.f32.mrb[0].mxu0
          %v1390 = vadd.f32 0.0, %v1389
          %v1391 = vpop.f32.mrb[0].mxu0
          %v1392 = vadd.f32 0.0, %v1391
          %1393 = vmatprep.mubr.bf16.mxu0 %v1154
          %1394 = vmatmul.mubr.bf16.gmra.mrb[0].mxu0 %v1153
          %v1395 = vpop.f32.mrb[0].mxu0
          %v1396 = vadd.f32 0.0, %v1395
          %v1397 = vpop.f32.mrb[0].mxu0
          %v1398 = vadd.f32 0.0, %v1397
          %v1399 = vpop.f32.mrb[0].mxu0
          %v1400 = vadd.f32 0.0, %v1399
          %v1401 = vpop.f32.mrb[0].mxu0
          %v1402 = vadd.f32 0.0, %v1401
          %1403 = vmatprep.mubr.bf16.mxu0 %v1156
          %1404 = vmatmul.mubr.bf16.gmra.mrb[0].mxu0 %v1155
          %v1405 = vpop.f32.mrb[0].mxu0
          %v1406 = vadd.f32 0.0, %v1405
          %v1407 = vpop.f32.mrb[0].mxu0
          %v1408 = vadd.f32 0.0, %v1407
          %v1409 = vpop.f32.mrb[0].mxu0
          %v1410 = vadd.f32 0.0, %v1409
          %v1411 = vpop.f32.mrb[0].mxu0
          %v1412 = vadd.f32 0.0, %v1411
          %1413 = vmatprep.mubr.bf16.mxu0 %v1158
          %1414 = vmatmul.mubr.bf16.gmra.mrb[0].mxu0 %v1157
          %v1415 = vpop.f32.mrb[0].mxu0
          %v1416 = vadd.f32 0.0, %v1415
          %v1417 = vpop.f32.mrb[0].mxu0
          %v1418 = vadd.f32 0.0, %v1417
          %v1419 = vpop.f32.mrb[0].mxu0
          %v1420 = vadd.f32 0.0, %v1419
          %v1421 = vpop.f32.mrb[0].mxu0
          %v1422 = vadd.f32 0.0, %v1421
          %1423 = vdwg.mxu0
          %v1456 = vunpack.c.l.b16 %v1071
          %v1457 = vunpack.c.h.b16 %v1071
          %v1458 = vunpack.c.l.b16 %v1072
          %v1459 = vunpack.c.h.b16 %v1072
          %v1460 = vunpack.c.l.b16 %v1073
          %v1461 = vunpack.c.h.b16 %v1073
          %v1462 = vunpack.c.l.b16 %v1074
          %v1463 = vunpack.c.h.b16 %v1074
          %v1464 = vunpack.c.l.b16 %v1075
          %v1465 = vunpack.c.h.b16 %v1075
          %v1466 = vunpack.c.l.b16 %v1076
          %v1467 = vunpack.c.h.b16 %v1076
          %v1468 = vunpack.c.l.b16 %v1077
          %v1469 = vunpack.c.h.b16 %v1077
          %v1470 = vunpack.c.l.b16 %v1078
          %v1471 = vunpack.c.h.b16 %v1078
          %v1472 = vunpack.c.l.b16 %v1079
          %v1473 = vunpack.c.h.b16 %v1079
          %v1474 = vunpack.c.l.b16 %v1080
          %v1475 = vunpack.c.h.b16 %v1080
          %v1476 = vunpack.c.l.b16 %v1081
          %v1477 = vunpack.c.h.b16 %v1081
          %v1478 = vunpack.c.l.b16 %v1082
          %v1479 = vunpack.c.h.b16 %v1082
          %v1480 = vunpack.c.l.b16 %v1083
          %v1481 = vunpack.c.h.b16 %v1083
          %v1482 = vunpack.c.l.b16 %v1084
          %v1483 = vunpack.c.h.b16 %v1084
          %v1484 = vunpack.c.l.b16 %v1085
          %v1485 = vunpack.c.h.b16 %v1085
          %v1486 = vunpack.c.l.b16 %v1086
          %v1487 = vunpack.c.h.b16 %v1086
          %v1488 = vunpack.c.l.b16 %v1087
          %v1489 = vunpack.c.h.b16 %v1087
          %v1490 = vunpack.c.l.b16 %v1088
          %v1491 = vunpack.c.h.b16 %v1088
          %v1492 = vunpack.c.l.b16 %v1089
          %v1493 = vunpack.c.h.b16 %v1089
          %v1494 = vunpack.c.l.b16 %v1090
          %v1495 = vunpack.c.h.b16 %v1090
          %v1496 = vunpack.c.l.b16 %v1091
          %v1497 = vunpack.c.h.b16 %v1091
          %v1498 = vunpack.c.l.b16 %v1092
          %v1499 = vunpack.c.h.b16 %v1092
          %v1500 = vunpack.c.l.b16 %v1093
          %v1501 = vunpack.c.h.b16 %v1093
          %v1502 = vunpack.c.l.b16 %v1094
          %v1503 = vunpack.c.h.b16 %v1094
          %v1504 = vunpack.c.l.b16 %v1095
          %v1505 = vunpack.c.h.b16 %v1095
          %v1506 = vunpack.c.l.b16 %v1096
          %v1507 = vunpack.c.h.b16 %v1096
          %v1508 = vunpack.c.l.b16 %v1097
          %v1509 = vunpack.c.h.b16 %v1097
          %v1510 = vunpack.c.l.b16 %v1098
          %v1511 = vunpack.c.h.b16 %v1098
          %v1512 = vunpack.c.l.b16 %v1099
          %v1513 = vunpack.c.h.b16 %v1099
          %v1514 = vunpack.c.l.b16 %v1100
          %v1515 = vunpack.c.h.b16 %v1100
          %v1516 = vunpack.c.l.b16 %v1101
          %v1517 = vunpack.c.h.b16 %v1101
          %v1518 = vunpack.c.l.b16 %v1102
          %v1519 = vunpack.c.h.b16 %v1102
          %v1520 = vpack.c.b16 %v1458, %v1456
          %v1521 = vpack.c.b16 %v1459, %v1457
          %v1522 = vpack.c.b16 %v1462, %v1460
          %v1523 = vpack.c.b16 %v1463, %v1461
          %v1524 = vpack.c.b16 %v1466, %v1464
          %v1525 = vpack.c.b16 %v1467, %v1465
          %v1526 = vpack.c.b16 %v1470, %v1468
          %v1527 = vpack.c.b16 %v1471, %v1469
          %v1528 = vpack.c.b16 %v1474, %v1472
          %v1529 = vpack.c.b16 %v1475, %v1473
          %v1530 = vpack.c.b16 %v1478, %v1476
          %v1531 = vpack.c.b16 %v1479, %v1477
          %v1532 = vpack.c.b16 %v1482, %v1480
          %v1533 = vpack.c.b16 %v1483, %v1481
          %v1534 = vpack.c.b16 %v1486, %v1484
          %v1535 = vpack.c.b16 %v1487, %v1485
          %v1536 = vpack.c.b16 %v1490, %v1488
          %v1537 = vpack.c.b16 %v1491, %v1489
          %v1538 = vpack.c.b16 %v1494, %v1492
          %v1539 = vpack.c.b16 %v1495, %v1493
          %v1540 = vpack.c.b16 %v1498, %v1496
          %v1541 = vpack.c.b16 %v1499, %v1497
          %v1542 = vpack.c.b16 %v1502, %v1500
          %v1543 = vpack.c.b16 %v1503, %v1501
          %v1544 = vpack.c.b16 %v1506, %v1504
          %v1545 = vpack.c.b16 %v1507, %v1505
          %v1546 = vpack.c.b16 %v1510, %v1508
          %v1547 = vpack.c.b16 %v1511, %v1509
          %v1548 = vpack.c.b16 %v1514, %v1512
          %v1549 = vpack.c.b16 %v1515, %v1513
          %v1550 = vpack.c.b16 %v1518, %v1516
          %v1551 = vpack.c.b16 %v1519, %v1517
          %1584 = vmatprep.subr.bf16.mxu0 %v1521
          %1585 = vmatpush1.bf16.msra.mxu0 %v1520
          %1586 = vmatprep.subr.bf16.mxu0 %v1523
          %1587 = vmatpush1.bf16.msra.mxu0 %v1522
          %1588 = vmatprep.subr.bf16.mxu0 %v1525
          %1589 = vmatpush1.bf16.msra.mxu0 %v1524
          %1590 = vmatprep.subr.bf16.mxu0 %v1527
          %1591 = vmatpush1.bf16.msra.mxu0 %v1526
          %1592 = vmatprep.subr.bf16.mxu0 %v1529
          %1593 = vmatpush1.bf16.msra.mxu0 %v1528
          %1594 = vmatprep.subr.bf16.mxu0 %v1531
          %1595 = vmatpush1.bf16.msra.mxu0 %v1530
          %1596 = vmatprep.subr.bf16.mxu0 %v1533
          %1597 = vmatpush1.bf16.msra.mxu0 %v1532
          %1598 = vmatprep.subr.bf16.mxu0 %v1535
          %1599 = vmatpush1.bf16.msra.mxu0 %v1534
          %1600 = vmatprep.subr.bf16.mxu0 %v1537
          %1601 = vmatpush1.bf16.msra.mxu0 %v1536
          %1602 = vmatprep.subr.bf16.mxu0 %v1539
          %1603 = vmatpush1.bf16.msra.mxu0 %v1538
          %1604 = vmatprep.subr.bf16.mxu0 %v1541
          %1605 = vmatpush1.bf16.msra.mxu0 %v1540
          %1606 = vmatprep.subr.bf16.mxu0 %v1543
          %1607 = vmatpush1.bf16.msra.mxu0 %v1542
          %1608 = vmatprep.subr.bf16.mxu0 %v1545
          %1609 = vmatpush1.bf16.msra.mxu0 %v1544
          %1610 = vmatprep.subr.bf16.mxu0 %v1547
          %1611 = vmatpush1.bf16.msra.mxu0 %v1546
          %1612 = vmatprep.subr.bf16.mxu0 %v1549
          %1613 = vmatpush1.bf16.msra.mxu0 %v1548
          %1614 = vmatprep.subr.bf16.mxu0 %v1551
          %1615 = vmatpush1.bf16.msra.mxu0 %v1550
          %1616 = vmatprep.mubr.bf16.mxu0 %v1064
          %1617 = vmatmul.mubr.bf16.gmra.mrb[0].mxu0 %v1063
          %v1618 = vpop.f32.mrb[0].mxu0
          %v1619 = vadd.f32 %v1386, %v1618
          %v1620 = vpop.f32.mrb[0].mxu0
          %v1621 = vadd.f32 %v1388, %v1620
          %v1622 = vpop.f32.mrb[0].mxu0
          %v1623 = vadd.f32 %v1390, %v1622
          %v1624 = vpop.f32.mrb[0].mxu0
          %v1625 = vadd.f32 %v1392, %v1624
          %1626 = vmatprep.mubr.bf16.mxu0 %v1066
          %1627 = vmatmul.mubr.bf16.gmra.mrb[0].mxu0 %v1065
          %v1628 = vpop.f32.mrb[0].mxu0
          %v1629 = vadd.f32 %v1396, %v1628
          %v1630 = vpop.f32.mrb[0].mxu0
          %v1631 = vadd.f32 %v1398, %v1630
          %v1632 = vpop.f32.mrb[0].mxu0
          %v1633 = vadd.f32 %v1400, %v1632
          %v1634 = vpop.f32.mrb[0].mxu0
          %v1635 = vadd.f32 %v1402, %v1634
          %1636 = vmatprep.mubr.bf16.mxu0 %v1068
          %1637 = vmatmul.mubr.bf16.gmra.mrb[0].mxu0 %v1067
          %v1638 = vpop.f32.mrb[0].mxu0
          %v1639 = vadd.f32 %v1406, %v1638
          %v1640 = vpop.f32.mrb[0].mxu0
          %v1641 = vadd.f32 %v1408, %v1640
          %v1642 = vpop.f32.mrb[0].mxu0
          %v1643 = vadd.f32 %v1410, %v1642
          %v1644 = vpop.f32.mrb[0].mxu0
          %v1645 = vadd.f32 %v1412, %v1644
          %1646 = vmatprep.mubr.bf16.mxu0 %v1070
          %1647 = vmatmul.mubr.bf16.gmra.mrb[0].mxu0 %v1069
          %v1648 = vpop.f32.mrb[0].mxu0
          %v1649 = vadd.f32 %v1416, %v1648
          %v1650 = vpop.f32.mrb[0].mxu0
          %v1651 = vadd.f32 %v1418, %v1650
          %v1652 = vpop.f32.mrb[0].mxu0
          %v1653 = vadd.f32 %v1420, %v1652
          %v1654 = vpop.f32.mrb[0].mxu0
          %v1655 = vadd.f32 %v1422, %v1654
          %1656 = vdwg.mxu0
          %v1657 = vrot.slane %v940, 2
          %v1658 = vrot.slane %v941, 2
          %v1659 = vrot.slane %v942, 2
          %v1660 = vrot.slane %v943, 2
          %v1661 = vrot.slane %v944, 2
          %v1662 = vrot.slane %v945, 2
          %v1663 = vrot.slane %v946, 2
          %v1664 = vrot.slane %v947, 2
          %v1665 = vrot.slane %v948, 2
          %v1666 = vrot.slane %v949, 2
          %v1667 = vrot.slane %v950, 2
          %v1668 = vrot.slane %v951, 2
          %v1669 = vrot.slane %v952, 2
          %v1670 = vrot.slane %v953, 2
          %v1671 = vrot.slane %v954, 2
          %v1672 = vrot.slane %v955, 2
          %vm1673 = vcmp.lt.s32.totalorder %v989, 6
          %v1674 = vsel %vm1673, %v1669, %v1671
          %v1675 = vsel %vm1673, %v1670, %v1672
          %v1676 = vsel %vm1673, %v1667, %v1669
          %v1677 = vsel %vm1673, %v1668, %v1670
          %v1678 = vsel %vm1673, %v1665, %v1667
          %v1679 = vsel %vm1673, %v1666, %v1668
          %v1680 = vsel %vm1673, %v1663, %v1665
          %v1681 = vsel %vm1673, %v1664, %v1666
          %v1682 = vsel %vm1673, %v1661, %v1663
          %v1683 = vsel %vm1673, %v1662, %v1664
          %v1684 = vsel %vm1673, %v1659, %v1661
          %v1685 = vsel %vm1673, %v1660, %v1662
          %v1686 = vsel %vm1673, %v1657, %v1659
          %v1687 = vsel %vm1673, %v1658, %v1660
          %v1688 = vsel %vm1673, %v1671, %v1657
          %v1689 = vsel %vm1673, %v1672, %v1658
          %1690 = vset.pattern.permute.xlu0 2
          %1691 = vperm.xlu0 %1690, %v964
          %v1692 = vpop.permute.xlu0 %1691
          %1694 = vset.pattern.permute.xlu0 2
          %1695 = vperm.xlu0 %1694, %v965
          %v1696 = vpop.permute.xlu0 %1695
          %1698 = vset.pattern.permute.xlu0 2
          %1699 = vperm.xlu0 %1698, %v966
          %v1700 = vpop.permute.xlu0 %1699
          %1702 = vset.pattern.permute.xlu0 2
          %1703 = vperm.xlu0 %1702, %v967
          %v1704 = vpop.permute.xlu0 %1703
          %1706 = vset.pattern.permute.xlu0 2
          %1707 = vperm.xlu0 %1706, %v968
          %v1708 = vpop.permute.xlu0 %1707
          %1710 = vset.pattern.permute.xlu0 2
          %1711 = vperm.xlu0 %1710, %v969
          %v1712 = vpop.permute.xlu0 %1711
          %1714 = vset.pattern.permute.xlu0 2
          %1715 = vperm.xlu0 %1714, %v970
          %v1716 = vpop.permute.xlu0 %1715
          %1718 = vset.pattern.permute.xlu0 2
          %1719 = vperm.xlu0 %1718, %v971
          %v1720 = vpop.permute.xlu0 %1719
          %v1722 = vmul.f32 %v1674, %v1692
          %v1723 = vmul.f32 %v1675, %v1692
          %v1724 = vmul.f32 %v1688, %v1696
          %v1725 = vmul.f32 %v1689, %v1696
          %v1726 = vmul.f32 %v1686, %v1700
          %v1727 = vmul.f32 %v1687, %v1700
          %v1728 = vmul.f32 %v1684, %v1704
          %v1729 = vmul.f32 %v1685, %v1704
          %v1730 = vmul.f32 %v1682, %v1708
          %v1731 = vmul.f32 %v1683, %v1708
          %v1732 = vmul.f32 %v1680, %v1712
          %v1733 = vmul.f32 %v1681, %v1712
          %v1734 = vmul.f32 %v1678, %v1716
          %v1735 = vmul.f32 %v1679, %v1716
          %v1736 = vmul.f32 %v1676, %v1720
          %v1737 = vmul.f32 %v1677, %v1720
          %v1738 = vpack.c.bf16 %v1724, %v1722
          %v1739 = vpack.c.bf16 %v1725, %v1723
          %v1740 = vpack.c.bf16 %v1728, %v1726
          %v1741 = vpack.c.bf16 %v1729, %v1727
          %v1742 = vpack.c.bf16 %v1732, %v1730
          %v1743 = vpack.c.bf16 %v1733, %v1731
          %v1744 = vpack.c.bf16 %v1736, %v1734
          %v1745 = vpack.c.bf16 %v1737, %v1735
          %v1746 = vld [vmem:[%s4 + $0x200] sm:$0xff]
          %v1747 = vld [vmem:[%s4 + $0x208] sm:$0xff]
          %v1748 = vld [vmem:[%s4 + $0x210] sm:$0xff]
          %v1749 = vld [vmem:[%s4 + $0x218] sm:$0xff]
          %v1750 = vld [vmem:[%s4 + $0x220] sm:$0xff]
          %v1751 = vld [vmem:[%s4 + $0x228] sm:$0xff]
          %v1752 = vld [vmem:[%s4 + $0x230] sm:$0xff]
          %v1753 = vld [vmem:[%s4 + $0x238] sm:$0xff]
          %v1754 = vld [vmem:[%s4 + $0x240] sm:$0xff]
          %v1755 = vld [vmem:[%s4 + $0x248] sm:$0xff]
          %v1756 = vld [vmem:[%s4 + $0x250] sm:$0xff]
          %v1757 = vld [vmem:[%s4 + $0x258] sm:$0xff]
          %v1758 = vld [vmem:[%s4 + $0x260] sm:$0xff]
          %v1759 = vld [vmem:[%s4 + $0x268] sm:$0xff]
          %v1760 = vld [vmem:[%s4 + $0x270] sm:$0xff]
          %v1761 = vld [vmem:[%s4 + $0x278] sm:$0xff]
          %v1762 = vld [vmem:[%s4 + $0x280] sm:$0xff]
          %v1763 = vld [vmem:[%s4 + $0x288] sm:$0xff]
          %v1764 = vld [vmem:[%s4 + $0x290] sm:$0xff]
          %v1765 = vld [vmem:[%s4 + $0x298] sm:$0xff]
          %v1766 = vld [vmem:[%s4 + $0x2a0] sm:$0xff]
          %v1767 = vld [vmem:[%s4 + $0x2a8] sm:$0xff]
          %v1768 = vld [vmem:[%s4 + $0x2b0] sm:$0xff]
          %v1769 = vld [vmem:[%s4 + $0x2b8] sm:$0xff]
          %v1770 = vld [vmem:[%s4 + $0x2c0] sm:$0xff]
          %v1771 = vld [vmem:[%s4 + $0x2c8] sm:$0xff]
          %v1772 = vld [vmem:[%s4 + $0x2d0] sm:$0xff]
          %v1773 = vld [vmem:[%s4 + $0x2d8] sm:$0xff]
          %v1774 = vld [vmem:[%s4 + $0x2e0] sm:$0xff]
          %v1775 = vld [vmem:[%s4 + $0x2e8] sm:$0xff]
          %v1776 = vld [vmem:[%s4 + $0x2f0] sm:$0xff]
          %v1777 = vld [vmem:[%s4 + $0x2f8] sm:$0xff]
          %v1810 = vunpack.c.l.b16 %v1746
          %v1811 = vunpack.c.h.b16 %v1746
          %v1812 = vunpack.c.l.b16 %v1747
          %v1813 = vunpack.c.h.b16 %v1747
          %v1814 = vunpack.c.l.b16 %v1748
          %v1815 = vunpack.c.h.b16 %v1748
          %v1816 = vunpack.c.l.b16 %v1749
          %v1817 = vunpack.c.h.b16 %v1749
          %v1818 = vunpack.c.l.b16 %v1750
          %v1819 = vunpack.c.h.b16 %v1750
          %v1820 = vunpack.c.l.b16 %v1751
          %v1821 = vunpack.c.h.b16 %v1751
          %v1822 = vunpack.c.l.b16 %v1752
          %v1823 = vunpack.c.h.b16 %v1752
          %v1824 = vunpack.c.l.b16 %v1753
          %v1825 = vunpack.c.h.b16 %v1753
          %v1826 = vunpack.c.l.b16 %v1754
          %v1827 = vunpack.c.h.b16 %v1754
          %v1828 = vunpack.c.l.b16 %v1755
          %v1829 = vunpack.c.h.b16 %v1755
          %v1830 = vunpack.c.l.b16 %v1756
          %v1831 = vunpack.c.h.b16 %v1756
          %v1832 = vunpack.c.l.b16 %v1757
          %v1833 = vunpack.c.h.b16 %v1757
          %v1834 = vunpack.c.l.b16 %v1758
          %v1835 = vunpack.c.h.b16 %v1758
          %v1836 = vunpack.c.l.b16 %v1759
          %v1837 = vunpack.c.h.b16 %v1759
          %v1838 = vunpack.c.l.b16 %v1760
          %v1839 = vunpack.c.h.b16 %v1760
          %v1840 = vunpack.c.l.b16 %v1761
          %v1841 = vunpack.c.h.b16 %v1761
          %v1842 = vunpack.c.l.b16 %v1762
          %v1843 = vunpack.c.h.b16 %v1762
          %v1844 = vunpack.c.l.b16 %v1763
          %v1845 = vunpack.c.h.b16 %v1763
          %v1846 = vunpack.c.l.b16 %v1764
          %v1847 = vunpack.c.h.b16 %v1764
          %v1848 = vunpack.c.l.b16 %v1765
          %v1849 = vunpack.c.h.b16 %v1765
          %v1850 = vunpack.c.l.b16 %v1766
          %v1851 = vunpack.c.h.b16 %v1766
          %v1852 = vunpack.c.l.b16 %v1767
          %v1853 = vunpack.c.h.b16 %v1767
          %v1854 = vunpack.c.l.b16 %v1768
          %v1855 = vunpack.c.h.b16 %v1768
          %v1856 = vunpack.c.l.b16 %v1769
          %v1857 = vunpack.c.h.b16 %v1769
          %v1858 = vunpack.c.l.b16 %v1770
          %v1859 = vunpack.c.h.b16 %v1770
          %v1860 = vunpack.c.l.b16 %v1771
          %v1861 = vunpack.c.h.b16 %v1771
          %v1862 = vunpack.c.l.b16 %v1772
          %v1863 = vunpack.c.h.b16 %v1772
          %v1864 = vunpack.c.l.b16 %v1773
          %v1865 = vunpack.c.h.b16 %v1773
          %v1866 = vunpack.c.l.b16 %v1774
          %v1867 = vunpack.c.h.b16 %v1774
          %v1868 = vunpack.c.l.b16 %v1775
          %v1869 = vunpack.c.h.b16 %v1775
          %v1870 = vunpack.c.l.b16 %v1776
          %v1871 = vunpack.c.h.b16 %v1776
          %v1872 = vunpack.c.l.b16 %v1777
          %v1873 = vunpack.c.h.b16 %v1777
          %v1874 = vpack.c.b16 %v1812, %v1810
          %v1875 = vpack.c.b16 %v1813, %v1811
          %v1876 = vpack.c.b16 %v1816, %v1814
          %v1877 = vpack.c.b16 %v1817, %v1815
          %v1878 = vpack.c.b16 %v1820, %v1818
          %v1879 = vpack.c.b16 %v1821, %v1819
          %v1880 = vpack.c.b16 %v1824, %v1822
          %v1881 = vpack.c.b16 %v1825, %v1823
          %v1882 = vpack.c.b16 %v1828, %v1826
          %v1883 = vpack.c.b16 %v1829, %v1827
          %v1884 = vpack.c.b16 %v1832, %v1830
          %v1885 = vpack.c.b16 %v1833, %v1831
          %v1886 = vpack.c.b16 %v1836, %v1834
          %v1887 = vpack.c.b16 %v1837, %v1835
          %v1888 = vpack.c.b16 %v1840, %v1838
          %v1889 = vpack.c.b16 %v1841, %v1839
          %v1890 = vpack.c.b16 %v1844, %v1842
          %v1891 = vpack.c.b16 %v1845, %v1843
          %v1892 = vpack.c.b16 %v1848, %v1846
          %v1893 = vpack.c.b16 %v1849, %v1847
          %v1894 = vpack.c.b16 %v1852, %v1850
          %v1895 = vpack.c.b16 %v1853, %v1851
          %v1896 = vpack.c.b16 %v1856, %v1854
          %v1897 = vpack.c.b16 %v1857, %v1855
          %v1898 = vpack.c.b16 %v1860, %v1858
          %v1899 = vpack.c.b16 %v1861, %v1859
          %v1900 = vpack.c.b16 %v1864, %v1862
          %v1901 = vpack.c.b16 %v1865, %v1863
          %v1902 = vpack.c.b16 %v1868, %v1866
          %v1903 = vpack.c.b16 %v1869, %v1867
          %v1904 = vpack.c.b16 %v1872, %v1870
          %v1905 = vpack.c.b16 %v1873, %v1871
          %1938 = vmatprep.subr.bf16.mxu0 %v1875
          %1939 = vmatpush1.bf16.msra.mxu0 %v1874
          %1940 = vmatprep.subr.bf16.mxu0 %v1877
          %1941 = vmatpush1.bf16.msra.mxu0 %v1876
          %1942 = vmatprep.subr.bf16.mxu0 %v1879
          %1943 = vmatpush1.bf16.msra.mxu0 %v1878
          %1944 = vmatprep.subr.bf16.mxu0 %v1881
          %1945 = vmatpush1.bf16.msra.mxu0 %v1880
          %1946 = vmatprep.subr.bf16.mxu0 %v1883
          %1947 = vmatpush1.bf16.msra.mxu0 %v1882
          %1948 = vmatprep.subr.bf16.mxu0 %v1885
          %1949 = vmatpush1.bf16.msra.mxu0 %v1884
          %1950 = vmatprep.subr.bf16.mxu0 %v1887
          %1951 = vmatpush1.bf16.msra.mxu0 %v1886
          %1952 = vmatprep.subr.bf16.mxu0 %v1889
          %1953 = vmatpush1.bf16.msra.mxu0 %v1888
          %1954 = vmatprep.subr.bf16.mxu0 %v1891
          %1955 = vmatpush1.bf16.msra.mxu0 %v1890
          %1956 = vmatprep.subr.bf16.mxu0 %v1893
          %1957 = vmatpush1.bf16.msra.mxu0 %v1892
          %1958 = vmatprep.subr.bf16.mxu0 %v1895
          %1959 = vmatpush1.bf16.msra.mxu0 %v1894
          %1960 = vmatprep.subr.bf16.mxu0 %v1897
          %1961 = vmatpush1.bf16.msra.mxu0 %v1896
          %1962 = vmatprep.subr.bf16.mxu0 %v1899
          %1963 = vmatpush1.bf16.msra.mxu0 %v1898
          %1964 = vmatprep.subr.bf16.mxu0 %v1901
          %1965 = vmatpush1.bf16.msra.mxu0 %v1900
          %1966 = vmatprep.subr.bf16.mxu0 %v1903
          %1967 = vmatpush1.bf16.msra.mxu0 %v1902
          %1968 = vmatprep.subr.bf16.mxu0 %v1905
          %1969 = vmatpush1.bf16.msra.mxu0 %v1904
          %1970 = vmatprep.mubr.bf16.mxu0 %v1739
          %1971 = vmatmul.mubr.bf16.gmra.mrb[0].mxu0 %v1738
          %v1972 = vpop.f32.mrb[0].mxu0
          %v1973 = vadd.f32 0.0, %v1972
          %v1974 = vpop.f32.mrb[0].mxu0
          %v1975 = vadd.f32 0.0, %v1974
          %v1976 = vpop.f32.mrb[0].mxu0
          %v1977 = vadd.f32 0.0, %v1976
          %v1978 = vpop.f32.mrb[0].mxu0
          %v1979 = vadd.f32 0.0, %v1978
          %1980 = vmatprep.mubr.bf16.mxu0 %v1741
          %1981 = vmatmul.mubr.bf16.gmra.mrb[0].mxu0 %v1740
          %v1982 = vpop.f32.mrb[0].mxu0
          %v1983 = vadd.f32 0.0, %v1982
          %v1984 = vpop.f32.mrb[0].mxu0
          %v1985 = vadd.f32 0.0, %v1984
          %v1986 = vpop.f32.mrb[0].mxu0
          %v1987 = vadd.f32 0.0, %v1986
          %v1988 = vpop.f32.mrb[0].mxu0
          %v1989 = vadd.f32 0.0, %v1988
          %1990 = vmatprep.mubr.bf16.mxu0 %v1743
          %1991 = vmatmul.mubr.bf16.gmra.mrb[0].mxu0 %v1742
          %v1992 = vpop.f32.mrb[0].mxu0
          %v1993 = vadd.f32 0.0, %v1992
          %v1994 = vpop.f32.mrb[0].mxu0
          %v1995 = vadd.f32 0.0, %v1994
          %v1996 = vpop.f32.mrb[0].mxu0
          %v1997 = vadd.f32 0.0, %v1996
          %v1998 = vpop.f32.mrb[0].mxu0
          %v1999 = vadd.f32 0.0, %v1998
          %2000 = vmatprep.mubr.bf16.mxu0 %v1745
          %2001 = vmatmul.mubr.bf16.gmra.mrb[0].mxu0 %v1744
          %v2002 = vpop.f32.mrb[0].mxu0
          %v2003 = vadd.f32 0.0, %v2002
          %v2004 = vpop.f32.mrb[0].mxu0
          %v2005 = vadd.f32 0.0, %v2004
          %v2006 = vpop.f32.mrb[0].mxu0
          %v2007 = vadd.f32 0.0, %v2006
          %v2008 = vpop.f32.mrb[0].mxu0
          %v2009 = vadd.f32 0.0, %v2008
          %2010 = vdwg.mxu0
          %v2011 = vadd.f32 %v1619, %v1973
          %v2012 = vadd.f32 %v1621, %v1975
          %v2013 = vadd.f32 %v1623, %v1977
          %v2014 = vadd.f32 %v1625, %v1979
          %v2015 = vadd.f32 %v1629, %v1983
          %v2016 = vadd.f32 %v1631, %v1985
          %v2017 = vadd.f32 %v1633, %v1987
          %v2018 = vadd.f32 %v1635, %v1989
          %v2019 = vadd.f32 %v1639, %v1993
          %v2020 = vadd.f32 %v1641, %v1995
          %v2021 = vadd.f32 %v1643, %v1997
          %v2022 = vadd.f32 %v1645, %v1999
          %v2023 = vadd.f32 %v1649, %v2003
          %v2024 = vadd.f32 %v1651, %v2005
          %v2025 = vadd.f32 %v1653, %v2007
          %v2026 = vadd.f32 %v1655, %v2009
          %2027 = vset.pattern.permute.xlu0 3
          %2028 = vperm.xlu0 %2027, %v964
          %v2029 = vpop.permute.xlu0 %2028
          %2031 = vset.pattern.permute.xlu0 3
          %2032 = vperm.xlu0 %2031, %v965
          %v2033 = vpop.permute.xlu0 %2032
          %2035 = vset.pattern.permute.xlu0 3
          %2036 = vperm.xlu0 %2035, %v966
          %v2037 = vpop.permute.xlu0 %2036
          %2039 = vset.pattern.permute.xlu0 3
          %2040 = vperm.xlu0 %2039, %v967
          %v2041 = vpop.permute.xlu0 %2040
          %2043 = vset.pattern.permute.xlu0 3
          %2044 = vperm.xlu0 %2043, %v968
          %v2045 = vpop.permute.xlu0 %2044
          %2047 = vset.pattern.permute.xlu0 3
          %2048 = vperm.xlu0 %2047, %v969
          %v2049 = vpop.permute.xlu0 %2048
          %2051 = vset.pattern.permute.xlu0 3
          %2052 = vperm.xlu0 %2051, %v970
          %v2053 = vpop.permute.xlu0 %2052
          %2055 = vset.pattern.permute.xlu0 3
          %2056 = vperm.xlu0 %2055, %v971
          %v2057 = vpop.permute.xlu0 %2056
          %v2059 = vmul.f32 %v1005, %v2029
          %v2060 = vmul.f32 %v1006, %v2029
          %v2061 = vmul.f32 %v1003, %v2033
          %v2062 = vmul.f32 %v1004, %v2033
          %v2063 = vmul.f32 %v1001, %v2037
          %v2064 = vmul.f32 %v1002, %v2037
          %v2065 = vmul.f32 %v999, %v2041
          %v2066 = vmul.f32 %v1000, %v2041
          %v2067 = vmul.f32 %v997, %v2045
          %v2068 = vmul.f32 %v998, %v2045
          %v2069 = vmul.f32 %v995, %v2049
          %v2070 = vmul.f32 %v996, %v2049
          %v2071 = vmul.f32 %v993, %v2053
          %v2072 = vmul.f32 %v994, %v2053
          %v2073 = vmul.f32 %v991, %v2057
          %v2074 = vmul.f32 %v992, %v2057
          %v2075 = vpack.c.bf16 %v2061, %v2059
          %v2076 = vpack.c.bf16 %v2062, %v2060
          %v2077 = vpack.c.bf16 %v2065, %v2063
          %v2078 = vpack.c.bf16 %v2066, %v2064
          %v2079 = vpack.c.bf16 %v2069, %v2067
          %v2080 = vpack.c.bf16 %v2070, %v2068
          %v2081 = vpack.c.bf16 %v2073, %v2071
          %v2082 = vpack.c.bf16 %v2074, %v2072
          %v2083 = vld [vmem:[%s4 + $0x300] sm:$0xff]
          %v2084 = vld [vmem:[%s4 + $0x308] sm:$0xff]
          %v2085 = vld [vmem:[%s4 + $0x310] sm:$0xff]
          %v2086 = vld [vmem:[%s4 + $0x318] sm:$0xff]
          %v2087 = vld [vmem:[%s4 + $0x320] sm:$0xff]
          %v2088 = vld [vmem:[%s4 + $0x328] sm:$0xff]
          %v2089 = vld [vmem:[%s4 + $0x330] sm:$0xff]
          %v2090 = vld [vmem:[%s4 + $0x338] sm:$0xff]
          %v2091 = vld [vmem:[%s4 + $0x340] sm:$0xff]
          %v2092 = vld [vmem:[%s4 + $0x348] sm:$0xff]
          %v2093 = vld [vmem:[%s4 + $0x350] sm:$0xff]
          %v2094 = vld [vmem:[%s4 + $0x358] sm:$0xff]
          %v2095 = vld [vmem:[%s4 + $0x360] sm:$0xff]
          %v2096 = vld [vmem:[%s4 + $0x368] sm:$0xff]
          %v2097 = vld [vmem:[%s4 + $0x370] sm:$0xff]
          %v2098 = vld [vmem:[%s4 + $0x378] sm:$0xff]
          %v2099 = vld [vmem:[%s4 + $0x380] sm:$0xff]
          %v2100 = vld [vmem:[%s4 + $0x388] sm:$0xff]
          %v2101 = vld [vmem:[%s4 + $0x390] sm:$0xff]
          %v2102 = vld [vmem:[%s4 + $0x398] sm:$0xff]
          %v2103 = vld [vmem:[%s4 + $0x3a0] sm:$0xff]
          %v2104 = vld [vmem:[%s4 + $0x3a8] sm:$0xff]
          %v2105 = vld [vmem:[%s4 + $0x3b0] sm:$0xff]
          %v2106 = vld [vmem:[%s4 + $0x3b8] sm:$0xff]
          %v2107 = vld [vmem:[%s4 + $0x3c0] sm:$0xff]
          %v2108 = vld [vmem:[%s4 + $0x3c8] sm:$0xff]
          %v2109 = vld [vmem:[%s4 + $0x3d0] sm:$0xff]
          %v2110 = vld [vmem:[%s4 + $0x3d8] sm:$0xff]
          %v2111 = vld [vmem:[%s4 + $0x3e0] sm:$0xff]
          %v2112 = vld [vmem:[%s4 + $0x3e8] sm:$0xff]
          %v2113 = vld [vmem:[%s4 + $0x3f0] sm:$0xff]
          %v2114 = vld [vmem:[%s4 + $0x3f8] sm:$0xff]
          %v2147 = vunpack.c.l.b16 %v2083
          %v2148 = vunpack.c.h.b16 %v2083
          %v2149 = vunpack.c.l.b16 %v2084
          %v2150 = vunpack.c.h.b16 %v2084
          %v2151 = vunpack.c.l.b16 %v2085
          %v2152 = vunpack.c.h.b16 %v2085
          %v2153 = vunpack.c.l.b16 %v2086
          %v2154 = vunpack.c.h.b16 %v2086
          %v2155 = vunpack.c.l.b16 %v2087
          %v2156 = vunpack.c.h.b16 %v2087
          %v2157 = vunpack.c.l.b16 %v2088
          %v2158 = vunpack.c.h.b16 %v2088
          %v2159 = vunpack.c.l.b16 %v2089
          %v2160 = vunpack.c.h.b16 %v2089
          %v2161 = vunpack.c.l.b16 %v2090
          %v2162 = vunpack.c.h.b16 %v2090
          %v2163 = vunpack.c.l.b16 %v2091
          %v2164 = vunpack.c.h.b16 %v2091
          %v2165 = vunpack.c.l.b16 %v2092
          %v2166 = vunpack.c.h.b16 %v2092
          %v2167 = vunpack.c.l.b16 %v2093
          %v2168 = vunpack.c.h.b16 %v2093
          %v2169 = vunpack.c.l.b16 %v2094
          %v2170 = vunpack.c.h.b16 %v2094
          %v2171 = vunpack.c.l.b16 %v2095
          %v2172 = vunpack.c.h.b16 %v2095
          %v2173 = vunpack.c.l.b16 %v2096
          %v2174 = vunpack.c.h.b16 %v2096
          %v2175 = vunpack.c.l.b16 %v2097
          %v2176 = vunpack.c.h.b16 %v2097
          %v2177 = vunpack.c.l.b16 %v2098
          %v2178 = vunpack.c.h.b16 %v2098
          %v2179 = vunpack.c.l.b16 %v2099
          %v2180 = vunpack.c.h.b16 %v2099
          %v2181 = vunpack.c.l.b16 %v2100
          %v2182 = vunpack.c.h.b16 %v2100
          %v2183 = vunpack.c.l.b16 %v2101
          %v2184 = vunpack.c.h.b16 %v2101
          %v2185 = vunpack.c.l.b16 %v2102
          %v2186 = vunpack.c.h.b16 %v2102
          %v2187 = vunpack.c.l.b16 %v2103
          %v2188 = vunpack.c.h.b16 %v2103
          %v2189 = vunpack.c.l.b16 %v2104
          %v2190 = vunpack.c.h.b16 %v2104
          %v2191 = vunpack.c.l.b16 %v2105
          %v2192 = vunpack.c.h.b16 %v2105
          %v2193 = vunpack.c.l.b16 %v2106
          %v2194 = vunpack.c.h.b16 %v2106
          %v2195 = vunpack.c.l.b16 %v2107
          %v2196 = vunpack.c.h.b16 %v2107
          %v2197 = vunpack.c.l.b16 %v2108
          %v2198 = vunpack.c.h.b16 %v2108
          %v2199 = vunpack.c.l.b16 %v2109
          %v2200 = vunpack.c.h.b16 %v2109
          %v2201 = vunpack.c.l.b16 %v2110
          %v2202 = vunpack.c.h.b16 %v2110
          %v2203 = vunpack.c.l.b16 %v2111
          %v2204 = vunpack.c.h.b16 %v2111
          %v2205 = vunpack.c.l.b16 %v2112
          %v2206 = vunpack.c.h.b16 %v2112
          %v2207 = vunpack.c.l.b16 %v2113
          %v2208 = vunpack.c.h.b16 %v2113
          %v2209 = vunpack.c.l.b16 %v2114
          %v2210 = vunpack.c.h.b16 %v2114
          %v2211 = vpack.c.b16 %v2149, %v2147
          %v2212 = vpack.c.b16 %v2150, %v2148
          %v2213 = vpack.c.b16 %v2153, %v2151
          %v2214 = vpack.c.b16 %v2154, %v2152
          %v2215 = vpack.c.b16 %v2157, %v2155
          %v2216 = vpack.c.b16 %v2158, %v2156
          %v2217 = vpack.c.b16 %v2161, %v2159
          %v2218 = vpack.c.b16 %v2162, %v2160
          %v2219 = vpack.c.b16 %v2165, %v2163
          %v2220 = vpack.c.b16 %v2166, %v2164
          %v2221 = vpack.c.b16 %v2169, %v2167
          %v2222 = vpack.c.b16 %v2170, %v2168
          %v2223 = vpack.c.b16 %v2173, %v2171
          %v2224 = vpack.c.b16 %v2174, %v2172
          %v2225 = vpack.c.b16 %v2177, %v2175
          %v2226 = vpack.c.b16 %v2178, %v2176
          %v2227 = vpack.c.b16 %v2181, %v2179
          %v2228 = vpack.c.b16 %v2182, %v2180
          %v2229 = vpack.c.b16 %v2185, %v2183
          %v2230 = vpack.c.b16 %v2186, %v2184
          %v2231 = vpack.c.b16 %v2189, %v2187
          %v2232 = vpack.c.b16 %v2190, %v2188
          %v2233 = vpack.c.b16 %v2193, %v2191
          %v2234 = vpack.c.b16 %v2194, %v2192
          %v2235 = vpack.c.b16 %v2197, %v2195
          %v2236 = vpack.c.b16 %v2198, %v2196
          %v2237 = vpack.c.b16 %v2201, %v2199
          %v2238 = vpack.c.b16 %v2202, %v2200
          %v2239 = vpack.c.b16 %v2205, %v2203
          %v2240 = vpack.c.b16 %v2206, %v2204
          %v2241 = vpack.c.b16 %v2209, %v2207
          %v2242 = vpack.c.b16 %v2210, %v2208
          %2275 = vmatprep.subr.bf16.mxu0 %v2212
          %2276 = vmatpush1.bf16.msra.mxu0 %v2211
          %2277 = vmatprep.subr.bf16.mxu0 %v2214
          %2278 = vmatpush1.bf16.msra.mxu0 %v2213
          %2279 = vmatprep.subr.bf16.mxu0 %v2216
          %2280 = vmatpush1.bf16.msra.mxu0 %v2215
          %2281 = vmatprep.subr.bf16.mxu0 %v2218
          %2282 = vmatpush1.bf16.msra.mxu0 %v2217
          %2283 = vmatprep.subr.bf16.mxu0 %v2220
          %2284 = vmatpush1.bf16.msra.mxu0 %v2219
          %2285 = vmatprep.subr.bf16.mxu0 %v2222
          %2286 = vmatpush1.bf16.msra.mxu0 %v2221
          %2287 = vmatprep.subr.bf16.mxu0 %v2224
          %2288 = vmatpush1.bf16.msra.mxu0 %v2223
          %2289 = vmatprep.subr.bf16.mxu0 %v2226
          %2290 = vmatpush1.bf16.msra.mxu0 %v2225
          %2291 = vmatprep.subr.bf16.mxu0 %v2228
          %2292 = vmatpush1.bf16.msra.mxu0 %v2227
          %2293 = vmatprep.subr.bf16.mxu0 %v2230
          %2294 = vmatpush1.bf16.msra.mxu0 %v2229
          %2295 = vmatprep.subr.bf16.mxu0 %v2232
          %2296 = vmatpush1.bf16.msra.mxu0 %v2231
          %2297 = vmatprep.subr.bf16.mxu0 %v2234
          %2298 = vmatpush1.bf16.msra.mxu0 %v2233
          %2299 = vmatprep.subr.bf16.mxu0 %v2236
          %2300 = vmatpush1.bf16.msra.mxu0 %v2235
          %2301 = vmatprep.subr.bf16.mxu0 %v2238
          %2302 = vmatpush1.bf16.msra.mxu0 %v2237
          %2303 = vmatprep.subr.bf16.mxu0 %v2240
          %2304 = vmatpush1.bf16.msra.mxu0 %v2239
          %2305 = vmatprep.subr.bf16.mxu0 %v2242
          %2306 = vmatpush1.bf16.msra.mxu0 %v2241
          %2307 = vmatprep.mubr.bf16.mxu0 %v2076
          %2308 = vmatmul.mubr.bf16.gmra.mrb[0].mxu0 %v2075
          %v2309 = vpop.f32.mrb[0].mxu0
          %v2310 = vadd.f32 0.0, %v2309
          %v2311 = vpop.f32.mrb[0].mxu0
          %v2312 = vadd.f32 0.0, %v2311
          %v2313 = vpop.f32.mrb[0].mxu0
          %v2314 = vadd.f32 0.0, %v2313
          %v2315 = vpop.f32.mrb[0].mxu0
          %v2316 = vadd.f32 0.0, %v2315
          %2317 = vmatprep.mubr.bf16.mxu0 %v2078
          %2318 = vmatmul.mubr.bf16.gmra.mrb[0].mxu0 %v2077
          %v2319 = vpop.f32.mrb[0].mxu0
          %v2320 = vadd.f32 0.0, %v2319
          %v2321 = vpop.f32.mrb[0].mxu0
          %v2322 = vadd.f32 0.0, %v2321
          %v2323 = vpop.f32.mrb[0].mxu0
          %v2324 = vadd.f32 0.0, %v2323
          %v2325 = vpop.f32.mrb[0].mxu0
          %v2326 = vadd.f32 0.0, %v2325
          %2327 = vmatprep.mubr.bf16.mxu0 %v2080
          %2328 = vmatmul.mubr.bf16.gmra.mrb[0].mxu0 %v2079
          %v2329 = vpop.f32.mrb[0].mxu0
          %v2330 = vadd.f32 0.0, %v2329
          %v2331 = vpop.f32.mrb[0].mxu0
          %v2332 = vadd.f32 0.0, %v2331
          %v2333 = vpop.f32.mrb[0].mxu0
          %v2334 = vadd.f32 0.0, %v2333
          %v2335 = vpop.f32.mrb[0].mxu0
          %v2336 = vadd.f32 0.0, %v2335
          %2337 = vmatprep.mubr.bf16.mxu0 %v2082
          %2338 = vmatmul.mubr.bf16.gmra.mrb[0].mxu0 %v2081
          %v2339 = vpop.f32.mrb[0].mxu0
          %v2340 = vadd.f32 0.0, %v2339
          %v2341 = vpop.f32.mrb[0].mxu0
          %v2342 = vadd.f32 0.0, %v2341
          %v2343 = vpop.f32.mrb[0].mxu0
          %v2344 = vadd.f32 0.0, %v2343
          %v2345 = vpop.f32.mrb[0].mxu0
          %v2346 = vadd.f32 0.0, %v2345
          %2347 = vdwg.mxu0
          %v2348 = vadd.f32 %v2011, %v2310
          %v2349 = vadd.f32 %v2012, %v2312
          %v2350 = vadd.f32 %v2013, %v2314
          %v2351 = vadd.f32 %v2014, %v2316
          %v2352 = vadd.f32 %v2015, %v2320
          %v2353 = vadd.f32 %v2016, %v2322
          %v2354 = vadd.f32 %v2017, %v2324
          %v2355 = vadd.f32 %v2018, %v2326
          %v2356 = vadd.f32 %v2019, %v2330
          %v2357 = vadd.f32 %v2020, %v2332
          %v2358 = vadd.f32 %v2021, %v2334
          %v2359 = vadd.f32 %v2022, %v2336
          %v2360 = vadd.f32 %v2023, %v2340
          %v2361 = vadd.f32 %v2024, %v2342
          %v2362 = vadd.f32 %v2025, %v2344
          %v2363 = vadd.f32 %v2026, %v2346
          %v2364 = vld [vmem:[%s4 + $0x400] sm:$0xff]
          %v2365 = vld [vmem:[%s4 + $0x408] sm:$0xff]
          %v2366 = vld [vmem:[%s4 + $0x410] sm:$0xff]
          %v2367 = vld [vmem:[%s4 + $0x418] sm:$0xff]
          %v2368 = vld [vmem:[%s4 + $0x420] sm:$0xff]
          %v2369 = vld [vmem:[%s4 + $0x428] sm:$0xff]
          %v2370 = vld [vmem:[%s4 + $0x430] sm:$0xff]
          %v2371 = vld [vmem:[%s4 + $0x438] sm:$0xff]
          %v2372 = vld [vmem:[%s4 + $0x440] sm:$0xff]
          %v2373 = vld [vmem:[%s4 + $0x448] sm:$0xff]
          %v2374 = vld [vmem:[%s4 + $0x450] sm:$0xff]
          %v2375 = vld [vmem:[%s4 + $0x458] sm:$0xff]
          %v2376 = vld [vmem:[%s4 + $0x460] sm:$0xff]
          %v2377 = vld [vmem:[%s4 + $0x468] sm:$0xff]
          %v2378 = vld [vmem:[%s4 + $0x470] sm:$0xff]
          %v2379 = vld [vmem:[%s4 + $0x478] sm:$0xff]
          %v2380 = vld [vmem:[%s4 + $0x480] sm:$0xff]
          %v2381 = vld [vmem:[%s4 + $0x488] sm:$0xff]
          %v2382 = vld [vmem:[%s4 + $0x490] sm:$0xff]
          %v2383 = vld [vmem:[%s4 + $0x498] sm:$0xff]
          %v2384 = vld [vmem:[%s4 + $0x4a0] sm:$0xff]
          %v2385 = vld [vmem:[%s4 + $0x4a8] sm:$0xff]
          %v2386 = vld [vmem:[%s4 + $0x4b0] sm:$0xff]
          %v2387 = vld [vmem:[%s4 + $0x4b8] sm:$0xff]
          %v2388 = vld [vmem:[%s4 + $0x4c0] sm:$0xff]
          %v2389 = vld [vmem:[%s4 + $0x4c8] sm:$0xff]
          %v2390 = vld [vmem:[%s4 + $0x4d0] sm:$0xff]
          %v2391 = vld [vmem:[%s4 + $0x4d8] sm:$0xff]
          %v2392 = vld [vmem:[%s4 + $0x4e0] sm:$0xff]
          %v2393 = vld [vmem:[%s4 + $0x4e8] sm:$0xff]
          %v2394 = vld [vmem:[%s4 + $0x4f0] sm:$0xff]
          %v2395 = vld [vmem:[%s4 + $0x4f8] sm:$0xff]
          %v2428 = vunpack.c.l.b16 %v2364
          %v2429 = vunpack.c.h.b16 %v2364
          %v2430 = vunpack.c.l.b16 %v2365
          %v2431 = vunpack.c.h.b16 %v2365
          %v2432 = vunpack.c.l.b16 %v2366
          %v2433 = vunpack.c.h.b16 %v2366
          %v2434 = vunpack.c.l.b16 %v2367
          %v2435 = vunpack.c.h.b16 %v2367
          %v2436 = vunpack.c.l.b16 %v2368
          %v2437 = vunpack.c.h.b16 %v2368
          %v2438 = vunpack.c.l.b16 %v2369
          %v2439 = vunpack.c.h.b16 %v2369
          %v2440 = vunpack.c.l.b16 %v2370
          %v2441 = vunpack.c.h.b16 %v2370
          %v2442 = vunpack.c.l.b16 %v2371
          %v2443 = vunpack.c.h.b16 %v2371
          %v2444 = vunpack.c.l.b16 %v2372
          %v2445 = vunpack.c.h.b16 %v2372
          %v2446 = vunpack.c.l.b16 %v2373
          %v2447 = vunpack.c.h.b16 %v2373
          %v2448 = vunpack.c.l.b16 %v2374
          %v2449 = vunpack.c.h.b16 %v2374
          %v2450 = vunpack.c.l.b16 %v2375
          %v2451 = vunpack.c.h.b16 %v2375
          %v2452 = vunpack.c.l.b16 %v2376
          %v2453 = vunpack.c.h.b16 %v2376
          %v2454 = vunpack.c.l.b16 %v2377
          %v2455 = vunpack.c.h.b16 %v2377
          %v2456 = vunpack.c.l.b16 %v2378
          %v2457 = vunpack.c.h.b16 %v2378
          %v2458 = vunpack.c.l.b16 %v2379
          %v2459 = vunpack.c.h.b16 %v2379
          %v2460 = vunpack.c.l.b16 %v2380
          %v2461 = vunpack.c.h.b16 %v2380
          %v2462 = vunpack.c.l.b16 %v2381
          %v2463 = vunpack.c.h.b16 %v2381
          %v2464 = vunpack.c.l.b16 %v2382
          %v2465 = vunpack.c.h.b16 %v2382
          %v2466 = vunpack.c.l.b16 %v2383
          %v2467 = vunpack.c.h.b16 %v2383
          %v2468 = vunpack.c.l.b16 %v2384
          %v2469 = vunpack.c.h.b16 %v2384
          %v2470 = vunpack.c.l.b16 %v2385
          %v2471 = vunpack.c.h.b16 %v2385
          %v2472 = vunpack.c.l.b16 %v2386
          %v2473 = vunpack.c.h.b16 %v2386
          %v2474 = vunpack.c.l.b16 %v2387
          %v2475 = vunpack.c.h.b16 %v2387
          %v2476 = vunpack.c.l.b16 %v2388
          %v2477 = vunpack.c.h.b16 %v2388
          %v2478 = vunpack.c.l.b16 %v2389
          %v2479 = vunpack.c.h.b16 %v2389
          %v2480 = vunpack.c.l.b16 %v2390
          %v2481 = vunpack.c.h.b16 %v2390
          %v2482 = vunpack.c.l.b16 %v2391
          %v2483 = vunpack.c.h.b16 %v2391
          %v2484 = vunpack.c.l.b16 %v2392
          %v2485 = vunpack.c.h.b16 %v2392
          %v2486 = vunpack.c.l.b16 %v2393
          %v2487 = vunpack.c.h.b16 %v2393
          %v2488 = vunpack.c.l.b16 %v2394
          %v2489 = vunpack.c.h.b16 %v2394
          %v2490 = vunpack.c.l.b16 %v2395
          %v2491 = vunpack.c.h.b16 %v2395
          %v2492 = vpack.c.b16 %v2430, %v2428
          %v2493 = vpack.c.b16 %v2431, %v2429
          %v2494 = vpack.c.b16 %v2434, %v2432
          %v2495 = vpack.c.b16 %v2435, %v2433
          %v2496 = vpack.c.b16 %v2438, %v2436
          %v2497 = vpack.c.b16 %v2439, %v2437
          %v2498 = vpack.c.b16 %v2442, %v2440
          %v2499 = vpack.c.b16 %v2443, %v2441
          %v2500 = vpack.c.b16 %v2446, %v2444
          %v2501 = vpack.c.b16 %v2447, %v2445
          %v2502 = vpack.c.b16 %v2450, %v2448
          %v2503 = vpack.c.b16 %v2451, %v2449
          %v2504 = vpack.c.b16 %v2454, %v2452
          %v2505 = vpack.c.b16 %v2455, %v2453
          %v2506 = vpack.c.b16 %v2458, %v2456
          %v2507 = vpack.c.b16 %v2459, %v2457
          %v2508 = vpack.c.b16 %v2462, %v2460
          %v2509 = vpack.c.b16 %v2463, %v2461
          %v2510 = vpack.c.b16 %v2466, %v2464
          %v2511 = vpack.c.b16 %v2467, %v2465
          %v2512 = vpack.c.b16 %v2470, %v2468
          %v2513 = vpack.c.b16 %v2471, %v2469
          %v2514 = vpack.c.b16 %v2474, %v2472
          %v2515 = vpack.c.b16 %v2475, %v2473
          %v2516 = vpack.c.b16 %v2478, %v2476
          %v2517 = vpack.c.b16 %v2479, %v2477
          %v2518 = vpack.c.b16 %v2482, %v2480
          %v2519 = vpack.c.b16 %v2483, %v2481
          %v2520 = vpack.c.b16 %v2486, %v2484
          %v2521 = vpack.c.b16 %v2487, %v2485
          %v2522 = vpack.c.b16 %v2490, %v2488
          %v2523 = vpack.c.b16 %v2491, %v2489
          %2556 = vmatprep.subr.bf16.mxu0 %v2493
          %2557 = vmatpush1.bf16.msra.mxu0 %v2492
          %2558 = vmatprep.subr.bf16.mxu0 %v2495
          %2559 = vmatpush1.bf16.msra.mxu0 %v2494
          %2560 = vmatprep.subr.bf16.mxu0 %v2497
          %2561 = vmatpush1.bf16.msra.mxu0 %v2496
          %2562 = vmatprep.subr.bf16.mxu0 %v2499
          %2563 = vmatpush1.bf16.msra.mxu0 %v2498
          %2564 = vmatprep.subr.bf16.mxu0 %v2501
          %2565 = vmatpush1.bf16.msra.mxu0 %v2500
          %2566 = vmatprep.subr.bf16.mxu0 %v2503
          %2567 = vmatpush1.bf16.msra.mxu0 %v2502
          %2568 = vmatprep.subr.bf16.mxu0 %v2505
          %2569 = vmatpush1.bf16.msra.mxu0 %v2504
          %2570 = vmatprep.subr.bf16.mxu0 %v2507
          %2571 = vmatpush1.bf16.msra.mxu0 %v2506
          %2572 = vmatprep.subr.bf16.mxu0 %v2509
          %2573 = vmatpush1.bf16.msra.mxu0 %v2508
          %2574 = vmatprep.subr.bf16.mxu0 %v2511
          %2575 = vmatpush1.bf16.msra.mxu0 %v2510
          %2576 = vmatprep.subr.bf16.mxu0 %v2513
          %2577 = vmatpush1.bf16.msra.mxu0 %v2512
          %2578 = vmatprep.subr.bf16.mxu0 %v2515
          %2579 = vmatpush1.bf16.msra.mxu0 %v2514
          %2580 = vmatprep.subr.bf16.mxu0 %v2517
          %2581 = vmatpush1.bf16.msra.mxu0 %v2516
          %2582 = vmatprep.subr.bf16.mxu0 %v2519
          %2583 = vmatpush1.bf16.msra.mxu0 %v2518
          %2584 = vmatprep.subr.bf16.mxu0 %v2521
          %2585 = vmatpush1.bf16.msra.mxu0 %v2520
          %2586 = vmatprep.subr.bf16.mxu0 %v2523
          %2587 = vmatpush1.bf16.msra.mxu0 %v2522
          %2588 = vmatprep.mubr.bf16.mxu0 %v957
          %2589 = vmatmul.mubr.bf16.gmra.mrb[0].mxu0 %v956
          %v2590 = vpop.f32.mrb[0].mxu0
          %v2591 = vadd.f32 0.0, %v2590
          %v2592 = vpop.f32.mrb[0].mxu0
          %v2593 = vadd.f32 0.0, %v2592
          %v2594 = vpop.f32.mrb[0].mxu0
          %v2595 = vadd.f32 0.0, %v2594
          %v2596 = vpop.f32.mrb[0].mxu0
          %v2597 = vadd.f32 0.0, %v2596
          %2598 = vmatprep.mubr.bf16.mxu0 %v959
          %2599 = vmatmul.mubr.bf16.gmra.mrb[0].mxu0 %v958
          %v2600 = vpop.f32.mrb[0].mxu0
          %v2601 = vadd.f32 0.0, %v2600
          %v2602 = vpop.f32.mrb[0].mxu0
          %v2603 = vadd.f32 0.0, %v2602
          %v2604 = vpop.f32.mrb[0].mxu0
          %v2605 = vadd.f32 0.0, %v2604
          %v2606 = vpop.f32.mrb[0].mxu0
          %v2607 = vadd.f32 0.0, %v2606
          %2608 = vmatprep.mubr.bf16.mxu0 %v961
          %2609 = vmatmul.mubr.bf16.gmra.mrb[0].mxu0 %v960
          %v2610 = vpop.f32.mrb[0].mxu0
          %v2611 = vadd.f32 0.0, %v2610
          %v2612 = vpop.f32.mrb[0].mxu0
          %v2613 = vadd.f32 0.0, %v2612
          %v2614 = vpop.f32.mrb[0].mxu0
          %v2615 = vadd.f32 0.0, %v2614
          %v2616 = vpop.f32.mrb[0].mxu0
          %v2617 = vadd.f32 0.0, %v2616
          %2618 = vmatprep.mubr.bf16.mxu0 %v963
          %2619 = vmatmul.mubr.bf16.gmra.mrb[0].mxu0 %v962
          %v2620 = vpop.f32.mrb[0].mxu0
          %v2621 = vadd.f32 0.0, %v2620
          %v2622 = vpop.f32.mrb[0].mxu0
          %v2623 = vadd.f32 0.0, %v2622
          %v2624 = vpop.f32.mrb[0].mxu0
          %v2625 = vadd.f32 0.0, %v2624
          %v2626 = vpop.f32.mrb[0].mxu0
          %v2627 = vadd.f32 0.0, %v2626
          %2628 = vdwg.mxu0
          %v2629 = vadd.f32 %v2348, %v2591
          %v2630 = vadd.f32 %v2349, %v2593
          %v2631 = vadd.f32 %v2350, %v2595
          %v2632 = vadd.f32 %v2351, %v2597
          %v2633 = vadd.f32 %v2352, %v2601
          %v2634 = vadd.f32 %v2353, %v2603
          %v2635 = vadd.f32 %v2354, %v2605
          %v2636 = vadd.f32 %v2355, %v2607
          %v2637 = vadd.f32 %v2356, %v2611
          %v2638 = vadd.f32 %v2357, %v2613
          %v2639 = vadd.f32 %v2358, %v2615
          %v2640 = vadd.f32 %v2359, %v2617
          %v2641 = vadd.f32 %v2360, %v2621
          %v2642 = vadd.f32 %v2361, %v2623
          %v2643 = vadd.f32 %v2362, %v2625
          %v2644 = vadd.f32 %v2363, %v2627
          %2645 = vset.pattern.permute.xlu0 5
          %2646 = vperm.xlu0 %2645, %v964
          %v2647 = vpop.permute.xlu0 %2646
          %2649 = vset.pattern.permute.xlu0 5
          %2650 = vperm.xlu0 %2649, %v965
          %v2651 = vpop.permute.xlu0 %2650
          %2653 = vset.pattern.permute.xlu0 5
          %2654 = vperm.xlu0 %2653, %v966
          %v2655 = vpop.permute.xlu0 %2654
          %2657 = vset.pattern.permute.xlu0 5
          %2658 = vperm.xlu0 %2657, %v967
          %v2659 = vpop.permute.xlu0 %2658
          %2661 = vset.pattern.permute.xlu0 5
          %2662 = vperm.xlu0 %2661, %v968
          %v2663 = vpop.permute.xlu0 %2662
          %2665 = vset.pattern.permute.xlu0 5
          %2666 = vperm.xlu0 %2665, %v969
          %v2667 = vpop.permute.xlu0 %2666
          %2669 = vset.pattern.permute.xlu0 5
          %2670 = vperm.xlu0 %2669, %v970
          %v2671 = vpop.permute.xlu0 %2670
          %2673 = vset.pattern.permute.xlu0 5
          %2674 = vperm.xlu0 %2673, %v971
          %v2675 = vpop.permute.xlu0 %2674
          %v2677 = vmul.f32 %v1686, %v2647
          %v2678 = vmul.f32 %v1687, %v2647
          %v2679 = vmul.f32 %v1684, %v2651
          %v2680 = vmul.f32 %v1685, %v2651
          %v2681 = vmul.f32 %v1682, %v2655
          %v2682 = vmul.f32 %v1683, %v2655
          %v2683 = vmul.f32 %v1680, %v2659
          %v2684 = vmul.f32 %v1681, %v2659
          %v2685 = vmul.f32 %v1678, %v2663
          %v2686 = vmul.f32 %v1679, %v2663
          %v2687 = vmul.f32 %v1676, %v2667
          %v2688 = vmul.f32 %v1677, %v2667
          %v2689 = vmul.f32 %v1674, %v2671
          %v2690 = vmul.f32 %v1675, %v2671
          %v2691 = vmul.f32 %v1688, %v2675
          %v2692 = vmul.f32 %v1689, %v2675
          %v2693 = vpack.c.bf16 %v2679, %v2677
          %v2694 = vpack.c.bf16 %v2680, %v2678
          %v2695 = vpack.c.bf16 %v2683, %v2681
          %v2696 = vpack.c.bf16 %v2684, %v2682
          %v2697 = vpack.c.bf16 %v2687, %v2685
          %v2698 = vpack.c.bf16 %v2688, %v2686
          %v2699 = vpack.c.bf16 %v2691, %v2689
          %v2700 = vpack.c.bf16 %v2692, %v2690
          %v2701 = vld [vmem:[%s4 + $0x500] sm:$0xff]
          %v2702 = vld [vmem:[%s4 + $0x508] sm:$0xff]
          %v2703 = vld [vmem:[%s4 + $0x510] sm:$0xff]
          %v2704 = vld [vmem:[%s4 + $0x518] sm:$0xff]
          %v2705 = vld [vmem:[%s4 + $0x520] sm:$0xff]
          %v2706 = vld [vmem:[%s4 + $0x528] sm:$0xff]
          %v2707 = vld [vmem:[%s4 + $0x530] sm:$0xff]
          %v2708 = vld [vmem:[%s4 + $0x538] sm:$0xff]
          %v2709 = vld [vmem:[%s4 + $0x540] sm:$0xff]
          %v2710 = vld [vmem:[%s4 + $0x548] sm:$0xff]
          %v2711 = vld [vmem:[%s4 + $0x550] sm:$0xff]
          %v2712 = vld [vmem:[%s4 + $0x558] sm:$0xff]
          %v2713 = vld [vmem:[%s4 + $0x560] sm:$0xff]
          %v2714 = vld [vmem:[%s4 + $0x568] sm:$0xff]
          %v2715 = vld [vmem:[%s4 + $0x570] sm:$0xff]
          %v2716 = vld [vmem:[%s4 + $0x578] sm:$0xff]
          %v2717 = vld [vmem:[%s4 + $0x580] sm:$0xff]
          %v2718 = vld [vmem:[%s4 + $0x588] sm:$0xff]
          %v2719 = vld [vmem:[%s4 + $0x590] sm:$0xff]
          %v2720 = vld [vmem:[%s4 + $0x598] sm:$0xff]
          %v2721 = vld [vmem:[%s4 + $0x5a0] sm:$0xff]
          %v2722 = vld [vmem:[%s4 + $0x5a8] sm:$0xff]
          %v2723 = vld [vmem:[%s4 + $0x5b0] sm:$0xff]
          %v2724 = vld [vmem:[%s4 + $0x5b8] sm:$0xff]
          %v2725 = vld [vmem:[%s4 + $0x5c0] sm:$0xff]
          %v2726 = vld [vmem:[%s4 + $0x5c8] sm:$0xff]
          %v2727 = vld [vmem:[%s4 + $0x5d0] sm:$0xff]
          %v2728 = vld [vmem:[%s4 + $0x5d8] sm:$0xff]
          %v2729 = vld [vmem:[%s4 + $0x5e0] sm:$0xff]
          %v2730 = vld [vmem:[%s4 + $0x5e8] sm:$0xff]
          %v2731 = vld [vmem:[%s4 + $0x5f0] sm:$0xff]
          %v2732 = vld [vmem:[%s4 + $0x5f8] sm:$0xff]
          %v2765 = vunpack.c.l.b16 %v2701
          %v2766 = vunpack.c.h.b16 %v2701
          %v2767 = vunpack.c.l.b16 %v2702
          %v2768 = vunpack.c.h.b16 %v2702
          %v2769 = vunpack.c.l.b16 %v2703
          %v2770 = vunpack.c.h.b16 %v2703
          %v2771 = vunpack.c.l.b16 %v2704
          %v2772 = vunpack.c.h.b16 %v2704
          %v2773 = vunpack.c.l.b16 %v2705
          %v2774 = vunpack.c.h.b16 %v2705
          %v2775 = vunpack.c.l.b16 %v2706
          %v2776 = vunpack.c.h.b16 %v2706
          %v2777 = vunpack.c.l.b16 %v2707
          %v2778 = vunpack.c.h.b16 %v2707
          %v2779 = vunpack.c.l.b16 %v2708
          %v2780 = vunpack.c.h.b16 %v2708
          %v2781 = vunpack.c.l.b16 %v2709
          %v2782 = vunpack.c.h.b16 %v2709
          %v2783 = vunpack.c.l.b16 %v2710
          %v2784 = vunpack.c.h.b16 %v2710
          %v2785 = vunpack.c.l.b16 %v2711
          %v2786 = vunpack.c.h.b16 %v2711
          %v2787 = vunpack.c.l.b16 %v2712
          %v2788 = vunpack.c.h.b16 %v2712
          %v2789 = vunpack.c.l.b16 %v2713
          %v2790 = vunpack.c.h.b16 %v2713
          %v2791 = vunpack.c.l.b16 %v2714
          %v2792 = vunpack.c.h.b16 %v2714
          %v2793 = vunpack.c.l.b16 %v2715
          %v2794 = vunpack.c.h.b16 %v2715
          %v2795 = vunpack.c.l.b16 %v2716
          %v2796 = vunpack.c.h.b16 %v2716
          %v2797 = vunpack.c.l.b16 %v2717
          %v2798 = vunpack.c.h.b16 %v2717
          %v2799 = vunpack.c.l.b16 %v2718
          %v2800 = vunpack.c.h.b16 %v2718
          %v2801 = vunpack.c.l.b16 %v2719
          %v2802 = vunpack.c.h.b16 %v2719
          %v2803 = vunpack.c.l.b16 %v2720
          %v2804 = vunpack.c.h.b16 %v2720
          %v2805 = vunpack.c.l.b16 %v2721
          %v2806 = vunpack.c.h.b16 %v2721
          %v2807 = vunpack.c.l.b16 %v2722
          %v2808 = vunpack.c.h.b16 %v2722
          %v2809 = vunpack.c.l.b16 %v2723
          %v2810 = vunpack.c.h.b16 %v2723
          %v2811 = vunpack.c.l.b16 %v2724
          %v2812 = vunpack.c.h.b16 %v2724
          %v2813 = vunpack.c.l.b16 %v2725
          %v2814 = vunpack.c.h.b16 %v2725
          %v2815 = vunpack.c.l.b16 %v2726
          %v2816 = vunpack.c.h.b16 %v2726
          %v2817 = vunpack.c.l.b16 %v2727
          %v2818 = vunpack.c.h.b16 %v2727
          %v2819 = vunpack.c.l.b16 %v2728
          %v2820 = vunpack.c.h.b16 %v2728
          %v2821 = vunpack.c.l.b16 %v2729
          %v2822 = vunpack.c.h.b16 %v2729
          %v2823 = vunpack.c.l.b16 %v2730
          %v2824 = vunpack.c.h.b16 %v2730
          %v2825 = vunpack.c.l.b16 %v2731
          %v2826 = vunpack.c.h.b16 %v2731
          %v2827 = vunpack.c.l.b16 %v2732
          %v2828 = vunpack.c.h.b16 %v2732
          %v2829 = vpack.c.b16 %v2767, %v2765
          %v2830 = vpack.c.b16 %v2768, %v2766
          %v2831 = vpack.c.b16 %v2771, %v2769
          %v2832 = vpack.c.b16 %v2772, %v2770
          %v2833 = vpack.c.b16 %v2775, %v2773
          %v2834 = vpack.c.b16 %v2776, %v2774
          %v2835 = vpack.c.b16 %v2779, %v2777
          %v2836 = vpack.c.b16 %v2780, %v2778
          %v2837 = vpack.c.b16 %v2783, %v2781
          %v2838 = vpack.c.b16 %v2784, %v2782
          %v2839 = vpack.c.b16 %v2787, %v2785
          %v2840 = vpack.c.b16 %v2788, %v2786
          %v2841 = vpack.c.b16 %v2791, %v2789
          %v2842 = vpack.c.b16 %v2792, %v2790
          %v2843 = vpack.c.b16 %v2795, %v2793
          %v2844 = vpack.c.b16 %v2796, %v2794
          %v2845 = vpack.c.b16 %v2799, %v2797
          %v2846 = vpack.c.b16 %v2800, %v2798
          %v2847 = vpack.c.b16 %v2803, %v2801
          %v2848 = vpack.c.b16 %v2804, %v2802
          %v2849 = vpack.c.b16 %v2807, %v2805
          %v2850 = vpack.c.b16 %v2808, %v2806
          %v2851 = vpack.c.b16 %v2811, %v2809
          %v2852 = vpack.c.b16 %v2812, %v2810
          %v2853 = vpack.c.b16 %v2815, %v2813
          %v2854 = vpack.c.b16 %v2816, %v2814
          %v2855 = vpack.c.b16 %v2819, %v2817
          %v2856 = vpack.c.b16 %v2820, %v2818
          %v2857 = vpack.c.b16 %v2823, %v2821
          %v2858 = vpack.c.b16 %v2824, %v2822
          %v2859 = vpack.c.b16 %v2827, %v2825
          %v2860 = vpack.c.b16 %v2828, %v2826
          %2893 = vmatprep.subr.bf16.mxu0 %v2830
          %2894 = vmatpush1.bf16.msra.mxu0 %v2829
          %2895 = vmatprep.subr.bf16.mxu0 %v2832
          %2896 = vmatpush1.bf16.msra.mxu0 %v2831
          %2897 = vmatprep.subr.bf16.mxu0 %v2834
          %2898 = vmatpush1.bf16.msra.mxu0 %v2833
          %2899 = vmatprep.subr.bf16.mxu0 %v2836
          %2900 = vmatpush1.bf16.msra.mxu0 %v2835
          %2901 = vmatprep.subr.bf16.mxu0 %v2838
          %2902 = vmatpush1.bf16.msra.mxu0 %v2837
          %2903 = vmatprep.subr.bf16.mxu0 %v2840
          %2904 = vmatpush1.bf16.msra.mxu0 %v2839
          %2905 = vmatprep.subr.bf16.mxu0 %v2842
          %2906 = vmatpush1.bf16.msra.mxu0 %v2841
          %2907 = vmatprep.subr.bf16.mxu0 %v2844
          %2908 = vmatpush1.bf16.msra.mxu0 %v2843
          %2909 = vmatprep.subr.bf16.mxu0 %v2846
          %2910 = vmatpush1.bf16.msra.mxu0 %v2845
          %2911 = vmatprep.subr.bf16.mxu0 %v2848
          %2912 = vmatpush1.bf16.msra.mxu0 %v2847
          %2913 = vmatprep.subr.bf16.mxu0 %v2850
          %2914 = vmatpush1.bf16.msra.mxu0 %v2849
          %2915 = vmatprep.subr.bf16.mxu0 %v2852
          %2916 = vmatpush1.bf16.msra.mxu0 %v2851
          %2917 = vmatprep.subr.bf16.mxu0 %v2854
          %2918 = vmatpush1.bf16.msra.mxu0 %v2853
          %2919 = vmatprep.subr.bf16.mxu0 %v2856
          %2920 = vmatpush1.bf16.msra.mxu0 %v2855
          %2921 = vmatprep.subr.bf16.mxu0 %v2858
          %2922 = vmatpush1.bf16.msra.mxu0 %v2857
          %2923 = vmatprep.subr.bf16.mxu0 %v2860
          %2924 = vmatpush1.bf16.msra.mxu0 %v2859
          %2925 = vmatprep.mubr.bf16.mxu0 %v2694
          %2926 = vmatmul.mubr.bf16.gmra.mrb[0].mxu0 %v2693
          %v2927 = vpop.f32.mrb[0].mxu0
          %v2928 = vadd.f32 0.0, %v2927
          %v2929 = vpop.f32.mrb[0].mxu0
          %v2930 = vadd.f32 0.0, %v2929
          %v2931 = vpop.f32.mrb[0].mxu0
          %v2932 = vadd.f32 0.0, %v2931
          %v2933 = vpop.f32.mrb[0].mxu0
          %v2934 = vadd.f32 0.0, %v2933
          %2935 = vmatprep.mubr.bf16.mxu0 %v2696
          %2936 = vmatmul.mubr.bf16.gmra.mrb[0].mxu0 %v2695
          %v2937 = vpop.f32.mrb[0].mxu0
          %v2938 = vadd.f32 0.0, %v2937
          %v2939 = vpop.f32.mrb[0].mxu0
          %v2940 = vadd.f32 0.0, %v2939
          %v2941 = vpop.f32.mrb[0].mxu0
          %v2942 = vadd.f32 0.0, %v2941
          %v2943 = vpop.f32.mrb[0].mxu0
          %v2944 = vadd.f32 0.0, %v2943
          %2945 = vmatprep.mubr.bf16.mxu0 %v2698
          %2946 = vmatmul.mubr.bf16.gmra.mrb[0].mxu0 %v2697
          %v2947 = vpop.f32.mrb[0].mxu0
          %v2948 = vadd.f32 0.0, %v2947
          %v2949 = vpop.f32.mrb[0].mxu0
          %v2950 = vadd.f32 0.0, %v2949
          %v2951 = vpop.f32.mrb[0].mxu0
          %v2952 = vadd.f32 0.0, %v2951
          %v2953 = vpop.f32.mrb[0].mxu0
          %v2954 = vadd.f32 0.0, %v2953
          %2955 = vmatprep.mubr.bf16.mxu0 %v2700
          %2956 = vmatmul.mubr.bf16.gmra.mrb[0].mxu0 %v2699
          %v2957 = vpop.f32.mrb[0].mxu0
          %v2958 = vadd.f32 0.0, %v2957
          %v2959 = vpop.f32.mrb[0].mxu0
          %v2960 = vadd.f32 0.0, %v2959
          %v2961 = vpop.f32.mrb[0].mxu0
          %v2962 = vadd.f32 0.0, %v2961
          %v2963 = vpop.f32.mrb[0].mxu0
          %v2964 = vadd.f32 0.0, %v2963
          %2965 = vdwg.mxu0
          %v2966 = vadd.f32 %v2629, %v2928
          %v2967 = vadd.f32 %v2630, %v2930
          %v2968 = vadd.f32 %v2631, %v2932
          %v2969 = vadd.f32 %v2632, %v2934
          %v2970 = vadd.f32 %v2633, %v2938
          %v2971 = vadd.f32 %v2634, %v2940
          %v2972 = vadd.f32 %v2635, %v2942
          %v2973 = vadd.f32 %v2636, %v2944
          %v2974 = vadd.f32 %v2637, %v2948
          %v2975 = vadd.f32 %v2638, %v2950
          %v2976 = vadd.f32 %v2639, %v2952
          %v2977 = vadd.f32 %v2640, %v2954
          %v2978 = vadd.f32 %v2641, %v2958
          %v2979 = vadd.f32 %v2642, %v2960
          %v2980 = vadd.f32 %v2643, %v2962
          %v2981 = vadd.f32 %v2644, %v2964
          %2982 = vset.pattern.permute.xlu0 6
          %2983 = vperm.xlu0 %2982, %v964
          %v2984 = vpop.permute.xlu0 %2983
          %2986 = vset.pattern.permute.xlu0 6
          %2987 = vperm.xlu0 %2986, %v965
          %v2988 = vpop.permute.xlu0 %2987
          %2990 = vset.pattern.permute.xlu0 6
          %2991 = vperm.xlu0 %2990, %v966
          %v2992 = vpop.permute.xlu0 %2991
          %2994 = vset.pattern.permute.xlu0 6
          %2995 = vperm.xlu0 %2994, %v967
          %v2996 = vpop.permute.xlu0 %2995
          %2998 = vset.pattern.permute.xlu0 6
          %2999 = vperm.xlu0 %2998, %v968
          %v3000 = vpop.permute.xlu0 %2999
          %3002 = vset.pattern.permute.xlu0 6
          %3003 = vperm.xlu0 %3002, %v969
          %v3004 = vpop.permute.xlu0 %3003
          %3006 = vset.pattern.permute.xlu0 6
          %3007 = vperm.xlu0 %3006, %v970
          %v3008 = vpop.permute.xlu0 %3007
          %3010 = vset.pattern.permute.xlu0 6
          %3011 = vperm.xlu0 %3010, %v971
          %v3012 = vpop.permute.xlu0 %3011
          %v3014 = vmul.f32 %v1001, %v2984
          %v3015 = vmul.f32 %v1002, %v2984
          %v3016 = vmul.f32 %v999, %v2988
          %v3017 = vmul.f32 %v1000, %v2988
          %v3018 = vmul.f32 %v997, %v2992
          %v3019 = vmul.f32 %v998, %v2992
          %v3020 = vmul.f32 %v995, %v2996
          %v3021 = vmul.f32 %v996, %v2996
          %v3022 = vmul.f32 %v993, %v3000
          %v3023 = vmul.f32 %v994, %v3000
          %v3024 = vmul.f32 %v991, %v3004
          %v3025 = vmul.f32 %v992, %v3004
          %v3026 = vmul.f32 %v1005, %v3008
          %v3027 = vmul.f32 %v1006, %v3008
          %v3028 = vmul.f32 %v1003, %v3012
          %v3029 = vmul.f32 %v1004, %v3012
          %v3030 = vpack.c.bf16 %v3016, %v3014
          %v3031 = vpack.c.bf16 %v3017, %v3015
          %v3032 = vpack.c.bf16 %v3020, %v3018
          %v3033 = vpack.c.bf16 %v3021, %v3019
          %v3034 = vpack.c.bf16 %v3024, %v3022
          %v3035 = vpack.c.bf16 %v3025, %v3023
          %v3036 = vpack.c.bf16 %v3028, %v3026
          %v3037 = vpack.c.bf16 %v3029, %v3027
          %v3038 = vld [vmem:[%s4 + $0x600] sm:$0xff]
          %v3039 = vld [vmem:[%s4 + $0x608] sm:$0xff]
          %v3040 = vld [vmem:[%s4 + $0x610] sm:$0xff]
          %v3041 = vld [vmem:[%s4 + $0x618] sm:$0xff]
          %v3042 = vld [vmem:[%s4 + $0x620] sm:$0xff]
          %v3043 = vld [vmem:[%s4 + $0x628] sm:$0xff]
          %v3044 = vld [vmem:[%s4 + $0x630] sm:$0xff]
          %v3045 = vld [vmem:[%s4 + $0x638] sm:$0xff]
          %v3046 = vld [vmem:[%s4 + $0x640] sm:$0xff]
          %v3047 = vld [vmem:[%s4 + $0x648] sm:$0xff]
          %v3048 = vld [vmem:[%s4 + $0x650] sm:$0xff]
          %v3049 = vld [vmem:[%s4 + $0x658] sm:$0xff]
          %v3050 = vld [vmem:[%s4 + $0x660] sm:$0xff]
          %v3051 = vld [vmem:[%s4 + $0x668] sm:$0xff]
          %v3052 = vld [vmem:[%s4 + $0x670] sm:$0xff]
          %v3053 = vld [vmem:[%s4 + $0x678] sm:$0xff]
          %v3054 = vld [vmem:[%s4 + $0x680] sm:$0xff]
          %v3055 = vld [vmem:[%s4 + $0x688] sm:$0xff]
          %v3056 = vld [vmem:[%s4 + $0x690] sm:$0xff]
          %v3057 = vld [vmem:[%s4 + $0x698] sm:$0xff]
          %v3058 = vld [vmem:[%s4 + $0x6a0] sm:$0xff]
          %v3059 = vld [vmem:[%s4 + $0x6a8] sm:$0xff]
          %v3060 = vld [vmem:[%s4 + $0x6b0] sm:$0xff]
          %v3061 = vld [vmem:[%s4 + $0x6b8] sm:$0xff]
          %v3062 = vld [vmem:[%s4 + $0x6c0] sm:$0xff]
          %v3063 = vld [vmem:[%s4 + $0x6c8] sm:$0xff]
          %v3064 = vld [vmem:[%s4 + $0x6d0] sm:$0xff]
          %v3065 = vld [vmem:[%s4 + $0x6d8] sm:$0xff]
          %v3066 = vld [vmem:[%s4 + $0x6e0] sm:$0xff]
          %v3067 = vld [vmem:[%s4 + $0x6e8] sm:$0xff]
          %v3068 = vld [vmem:[%s4 + $0x6f0] sm:$0xff]
          %v3069 = vld [vmem:[%s4 + $0x6f8] sm:$0xff]
          %v3102 = vunpack.c.l.b16 %v3038
          %v3103 = vunpack.c.h.b16 %v3038
          %v3104 = vunpack.c.l.b16 %v3039
          %v3105 = vunpack.c.h.b16 %v3039
          %v3106 = vunpack.c.l.b16 %v3040
          %v3107 = vunpack.c.h.b16 %v3040
          %v3108 = vunpack.c.l.b16 %v3041
          %v3109 = vunpack.c.h.b16 %v3041
          %v3110 = vunpack.c.l.b16 %v3042
          %v3111 = vunpack.c.h.b16 %v3042
          %v3112 = vunpack.c.l.b16 %v3043
          %v3113 = vunpack.c.h.b16 %v3043
          %v3114 = vunpack.c.l.b16 %v3044
          %v3115 = vunpack.c.h.b16 %v3044
          %v3116 = vunpack.c.l.b16 %v3045
          %v3117 = vunpack.c.h.b16 %v3045
          %v3118 = vunpack.c.l.b16 %v3046
          %v3119 = vunpack.c.h.b16 %v3046
          %v3120 = vunpack.c.l.b16 %v3047
          %v3121 = vunpack.c.h.b16 %v3047
          %v3122 = vunpack.c.l.b16 %v3048
          %v3123 = vunpack.c.h.b16 %v3048
          %v3124 = vunpack.c.l.b16 %v3049
          %v3125 = vunpack.c.h.b16 %v3049
          %v3126 = vunpack.c.l.b16 %v3050
          %v3127 = vunpack.c.h.b16 %v3050
          %v3128 = vunpack.c.l.b16 %v3051
          %v3129 = vunpack.c.h.b16 %v3051
          %v3130 = vunpack.c.l.b16 %v3052
          %v3131 = vunpack.c.h.b16 %v3052
          %v3132 = vunpack.c.l.b16 %v3053
          %v3133 = vunpack.c.h.b16 %v3053
          %v3134 = vunpack.c.l.b16 %v3054
          %v3135 = vunpack.c.h.b16 %v3054
          %v3136 = vunpack.c.l.b16 %v3055
          %v3137 = vunpack.c.h.b16 %v3055
          %v3138 = vunpack.c.l.b16 %v3056
          %v3139 = vunpack.c.h.b16 %v3056
          %v3140 = vunpack.c.l.b16 %v3057
          %v3141 = vunpack.c.h.b16 %v3057
          %v3142 = vunpack.c.l.b16 %v3058
          %v3143 = vunpack.c.h.b16 %v3058
          %v3144 = vunpack.c.l.b16 %v3059
          %v3145 = vunpack.c.h.b16 %v3059
          %v3146 = vunpack.c.l.b16 %v3060
          %v3147 = vunpack.c.h.b16 %v3060
          %v3148 = vunpack.c.l.b16 %v3061
          %v3149 = vunpack.c.h.b16 %v3061
          %v3150 = vunpack.c.l.b16 %v3062
          %v3151 = vunpack.c.h.b16 %v3062
          %v3152 = vunpack.c.l.b16 %v3063
          %v3153 = vunpack.c.h.b16 %v3063
          %v3154 = vunpack.c.l.b16 %v3064
          %v3155 = vunpack.c.h.b16 %v3064
          %v3156 = vunpack.c.l.b16 %v3065
          %v3157 = vunpack.c.h.b16 %v3065
          %v3158 = vunpack.c.l.b16 %v3066
          %v3159 = vunpack.c.h.b16 %v3066
          %v3160 = vunpack.c.l.b16 %v3067
          %v3161 = vunpack.c.h.b16 %v3067
          %v3162 = vunpack.c.l.b16 %v3068
          %v3163 = vunpack.c.h.b16 %v3068
          %v3164 = vunpack.c.l.b16 %v3069
          %v3165 = vunpack.c.h.b16 %v3069
          %v3166 = vpack.c.b16 %v3104, %v3102
          %v3167 = vpack.c.b16 %v3105, %v3103
          %v3168 = vpack.c.b16 %v3108, %v3106
          %v3169 = vpack.c.b16 %v3109, %v3107
          %v3170 = vpack.c.b16 %v3112, %v3110
          %v3171 = vpack.c.b16 %v3113, %v3111
          %v3172 = vpack.c.b16 %v3116, %v3114
          %v3173 = vpack.c.b16 %v3117, %v3115
          %v3174 = vpack.c.b16 %v3120, %v3118
          %v3175 = vpack.c.b16 %v3121, %v3119
          %v3176 = vpack.c.b16 %v3124, %v3122
          %v3177 = vpack.c.b16 %v3125, %v3123
          %v3178 = vpack.c.b16 %v3128, %v3126
          %v3179 = vpack.c.b16 %v3129, %v3127
          %v3180 = vpack.c.b16 %v3132, %v3130
          %v3181 = vpack.c.b16 %v3133, %v3131
          %v3182 = vpack.c.b16 %v3136, %v3134
          %v3183 = vpack.c.b16 %v3137, %v3135
          %v3184 = vpack.c.b16 %v3140, %v3138
          %v3185 = vpack.c.b16 %v3141, %v3139
          %v3186 = vpack.c.b16 %v3144, %v3142
          %v3187 = vpack.c.b16 %v3145, %v3143
          %v3188 = vpack.c.b16 %v3148, %v3146
          %v3189 = vpack.c.b16 %v3149, %v3147
          %v3190 = vpack.c.b16 %v3152, %v3150
          %v3191 = vpack.c.b16 %v3153, %v3151
          %v3192 = vpack.c.b16 %v3156, %v3154
          %v3193 = vpack.c.b16 %v3157, %v3155
          %v3194 = vpack.c.b16 %v3160, %v3158
          %v3195 = vpack.c.b16 %v3161, %v3159
          %v3196 = vpack.c.b16 %v3164, %v3162
          %v3197 = vpack.c.b16 %v3165, %v3163
          %3230 = vmatprep.subr.bf16.mxu0 %v3167
          %3231 = vmatpush1.bf16.msra.mxu0 %v3166
          %3232 = vmatprep.subr.bf16.mxu0 %v3169
          %3233 = vmatpush1.bf16.msra.mxu0 %v3168
          %3234 = vmatprep.subr.bf16.mxu0 %v3171
          %3235 = vmatpush1.bf16.msra.mxu0 %v3170
          %3236 = vmatprep.subr.bf16.mxu0 %v3173
          %3237 = vmatpush1.bf16.msra.mxu0 %v3172
          %3238 = vmatprep.subr.bf16.mxu0 %v3175
          %3239 = vmatpush1.bf16.msra.mxu0 %v3174
          %3240 = vmatprep.subr.bf16.mxu0 %v3177
          %3241 = vmatpush1.bf16.msra.mxu0 %v3176
          %3242 = vmatprep.subr.bf16.mxu0 %v3179
          %3243 = vmatpush1.bf16.msra.mxu0 %v3178
          %3244 = vmatprep.subr.bf16.mxu0 %v3181
          %3245 = vmatpush1.bf16.msra.mxu0 %v3180
          %3246 = vmatprep.subr.bf16.mxu0 %v3183
          %3247 = vmatpush1.bf16.msra.mxu0 %v3182
          %3248 = vmatprep.subr.bf16.mxu0 %v3185
          %3249 = vmatpush1.bf16.msra.mxu0 %v3184
          %3250 = vmatprep.subr.bf16.mxu0 %v3187
          %3251 = vmatpush1.bf16.msra.mxu0 %v3186
          %3252 = vmatprep.subr.bf16.mxu0 %v3189
          %3253 = vmatpush1.bf16.msra.mxu0 %v3188
          %3254 = vmatprep.subr.bf16.mxu0 %v3191
          %3255 = vmatpush1.bf16.msra.mxu0 %v3190
          %3256 = vmatprep.subr.bf16.mxu0 %v3193
          %3257 = vmatpush1.bf16.msra.mxu0 %v3192
          %3258 = vmatprep.subr.bf16.mxu0 %v3195
          %3259 = vmatpush1.bf16.msra.mxu0 %v3194
          %3260 = vmatprep.subr.bf16.mxu0 %v3197
          %3261 = vmatpush1.bf16.msra.mxu0 %v3196
          %3262 = vmatprep.mubr.bf16.mxu0 %v3031
          %3263 = vmatmul.mubr.bf16.gmra.mrb[0].mxu0 %v3030
          %v3264 = vpop.f32.mrb[0].mxu0
          %v3265 = vadd.f32 0.0, %v3264
          %v3266 = vpop.f32.mrb[0].mxu0
          %v3267 = vadd.f32 0.0, %v3266
          %v3268 = vpop.f32.mrb[0].mxu0
          %v3269 = vadd.f32 0.0, %v3268
          %v3270 = vpop.f32.mrb[0].mxu0
          %v3271 = vadd.f32 0.0, %v3270
          %3272 = vmatprep.mubr.bf16.mxu0 %v3033
          %3273 = vmatmul.mubr.bf16.gmra.mrb[0].mxu0 %v3032
          %v3274 = vpop.f32.mrb[0].mxu0
          %v3275 = vadd.f32 0.0, %v3274
          %v3276 = vpop.f32.mrb[0].mxu0
          %v3277 = vadd.f32 0.0, %v3276
          %v3278 = vpop.f32.mrb[0].mxu0
          %v3279 = vadd.f32 0.0, %v3278
          %v3280 = vpop.f32.mrb[0].mxu0
          %v3281 = vadd.f32 0.0, %v3280
          %3282 = vmatprep.mubr.bf16.mxu0 %v3035
          %3283 = vmatmul.mubr.bf16.gmra.mrb[0].mxu0 %v3034
          %v3284 = vpop.f32.mrb[0].mxu0
          %v3285 = vadd.f32 0.0, %v3284
          %v3286 = vpop.f32.mrb[0].mxu0
          %v3287 = vadd.f32 0.0, %v3286
          %v3288 = vpop.f32.mrb[0].mxu0
          %v3289 = vadd.f32 0.0, %v3288
          %v3290 = vpop.f32.mrb[0].mxu0
          %v3291 = vadd.f32 0.0, %v3290
          %3292 = vmatprep.mubr.bf16.mxu0 %v3037
          %3293 = vmatmul.mubr.bf16.gmra.mrb[0].mxu0 %v3036
          %v3294 = vpop.f32.mrb[0].mxu0
          %v3295 = vadd.f32 0.0, %v3294
          %v3296 = vpop.f32.mrb[0].mxu0
          %v3297 = vadd.f32 0.0, %v3296
          %v3298 = vpop.f32.mrb[0].mxu0
          %v3299 = vadd.f32 0.0, %v3298
          %v3300 = vpop.f32.mrb[0].mxu0
          %v3301 = vadd.f32 0.0, %v3300
          %3302 = vdwg.mxu0
          %v3303 = vadd.f32 %v2966, %v3265
          %v3304 = vadd.f32 %v2967, %v3267
          %v3305 = vadd.f32 %v2968, %v3269
          %v3306 = vadd.f32 %v2969, %v3271
          %v3307 = vadd.f32 %v2970, %v3275
          %v3308 = vadd.f32 %v2971, %v3277
          %v3309 = vadd.f32 %v2972, %v3279
          %v3310 = vadd.f32 %v2973, %v3281
          %v3311 = vadd.f32 %v2974, %v3285
          %v3312 = vadd.f32 %v2975, %v3287
          %v3313 = vadd.f32 %v2976, %v3289
          %v3314 = vadd.f32 %v2977, %v3291
          %v3315 = vadd.f32 %v2978, %v3295
          %v3316 = vadd.f32 %v2979, %v3297
          %v3317 = vadd.f32 %v2980, %v3299
          %v3318 = vadd.f32 %v2981, %v3301
          %3319 = vset.pattern.permute.xlu0 7
          %3320 = vperm.xlu0 %3319, %v964
          %v3321 = vpop.permute.xlu0 %3320
          %3323 = vset.pattern.permute.xlu0 7
          %3324 = vperm.xlu0 %3323, %v965
          %v3325 = vpop.permute.xlu0 %3324
          %3327 = vset.pattern.permute.xlu0 7
          %3328 = vperm.xlu0 %3327, %v966
          %v3329 = vpop.permute.xlu0 %3328
          %3331 = vset.pattern.permute.xlu0 7
          %3332 = vperm.xlu0 %3331, %v967
          %v3333 = vpop.permute.xlu0 %3332
          %3335 = vset.pattern.permute.xlu0 7
          %3336 = vperm.xlu0 %3335, %v968
          %v3337 = vpop.permute.xlu0 %3336
          %3339 = vset.pattern.permute.xlu0 7
          %3340 = vperm.xlu0 %3339, %v969
          %v3341 = vpop.permute.xlu0 %3340
          %3343 = vset.pattern.permute.xlu0 7
          %3344 = vperm.xlu0 %3343, %v970
          %v3345 = vpop.permute.xlu0 %3344
          %3347 = vset.pattern.permute.xlu0 7
          %3348 = vperm.xlu0 %3347, %v971
          %v3349 = vpop.permute.xlu0 %3348
          %v3351 = vmul.f32 %v944, %v3321
          %v3352 = vmul.f32 %v945, %v3321
          %v3353 = vmul.f32 %v946, %v3325
          %v3354 = vmul.f32 %v947, %v3325
          %v3355 = vmul.f32 %v948, %v3329
          %v3356 = vmul.f32 %v949, %v3329
          %v3357 = vmul.f32 %v950, %v3333
          %v3358 = vmul.f32 %v951, %v3333
          %v3359 = vmul.f32 %v952, %v3337
          %v3360 = vmul.f32 %v953, %v3337
          %v3361 = vmul.f32 %v954, %v3341
          %v3362 = vmul.f32 %v955, %v3341
          %v3363 = vmul.f32 %v940, %v3345
          %v3364 = vmul.f32 %v941, %v3345
          %v3365 = vmul.f32 %v942, %v3349
          %v3366 = vmul.f32 %v943, %v3349
          %v3367 = vpack.c.bf16 %v3353, %v3351
          %v3368 = vpack.c.bf16 %v3354, %v3352
          %v3369 = vpack.c.bf16 %v3357, %v3355
          %v3370 = vpack.c.bf16 %v3358, %v3356
          %v3371 = vpack.c.bf16 %v3361, %v3359
          %v3372 = vpack.c.bf16 %v3362, %v3360
          %v3373 = vpack.c.bf16 %v3365, %v3363
          %v3374 = vpack.c.bf16 %v3366, %v3364
          %v3375 = vld [vmem:[%s4 + $0x700] sm:$0xff]
          %v3376 = vld [vmem:[%s4 + $0x708] sm:$0xff]
          %v3377 = vld [vmem:[%s4 + $0x710] sm:$0xff]
          %v3378 = vld [vmem:[%s4 + $0x718] sm:$0xff]
          %v3379 = vld [vmem:[%s4 + $0x720] sm:$0xff]
          %v3380 = vld [vmem:[%s4 + $0x728] sm:$0xff]
          %v3381 = vld [vmem:[%s4 + $0x730] sm:$0xff]
          %v3382 = vld [vmem:[%s4 + $0x738] sm:$0xff]
          %v3383 = vld [vmem:[%s4 + $0x740] sm:$0xff]
          %v3384 = vld [vmem:[%s4 + $0x748] sm:$0xff]
          %v3385 = vld [vmem:[%s4 + $0x750] sm:$0xff]
          %v3386 = vld [vmem:[%s4 + $0x758] sm:$0xff]
          %v3387 = vld [vmem:[%s4 + $0x760] sm:$0xff]
          %v3388 = vld [vmem:[%s4 + $0x768] sm:$0xff]
          %v3389 = vld [vmem:[%s4 + $0x770] sm:$0xff]
          %v3390 = vld [vmem:[%s4 + $0x778] sm:$0xff]
          %v3391 = vld [vmem:[%s4 + $0x780] sm:$0xff]
          %v3392 = vld [vmem:[%s4 + $0x788] sm:$0xff]
          %v3393 = vld [vmem:[%s4 + $0x790] sm:$0xff]
          %v3394 = vld [vmem:[%s4 + $0x798] sm:$0xff]
          %v3395 = vld [vmem:[%s4 + $0x7a0] sm:$0xff]
          %v3396 = vld [vmem:[%s4 + $0x7a8] sm:$0xff]
          %v3397 = vld [vmem:[%s4 + $0x7b0] sm:$0xff]
          %v3398 = vld [vmem:[%s4 + $0x7b8] sm:$0xff]
          %v3399 = vld [vmem:[%s4 + $0x7c0] sm:$0xff]
          %v3400 = vld [vmem:[%s4 + $0x7c8] sm:$0xff]
          %v3401 = vld [vmem:[%s4 + $0x7d0] sm:$0xff]
          %v3402 = vld [vmem:[%s4 + $0x7d8] sm:$0xff]
          %v3403 = vld [vmem:[%s4 + $0x7e0] sm:$0xff]
          %v3404 = vld [vmem:[%s4 + $0x7e8] sm:$0xff]
          %v3405 = vld [vmem:[%s4 + $0x7f0] sm:$0xff]
          %v3406 = vld [vmem:[%s4 + $0x7f8] sm:$0xff]
          %v3439 = vunpack.c.l.b16 %v3375
          %v3440 = vunpack.c.h.b16 %v3375
          %v3441 = vunpack.c.l.b16 %v3376
          %v3442 = vunpack.c.h.b16 %v3376
          %v3443 = vunpack.c.l.b16 %v3377
          %v3444 = vunpack.c.h.b16 %v3377
          %v3445 = vunpack.c.l.b16 %v3378
          %v3446 = vunpack.c.h.b16 %v3378
          %v3447 = vunpack.c.l.b16 %v3379
          %v3448 = vunpack.c.h.b16 %v3379
          %v3449 = vunpack.c.l.b16 %v3380
          %v3450 = vunpack.c.h.b16 %v3380
          %v3451 = vunpack.c.l.b16 %v3381
          %v3452 = vunpack.c.h.b16 %v3381
          %v3453 = vunpack.c.l.b16 %v3382
          %v3454 = vunpack.c.h.b16 %v3382
          %v3455 = vunpack.c.l.b16 %v3383
          %v3456 = vunpack.c.h.b16 %v3383
          %v3457 = vunpack.c.l.b16 %v3384
          %v3458 = vunpack.c.h.b16 %v3384
          %v3459 = vunpack.c.l.b16 %v3385
          %v3460 = vunpack.c.h.b16 %v3385
          %v3461 = vunpack.c.l.b16 %v3386
          %v3462 = vunpack.c.h.b16 %v3386
          %v3463 = vunpack.c.l.b16 %v3387
          %v3464 = vunpack.c.h.b16 %v3387
          %v3465 = vunpack.c.l.b16 %v3388
          %v3466 = vunpack.c.h.b16 %v3388
          %v3467 = vunpack.c.l.b16 %v3389
          %v3468 = vunpack.c.h.b16 %v3389
          %v3469 = vunpack.c.l.b16 %v3390
          %v3470 = vunpack.c.h.b16 %v3390
          %v3471 = vunpack.c.l.b16 %v3391
          %v3472 = vunpack.c.h.b16 %v3391
          %v3473 = vunpack.c.l.b16 %v3392
          %v3474 = vunpack.c.h.b16 %v3392
          %v3475 = vunpack.c.l.b16 %v3393
          %v3476 = vunpack.c.h.b16 %v3393
          %v3477 = vunpack.c.l.b16 %v3394
          %v3478 = vunpack.c.h.b16 %v3394
          %v3479 = vunpack.c.l.b16 %v3395
          %v3480 = vunpack.c.h.b16 %v3395
          %v3481 = vunpack.c.l.b16 %v3396
          %v3482 = vunpack.c.h.b16 %v3396
          %v3483 = vunpack.c.l.b16 %v3397
          %v3484 = vunpack.c.h.b16 %v3397
          %v3485 = vunpack.c.l.b16 %v3398
          %v3486 = vunpack.c.h.b16 %v3398
          %v3487 = vunpack.c.l.b16 %v3399
          %v3488 = vunpack.c.h.b16 %v3399
          %v3489 = vunpack.c.l.b16 %v3400
          %v3490 = vunpack.c.h.b16 %v3400
          %v3491 = vunpack.c.l.b16 %v3401
          %v3492 = vunpack.c.h.b16 %v3401
          %v3493 = vunpack.c.l.b16 %v3402
          %v3494 = vunpack.c.h.b16 %v3402
          %v3495 = vunpack.c.l.b16 %v3403
          %v3496 = vunpack.c.h.b16 %v3403
          %v3497 = vunpack.c.l.b16 %v3404
          %v3498 = vunpack.c.h.b16 %v3404
          %v3499 = vunpack.c.l.b16 %v3405
          %v3500 = vunpack.c.h.b16 %v3405
          %v3501 = vunpack.c.l.b16 %v3406
          %v3502 = vunpack.c.h.b16 %v3406
          %v3503 = vpack.c.b16 %v3441, %v3439
          %v3504 = vpack.c.b16 %v3442, %v3440
          %v3505 = vpack.c.b16 %v3445, %v3443
          %v3506 = vpack.c.b16 %v3446, %v3444
          %v3507 = vpack.c.b16 %v3449, %v3447
          %v3508 = vpack.c.b16 %v3450, %v3448
          %v3509 = vpack.c.b16 %v3453, %v3451
          %v3510 = vpack.c.b16 %v3454, %v3452
          %v3511 = vpack.c.b16 %v3457, %v3455
          %v3512 = vpack.c.b16 %v3458, %v3456
          %v3513 = vpack.c.b16 %v3461, %v3459
          %v3514 = vpack.c.b16 %v3462, %v3460
          %v3515 = vpack.c.b16 %v3465, %v3463
          %v3516 = vpack.c.b16 %v3466, %v3464
          %v3517 = vpack.c.b16 %v3469, %v3467
          %v3518 = vpack.c.b16 %v3470, %v3468
          %v3519 = vpack.c.b16 %v3473, %v3471
          %v3520 = vpack.c.b16 %v3474, %v3472
          %v3521 = vpack.c.b16 %v3477, %v3475
          %v3522 = vpack.c.b16 %v3478, %v3476
          %v3523 = vpack.c.b16 %v3481, %v3479
          %v3524 = vpack.c.b16 %v3482, %v3480
          %v3525 = vpack.c.b16 %v3485, %v3483
          %v3526 = vpack.c.b16 %v3486, %v3484
          %v3527 = vpack.c.b16 %v3489, %v3487
          %v3528 = vpack.c.b16 %v3490, %v3488
          %v3529 = vpack.c.b16 %v3493, %v3491
          %v3530 = vpack.c.b16 %v3494, %v3492
          %v3531 = vpack.c.b16 %v3497, %v3495
          %v3532 = vpack.c.b16 %v3498, %v3496
          %v3533 = vpack.c.b16 %v3501, %v3499
          %v3534 = vpack.c.b16 %v3502, %v3500
          %3567 = vmatprep.subr.bf16.mxu0 %v3504
          %3568 = vmatpush1.bf16.msra.mxu0 %v3503
          %3569 = vmatprep.subr.bf16.mxu0 %v3506
          %3570 = vmatpush1.bf16.msra.mxu0 %v3505
          %3571 = vmatprep.subr.bf16.mxu0 %v3508
          %3572 = vmatpush1.bf16.msra.mxu0 %v3507
          %3573 = vmatprep.subr.bf16.mxu0 %v3510
          %3574 = vmatpush1.bf16.msra.mxu0 %v3509
          %3575 = vmatprep.subr.bf16.mxu0 %v3512
          %3576 = vmatpush1.bf16.msra.mxu0 %v3511
          %3577 = vmatprep.subr.bf16.mxu0 %v3514
          %3578 = vmatpush1.bf16.msra.mxu0 %v3513
          %3579 = vmatprep.subr.bf16.mxu0 %v3516
          %3580 = vmatpush1.bf16.msra.mxu0 %v3515
          %3581 = vmatprep.subr.bf16.mxu0 %v3518
          %3582 = vmatpush1.bf16.msra.mxu0 %v3517
          %3583 = vmatprep.subr.bf16.mxu0 %v3520
          %3584 = vmatpush1.bf16.msra.mxu0 %v3519
          %3585 = vmatprep.subr.bf16.mxu0 %v3522
          %3586 = vmatpush1.bf16.msra.mxu0 %v3521
          %3587 = vmatprep.subr.bf16.mxu0 %v3524
          %3588 = vmatpush1.bf16.msra.mxu0 %v3523
          %3589 = vmatprep.subr.bf16.mxu0 %v3526
          %3590 = vmatpush1.bf16.msra.mxu0 %v3525
          %3591 = vmatprep.subr.bf16.mxu0 %v3528
          %3592 = vmatpush1.bf16.msra.mxu0 %v3527
          %3593 = vmatprep.subr.bf16.mxu0 %v3530
          %3594 = vmatpush1.bf16.msra.mxu0 %v3529
          %3595 = vmatprep.subr.bf16.mxu0 %v3532
          %3596 = vmatpush1.bf16.msra.mxu0 %v3531
          %3597 = vmatprep.subr.bf16.mxu0 %v3534
          %3598 = vmatpush1.bf16.msra.mxu0 %v3533
          %3599 = vmatprep.mubr.bf16.mxu0 %v3368
          %3600 = vmatmul.mubr.bf16.gmra.mrb[0].mxu0 %v3367
          %v3601 = vpop.f32.mrb[0].mxu0
          %v3602 = vadd.f32 0.0, %v3601
          %v3603 = vpop.f32.mrb[0].mxu0
          %v3604 = vadd.f32 0.0, %v3603
          %v3605 = vpop.f32.mrb[0].mxu0
          %v3606 = vadd.f32 0.0, %v3605
          %v3607 = vpop.f32.mrb[0].mxu0
          %v3608 = vadd.f32 0.0, %v3607
          %3609 = vmatprep.mubr.bf16.mxu0 %v3370
          %3610 = vmatmul.mubr.bf16.gmra.mrb[0].mxu0 %v3369
          %v3611 = vpop.f32.mrb[0].mxu0
          %v3612 = vadd.f32 0.0, %v3611
          %v3613 = vpop.f32.mrb[0].mxu0
          %v3614 = vadd.f32 0.0, %v3613
          %v3615 = vpop.f32.mrb[0].mxu0
          %v3616 = vadd.f32 0.0, %v3615
          %v3617 = vpop.f32.mrb[0].mxu0
          %v3618 = vadd.f32 0.0, %v3617
          %3619 = vmatprep.mubr.bf16.mxu0 %v3372
          %3620 = vmatmul.mubr.bf16.gmra.mrb[0].mxu0 %v3371
          %v3621 = vpop.f32.mrb[0].mxu0
          %v3622 = vadd.f32 0.0, %v3621
          %v3623 = vpop.f32.mrb[0].mxu0
          %v3624 = vadd.f32 0.0, %v3623
          %v3625 = vpop.f32.mrb[0].mxu0
          %v3626 = vadd.f32 0.0, %v3625
          %v3627 = vpop.f32.mrb[0].mxu0
          %v3628 = vadd.f32 0.0, %v3627
          %3629 = vmatprep.mubr.bf16.mxu0 %v3374
          %3630 = vmatmul.mubr.bf16.gmra.mrb[0].mxu0 %v3373
          %v3631 = vpop.f32.mrb[0].mxu0
          %v3632 = vadd.f32 0.0, %v3631
          %v3633 = vpop.f32.mrb[0].mxu0
          %v3634 = vadd.f32 0.0, %v3633
          %v3635 = vpop.f32.mrb[0].mxu0
          %v3636 = vadd.f32 0.0, %v3635
          %v3637 = vpop.f32.mrb[0].mxu0
          %v3638 = vadd.f32 0.0, %v3637
          %3639 = vdwg.mxu0
          %v3640 = vadd.f32 %v3303, %v3602
          %v3641 = vadd.f32 %v3304, %v3604
          %v3642 = vadd.f32 %v3305, %v3606
          %v3643 = vadd.f32 %v3306, %v3608
          %v3644 = vadd.f32 %v3307, %v3612
          %v3645 = vadd.f32 %v3308, %v3614
          %v3646 = vadd.f32 %v3309, %v3616
          %v3647 = vadd.f32 %v3310, %v3618
          %v3648 = vadd.f32 %v3311, %v3622
          %v3649 = vadd.f32 %v3312, %v3624
          %v3650 = vadd.f32 %v3313, %v3626
          %v3651 = vadd.f32 %v3314, %v3628
          %v3652 = vadd.f32 %v3315, %v3632
          %v3653 = vadd.f32 %v3316, %v3634
          %v3654 = vadd.f32 %v3317, %v3636
          %v3655 = vadd.f32 %v3318, %v3638
          %3656 = vset.pattern.permute.xlu0 8
          %3657 = vperm.xlu0 %3656, %v964
          %v3658 = vpop.permute.xlu0 %3657
          %3660 = vset.pattern.permute.xlu0 8
          %3661 = vperm.xlu0 %3660, %v965
          %v3662 = vpop.permute.xlu0 %3661
          %3664 = vset.pattern.permute.xlu0 8
          %3665 = vperm.xlu0 %3664, %v966
          %v3666 = vpop.permute.xlu0 %3665
          %3668 = vset.pattern.permute.xlu0 8
          %3669 = vperm.xlu0 %3668, %v967
          %v3670 = vpop.permute.xlu0 %3669
          %3672 = vset.pattern.permute.xlu0 8
          %3673 = vperm.xlu0 %3672, %v968
          %v3674 = vpop.permute.xlu0 %3673
          %3676 = vset.pattern.permute.xlu0 8
          %3677 = vperm.xlu0 %3676, %v969
          %v3678 = vpop.permute.xlu0 %3677
          %3680 = vset.pattern.permute.xlu0 8
          %3681 = vperm.xlu0 %3680, %v970
          %v3682 = vpop.permute.xlu0 %3681
          %3684 = vset.pattern.permute.xlu0 8
          %3685 = vperm.xlu0 %3684, %v971
          %v3686 = vpop.permute.xlu0 %3685
          %v3688 = vmul.f32 %v1682, %v3658
          %v3689 = vmul.f32 %v1683, %v3658
          %v3690 = vmul.f32 %v1680, %v3662
          %v3691 = vmul.f32 %v1681, %v3662
          %v3692 = vmul.f32 %v1678, %v3666
          %v3693 = vmul.f32 %v1679, %v3666
          %v3694 = vmul.f32 %v1676, %v3670
          %v3695 = vmul.f32 %v1677, %v3670
          %v3696 = vmul.f32 %v1674, %v3674
          %v3697 = vmul.f32 %v1675, %v3674
          %v3698 = vmul.f32 %v1688, %v3678
          %v3699 = vmul.f32 %v1689, %v3678
          %v3700 = vmul.f32 %v1686, %v3682
          %v3701 = vmul.f32 %v1687, %v3682
          %v3702 = vmul.f32 %v1684, %v3686
          %v3703 = vmul.f32 %v1685, %v3686
          %v3704 = vpack.c.bf16 %v3690, %v3688
          %v3705 = vpack.c.bf16 %v3691, %v3689
          %v3706 = vpack.c.bf16 %v3694, %v3692
          %v3707 = vpack.c.bf16 %v3695, %v3693
          %v3708 = vpack.c.bf16 %v3698, %v3696
          %v3709 = vpack.c.bf16 %v3699, %v3697
          %v3710 = vpack.c.bf16 %v3702, %v3700
          %v3711 = vpack.c.bf16 %v3703, %v3701
          %v3712 = vld [vmem:[%s4 + $0x800] sm:$0xff]
          %v3713 = vld [vmem:[%s4 + $0x808] sm:$0xff]
          %v3714 = vld [vmem:[%s4 + $0x810] sm:$0xff]
          %v3715 = vld [vmem:[%s4 + $0x818] sm:$0xff]
          %v3716 = vld [vmem:[%s4 + $0x820] sm:$0xff]
          %v3717 = vld [vmem:[%s4 + $0x828] sm:$0xff]
          %v3718 = vld [vmem:[%s4 + $0x830] sm:$0xff]
          %v3719 = vld [vmem:[%s4 + $0x838] sm:$0xff]
          %v3720 = vld [vmem:[%s4 + $0x840] sm:$0xff]
          %v3721 = vld [vmem:[%s4 + $0x848] sm:$0xff]
          %v3722 = vld [vmem:[%s4 + $0x850] sm:$0xff]
          %v3723 = vld [vmem:[%s4 + $0x858] sm:$0xff]
          %v3724 = vld [vmem:[%s4 + $0x860] sm:$0xff]
          %v3725 = vld [vmem:[%s4 + $0x868] sm:$0xff]
          %v3726 = vld [vmem:[%s4 + $0x870] sm:$0xff]
          %v3727 = vld [vmem:[%s4 + $0x878] sm:$0xff]
          %v3728 = vld [vmem:[%s4 + $0x880] sm:$0xff]
          %v3729 = vld [vmem:[%s4 + $0x888] sm:$0xff]
          %v3730 = vld [vmem:[%s4 + $0x890] sm:$0xff]
          %v3731 = vld [vmem:[%s4 + $0x898] sm:$0xff]
          %v3732 = vld [vmem:[%s4 + $0x8a0] sm:$0xff]
          %v3733 = vld [vmem:[%s4 + $0x8a8] sm:$0xff]
          %v3734 = vld [vmem:[%s4 + $0x8b0] sm:$0xff]
          %v3735 = vld [vmem:[%s4 + $0x8b8] sm:$0xff]
          %v3736 = vld [vmem:[%s4 + $0x8c0] sm:$0xff]
          %v3737 = vld [vmem:[%s4 + $0x8c8] sm:$0xff]
          %v3738 = vld [vmem:[%s4 + $0x8d0] sm:$0xff]
          %v3739 = vld [vmem:[%s4 + $0x8d8] sm:$0xff]
          %v3740 = vld [vmem:[%s4 + $0x8e0] sm:$0xff]
          %v3741 = vld [vmem:[%s4 + $0x8e8] sm:$0xff]
          %v3742 = vld [vmem:[%s4 + $0x8f0] sm:$0xff]
          %v3743 = vld [vmem:[%s4 + $0x8f8] sm:$0xff]
          %v3776 = vunpack.c.l.b16 %v3712
          %v3777 = vunpack.c.h.b16 %v3712
          %v3778 = vunpack.c.l.b16 %v3713
          %v3779 = vunpack.c.h.b16 %v3713
          %v3780 = vunpack.c.l.b16 %v3714
          %v3781 = vunpack.c.h.b16 %v3714
          %v3782 = vunpack.c.l.b16 %v3715
          %v3783 = vunpack.c.h.b16 %v3715
          %v3784 = vunpack.c.l.b16 %v3716
          %v3785 = vunpack.c.h.b16 %v3716
          %v3786 = vunpack.c.l.b16 %v3717
          %v3787 = vunpack.c.h.b16 %v3717
          %v3788 = vunpack.c.l.b16 %v3718
          %v3789 = vunpack.c.h.b16 %v3718
          %v3790 = vunpack.c.l.b16 %v3719
          %v3791 = vunpack.c.h.b16 %v3719
          %v3792 = vunpack.c.l.b16 %v3720
          %v3793 = vunpack.c.h.b16 %v3720
          %v3794 = vunpack.c.l.b16 %v3721
          %v3795 = vunpack.c.h.b16 %v3721
          %v3796 = vunpack.c.l.b16 %v3722
          %v3797 = vunpack.c.h.b16 %v3722
          %v3798 = vunpack.c.l.b16 %v3723
          %v3799 = vunpack.c.h.b16 %v3723
          %v3800 = vunpack.c.l.b16 %v3724
          %v3801 = vunpack.c.h.b16 %v3724
          %v3802 = vunpack.c.l.b16 %v3725
          %v3803 = vunpack.c.h.b16 %v3725
          %v3804 = vunpack.c.l.b16 %v3726
          %v3805 = vunpack.c.h.b16 %v3726
          %v3806 = vunpack.c.l.b16 %v3727
          %v3807 = vunpack.c.h.b16 %v3727
          %v3808 = vunpack.c.l.b16 %v3728
          %v3809 = vunpack.c.h.b16 %v3728
          %v3810 = vunpack.c.l.b16 %v3729
          %v3811 = vunpack.c.h.b16 %v3729
          %v3812 = vunpack.c.l.b16 %v3730
          %v3813 = vunpack.c.h.b16 %v3730
          %v3814 = vunpack.c.l.b16 %v3731
          %v3815 = vunpack.c.h.b16 %v3731
          %v3816 = vunpack.c.l.b16 %v3732
          %v3817 = vunpack.c.h.b16 %v3732
          %v3818 = vunpack.c.l.b16 %v3733
          %v3819 = vunpack.c.h.b16 %v3733
          %v3820 = vunpack.c.l.b16 %v3734
          %v3821 = vunpack.c.h.b16 %v3734
          %v3822 = vunpack.c.l.b16 %v3735
          %v3823 = vunpack.c.h.b16 %v3735
          %v3824 = vunpack.c.l.b16 %v3736
          %v3825 = vunpack.c.h.b16 %v3736
          %v3826 = vunpack.c.l.b16 %v3737
          %v3827 = vunpack.c.h.b16 %v3737
          %v3828 = vunpack.c.l.b16 %v3738
          %v3829 = vunpack.c.h.b16 %v3738
          %v3830 = vunpack.c.l.b16 %v3739
          %v3831 = vunpack.c.h.b16 %v3739
          %v3832 = vunpack.c.l.b16 %v3740
          %v3833 = vunpack.c.h.b16 %v3740
          %v3834 = vunpack.c.l.b16 %v3741
          %v3835 = vunpack.c.h.b16 %v3741
          %v3836 = vunpack.c.l.b16 %v3742
          %v3837 = vunpack.c.h.b16 %v3742
          %v3838 = vunpack.c.l.b16 %v3743
          %v3839 = vunpack.c.h.b16 %v3743
          %v3840 = vpack.c.b16 %v3778, %v3776
          %v3841 = vpack.c.b16 %v3779, %v3777
          %v3842 = vpack.c.b16 %v3782, %v3780
          %v3843 = vpack.c.b16 %v3783, %v3781
          %v3844 = vpack.c.b16 %v3786, %v3784
          %v3845 = vpack.c.b16 %v3787, %v3785
          %v3846 = vpack.c.b16 %v3790, %v3788
          %v3847 = vpack.c.b16 %v3791, %v3789
          %v3848 = vpack.c.b16 %v3794, %v3792
          %v3849 = vpack.c.b16 %v3795, %v3793
          %v3850 = vpack.c.b16 %v3798, %v3796
          %v3851 = vpack.c.b16 %v3799, %v3797
          %v3852 = vpack.c.b16 %v3802, %v3800
          %v3853 = vpack.c.b16 %v3803, %v3801
          %v3854 = vpack.c.b16 %v3806, %v3804
          %v3855 = vpack.c.b16 %v3807, %v3805
          %v3856 = vpack.c.b16 %v3810, %v3808
          %v3857 = vpack.c.b16 %v3811, %v3809
          %v3858 = vpack.c.b16 %v3814, %v3812
          %v3859 = vpack.c.b16 %v3815, %v3813
          %v3860 = vpack.c.b16 %v3818, %v3816
          %v3861 = vpack.c.b16 %v3819, %v3817
          %v3862 = vpack.c.b16 %v3822, %v3820
          %v3863 = vpack.c.b16 %v3823, %v3821
          %v3864 = vpack.c.b16 %v3826, %v3824
          %v3865 = vpack.c.b16 %v3827, %v3825
          %v3866 = vpack.c.b16 %v3830, %v3828
          %v3867 = vpack.c.b16 %v3831, %v3829
          %v3868 = vpack.c.b16 %v3834, %v3832
          %v3869 = vpack.c.b16 %v3835, %v3833
          %v3870 = vpack.c.b16 %v3838, %v3836
          %v3871 = vpack.c.b16 %v3839, %v3837
          %3904 = vmatprep.subr.bf16.mxu0 %v3841
          %3905 = vmatpush1.bf16.msra.mxu0 %v3840
          %3906 = vmatprep.subr.bf16.mxu0 %v3843
          %3907 = vmatpush1.bf16.msra.mxu0 %v3842
          %3908 = vmatprep.subr.bf16.mxu0 %v3845
          %3909 = vmatpush1.bf16.msra.mxu0 %v3844
          %3910 = vmatprep.subr.bf16.mxu0 %v3847
          %3911 = vmatpush1.bf16.msra.mxu0 %v3846
          %3912 = vmatprep.subr.bf16.mxu0 %v3849
          %3913 = vmatpush1.bf16.msra.mxu0 %v3848
          %3914 = vmatprep.subr.bf16.mxu0 %v3851
          %3915 = vmatpush1.bf16.msra.mxu0 %v3850
          %3916 = vmatprep.subr.bf16.mxu0 %v3853
          %3917 = vmatpush1.bf16.msra.mxu0 %v3852
          %3918 = vmatprep.subr.bf16.mxu0 %v3855
          %3919 = vmatpush1.bf16.msra.mxu0 %v3854
          %3920 = vmatprep.subr.bf16.mxu0 %v3857
          %3921 = vmatpush1.bf16.msra.mxu0 %v3856
          %3922 = vmatprep.subr.bf16.mxu0 %v3859
          %3923 = vmatpush1.bf16.msra.mxu0 %v3858
          %3924 = vmatprep.subr.bf16.mxu0 %v3861
          %3925 = vmatpush1.bf16.msra.mxu0 %v3860
          %3926 = vmatprep.subr.bf16.mxu0 %v3863
          %3927 = vmatpush1.bf16.msra.mxu0 %v3862
          %3928 = vmatprep.subr.bf16.mxu0 %v3865
          %3929 = vmatpush1.bf16.msra.mxu0 %v3864
          %3930 = vmatprep.subr.bf16.mxu0 %v3867
          %3931 = vmatpush1.bf16.msra.mxu0 %v3866
          %3932 = vmatprep.subr.bf16.mxu0 %v3869
          %3933 = vmatpush1.bf16.msra.mxu0 %v3868
          %3934 = vmatprep.subr.bf16.mxu0 %v3871
          %3935 = vmatpush1.bf16.msra.mxu0 %v3870
          %3936 = vmatprep.mubr.bf16.mxu0 %v3705
          %3937 = vmatmul.mubr.bf16.gmra.mrb[0].mxu0 %v3704
          %v3938 = vpop.f32.mrb[0].mxu0
          %v3939 = vadd.f32 0.0, %v3938
          %v3940 = vpop.f32.mrb[0].mxu0
          %v3941 = vadd.f32 0.0, %v3940
          %v3942 = vpop.f32.mrb[0].mxu0
          %v3943 = vadd.f32 0.0, %v3942
          %v3944 = vpop.f32.mrb[0].mxu0
          %v3945 = vadd.f32 0.0, %v3944
          %3946 = vmatprep.mubr.bf16.mxu0 %v3707
          %3947 = vmatmul.mubr.bf16.gmra.mrb[0].mxu0 %v3706
          %v3948 = vpop.f32.mrb[0].mxu0
          %v3949 = vadd.f32 0.0, %v3948
          %v3950 = vpop.f32.mrb[0].mxu0
          %v3951 = vadd.f32 0.0, %v3950
          %v3952 = vpop.f32.mrb[0].mxu0
          %v3953 = vadd.f32 0.0, %v3952
          %v3954 = vpop.f32.mrb[0].mxu0
          %v3955 = vadd.f32 0.0, %v3954
          %3956 = vmatprep.mubr.bf16.mxu0 %v3709
          %3957 = vmatmul.mubr.bf16.gmra.mrb[0].mxu0 %v3708
          %v3958 = vpop.f32.mrb[0].mxu0
          %v3959 = vadd.f32 0.0, %v3958
          %v3960 = vpop.f32.mrb[0].mxu0
          %v3961 = vadd.f32 0.0, %v3960
          %v3962 = vpop.f32.mrb[0].mxu0
          %v3963 = vadd.f32 0.0, %v3962
          %v3964 = vpop.f32.mrb[0].mxu0
          %v3965 = vadd.f32 0.0, %v3964
          %3966 = vmatprep.mubr.bf16.mxu0 %v3711
          %3967 = vmatmul.mubr.bf16.gmra.mrb[0].mxu0 %v3710
          %v3968 = vpop.f32.mrb[0].mxu0
          %v3969 = vadd.f32 0.0, %v3968
          %v3970 = vpop.f32.mrb[0].mxu0
          %v3971 = vadd.f32 0.0, %v3970
          %v3972 = vpop.f32.mrb[0].mxu0
          %v3973 = vadd.f32 0.0, %v3972
          %v3974 = vpop.f32.mrb[0].mxu0
          %v3975 = vadd.f32 0.0, %v3974
          %3976 = vdwg.mxu0
          %v3977 = vadd.f32 %v3640, %v3939
          %v3978 = vadd.f32 %v3641, %v3941
          %v3979 = vadd.f32 %v3642, %v3943
          %v3980 = vadd.f32 %v3643, %v3945
          %v3981 = vadd.f32 %v3644, %v3949
          %v3982 = vadd.f32 %v3645, %v3951
          %v3983 = vadd.f32 %v3646, %v3953
          %v3984 = vadd.f32 %v3647, %v3955
          %v3985 = vadd.f32 %v3648, %v3959
          %v3986 = vadd.f32 %v3649, %v3961
          %v3987 = vadd.f32 %v3650, %v3963
          %v3988 = vadd.f32 %v3651, %v3965
          %v3989 = vadd.f32 %v3652, %v3969
          %v3990 = vadd.f32 %v3653, %v3971
          %v3991 = vadd.f32 %v3654, %v3973
          %v3992 = vadd.f32 %v3655, %v3975
          %v3993 = vld [vmem:[%s5] sm:$0x3]
          %v3994 = vld [vmem:[%s6] sm:$0x3]
          %v3995 = vadd.f32 %v3977, %v3979
          %v3996 = vadd.f32 %v3995, %v3981
          %v3997 = vadd.f32 %v3996, %v3983
          %v3998 = vadd.f32 %v3997, %v3985
          %v3999 = vadd.f32 %v3998, %v3987
          %v4000 = vadd.f32 %v3999, %v3989
          %v4001 = vadd.f32 %v4000, %v3991
          %v4002 = vrot.slane %v4001, 4
          %v4003 = vadd.f32 %v4001, %v4002
          %v4004 = vrot.slane %v4003, 2
          %v4005 = vadd.f32 %v4003, %v4004
          %v4006 = vrot.slane %v4005, 1
          %v4007 = vadd.f32 %v4005, %v4006
          %v4008 = vadd.f32 %v3978, %v3980
          %v4009 = vadd.f32 %v4008, %v3982
          %v4010 = vadd.f32 %v4009, %v3984
          %v4011 = vadd.f32 %v4010, %v3986
          %v4012 = vadd.f32 %v4011, %v3988
          %v4013 = vadd.f32 %v4012, %v3990
          %v4014 = vadd.f32 %v4013, %v3992
          %v4015 = vrot.slane %v4014, 4
          %v4016 = vadd.f32 %v4014, %v4015
          %v4017 = vrot.slane %v4016, 2
          %v4018 = vadd.f32 %v4016, %v4017
          %v4019 = vrot.slane %v4018, 1
          %v4020 = vadd.f32 %v4018, %v4019
          %v4021 = vmul.f32 %v4007, 0.015625
          %v4022 = vmul.f32 %v4020, 0.015625
          %v4023 = vsub.f32 %v3977, %v4021
          %v4024 = vsub.f32 %v3978, %v4022
          %v4025 = vsub.f32 %v3979, %v4021
          %v4026 = vsub.f32 %v3980, %v4022
          %v4027 = vsub.f32 %v3981, %v4021
          %v4028 = vsub.f32 %v3982, %v4022
          %v4029 = vsub.f32 %v3983, %v4021
          %v4030 = vsub.f32 %v3984, %v4022
          %v4031 = vsub.f32 %v3985, %v4021
          %v4032 = vsub.f32 %v3986, %v4022
          %v4033 = vsub.f32 %v3987, %v4021
          %v4034 = vsub.f32 %v3988, %v4022
          %v4035 = vsub.f32 %v3989, %v4021
          %v4036 = vsub.f32 %v3990, %v4022
          %v4037 = vsub.f32 %v3991, %v4021
          %v4038 = vsub.f32 %v3992, %v4022
          %v4039 = vmul.f32 %v4023, %v4023
          %v4040 = vmul.f32 %v4024, %v4024
          %v4041 = vmul.f32 %v4025, %v4025
          %v4042 = vmul.f32 %v4026, %v4026
          %v4043 = vmul.f32 %v4027, %v4027
          %v4044 = vmul.f32 %v4028, %v4028
          %v4045 = vmul.f32 %v4029, %v4029
          %v4046 = vmul.f32 %v4030, %v4030
          %v4047 = vmul.f32 %v4031, %v4031
          %v4048 = vmul.f32 %v4032, %v4032
          %v4049 = vmul.f32 %v4033, %v4033
          %v4050 = vmul.f32 %v4034, %v4034
          %v4051 = vmul.f32 %v4035, %v4035
          %v4052 = vmul.f32 %v4036, %v4036
          %v4053 = vmul.f32 %v4037, %v4037
          %v4054 = vmul.f32 %v4038, %v4038
          %v4055 = vadd.f32 %v4039, %v4041
          %v4056 = vadd.f32 %v4055, %v4043
          %v4057 = vadd.f32 %v4056, %v4045
          %v4058 = vadd.f32 %v4057, %v4047
          %v4059 = vadd.f32 %v4058, %v4049
          %v4060 = vadd.f32 %v4059, %v4051
          %v4061 = vadd.f32 %v4060, %v4053
          %v4062 = vrot.slane %v4061, 4
          %v4063 = vadd.f32 %v4061, %v4062
          %v4064 = vrot.slane %v4063, 2
          %v4065 = vadd.f32 %v4063, %v4064
          %v4066 = vrot.slane %v4065, 1
          %v4067 = vadd.f32 %v4065, %v4066
          %v4068 = vadd.f32 %v4040, %v4042
          %v4069 = vadd.f32 %v4068, %v4044
          %v4070 = vadd.f32 %v4069, %v4046
          %v4071 = vadd.f32 %v4070, %v4048
          %v4072 = vadd.f32 %v4071, %v4050
          %v4073 = vadd.f32 %v4072, %v4052
          %v4074 = vadd.f32 %v4073, %v4054
          %v4075 = vrot.slane %v4074, 4
          %v4076 = vadd.f32 %v4074, %v4075
          %v4077 = vrot.slane %v4076, 2
          %v4078 = vadd.f32 %v4076, %v4077
          %v4079 = vrot.slane %v4078, 1
          %v4080 = vadd.f32 %v4078, %v4079
          %v4081 = vmul.f32 %v4067, 0.015625
          %v4082 = vmul.f32 %v4080, 0.015625
          %v4083 = vadd.f32 %v4081, 1e-05
          %v4084 = vadd.f32 %v4082, 1e-05
          %v4085 = vrsqrt.pop %v4083
          %v4086 = vrsqrt.pop %v4084
          %v4088 = vlaneseq
          %v4089 = vshrl.u32 %v4088, 7
          %v4090 = vsub.s32 0, %v4089
          %v4091 = vrot.slane %v3993, %v4090
          %v4092 = vlaneseq
          %v4093 = vshrl.u32 %v4092, 7
          %v4094 = vsub.s32 1, %v4093
          %v4095 = vrot.slane %v3993, %v4094
          %v4098 = vmul.f32 %v4085, %v4091
          %v4099 = vmul.f32 %v4086, %v4095
          %v4100 = vlaneseq
          %v4101 = vshrl.u32 %v4100, 7
          %v4102 = vsub.s32 0, %v4101
          %v4103 = vrot.slane %v4098, %v4102
          %v4104 = vlaneseq
          %v4105 = vshrl.u32 %v4104, 7
          %v4106 = vsub.s32 0, %v4105
          %v4107 = vrot.slane %v4099, %v4106
          %v4108 = vmul.f32 %v4023, %v4103
          %v4109 = vmul.f32 %v4024, %v4107
          %v4110 = vmul.f32 %v4025, %v4103
          %v4111 = vmul.f32 %v4026, %v4107
          %v4112 = vmul.f32 %v4027, %v4103
          %v4113 = vmul.f32 %v4028, %v4107
          %v4114 = vmul.f32 %v4029, %v4103
          %v4115 = vmul.f32 %v4030, %v4107
          %v4116 = vmul.f32 %v4031, %v4103
          %v4117 = vmul.f32 %v4032, %v4107
          %v4118 = vmul.f32 %v4033, %v4103
          %v4119 = vmul.f32 %v4034, %v4107
          %v4120 = vmul.f32 %v4035, %v4103
          %v4121 = vmul.f32 %v4036, %v4107
          %v4122 = vmul.f32 %v4037, %v4103
          %v4123 = vmul.f32 %v4038, %v4107
          %v4125 = vlaneseq
          %v4126 = vshrl.u32 %v4125, 7
          %v4127 = vsub.s32 0, %v4126
          %v4128 = vrot.slane %v3994, %v4127
          %v4129 = vlaneseq
          %v4130 = vshrl.u32 %v4129, 7
          %v4131 = vsub.s32 1, %v4130
          %v4132 = vrot.slane %v3994, %v4131
          %v4135 = vadd.f32 %v4108, %v4128
          %v4136 = vadd.f32 %v4109, %v4132
          %v4137 = vadd.f32 %v4110, %v4128
          %v4138 = vadd.f32 %v4111, %v4132
          %v4139 = vadd.f32 %v4112, %v4128
          %v4140 = vadd.f32 %v4113, %v4132
          %v4141 = vadd.f32 %v4114, %v4128
          %v4142 = vadd.f32 %v4115, %v4132
          %v4143 = vadd.f32 %v4116, %v4128
          %v4144 = vadd.f32 %v4117, %v4132
          %v4145 = vadd.f32 %v4118, %v4128
          %v4146 = vadd.f32 %v4119, %v4132
          %v4147 = vadd.f32 %v4120, %v4128
          %v4148 = vadd.f32 %v4121, %v4132
          %v4149 = vadd.f32 %v4122, %v4128
          %v4150 = vadd.f32 %v4123, %v4132
          %4151 = vst [vmem:[#allocation3] sm:$0xff] %v4135
          %4152 = vst [vmem:[#allocation3 + $0x8] sm:$0xff] %v4136
          %4153 = vst [vmem:[#allocation3 + $0x10] sm:$0xff] %v4137
          %4154 = vst [vmem:[#allocation3 + $0x18] sm:$0xff] %v4138
          %4155 = vst [vmem:[#allocation3 + $0x20] sm:$0xff] %v4139
          %4156 = vst [vmem:[#allocation3 + $0x28] sm:$0xff] %v4140
          %4157 = vst [vmem:[#allocation3 + $0x30] sm:$0xff] %v4141
          %4158 = vst [vmem:[#allocation3 + $0x38] sm:$0xff] %v4142
          %4159 = vst [vmem:[#allocation3 + $0x40] sm:$0xff] %v4143
          %4160 = vst [vmem:[#allocation3 + $0x48] sm:$0xff] %v4144
          %4161 = vst [vmem:[#allocation3 + $0x50] sm:$0xff] %v4145
          %4162 = vst [vmem:[#allocation3 + $0x58] sm:$0xff] %v4146
          %4163 = vst [vmem:[#allocation3 + $0x60] sm:$0xff] %v4147
          %4164 = vst [vmem:[#allocation3 + $0x68] sm:$0xff] %v4148
          %4165 = vst [vmem:[#allocation3 + $0x70] sm:$0xff] %v4149
          %4166 = vst [vmem:[#allocation3 + $0x78] sm:$0xff] %v4150
        $region98: #{forward.1} parent=85 // pred_fallthru
          _
        // Predicated region
        $region99: #{forward.1} parent=85 // pred_check
          %p4167 = pneg %p211
        $region100: #{forward.1} parent=85 // pred_check_branch
          %4169 = sbr.rel (%p4167) target = $region102
        $region101: #{forward.1} parent=85 // pred_region
          %s4171 = ssub.s32 2048, 2048
          %4172 = vsyncadd [#allocation4], %s4171
          %s4173 = sshll.u32 [#allocation3], 4
          %s4174 = int_to_ptr.vmem [resolvable:$true] %s4173
          %4179 = dma.vmem_to_hbm [thread:$0]  %s4174, 2048, %s8, [#allocation4], 256, 256, 16
        $region102: #{forward.1} parent=85 // pred_fallthru
          _
        // Predicated region
        $region103: #{forward.1} parent=85 // pred_check
          %p4180 = pneg %p211
        $region104: #{forward.1} parent=85 // pred_check_branch
          %4182 = sbr.rel (%p4180) target = $region106
        $region105: #{forward.1} parent=85 // pred_region
          %4183 = dma.done [#allocation4], 2048
        $region106: #{forward.1} parent=85 // pred_fallthru
          _
      $region86: #{forward.1} parent=5 // pred_fallthru
        _
      %p4184 = scmp.le.s32.totalorder 2, %s15
      // Predicated region
      $region107: #{forward.1} parent=5 // pred_check
        %p4185 = pneg %p4184
      $region108: #{forward.1} parent=5 // pred_check_branch
        %4187 = sbr.rel (%p4185) target = $region110
      $region109: #{forward.1} parent=5 // pred_region
        %s4188 = ssub.s32 %s15, 2
      $region110: #{forward.1} parent=5 // pred_fallthru
        _
    $region6: #{forward.1} parent=1 // loop_footer
      %s19 = sadd.s32 1, %s15
    $region7: #{forward.1} parent=1 // loop_footer_branch
      %14 = sbr.rel target = $region3
    $region8: #{forward.1} parent=1 // loop_exit
      _
    %4189 = vsyncpa [#allocation4], 1
    %s4190 = scalar_lea.sflag [#allocation4], 1
    %4191 = vsyncpa %s4190, 1

</llo_original>
